<compile_context>
chip_gen: v7x
topology: tpu7x:2x2x1
jax: 0.10.0
libtpu: 0.0.40
codegen_flags: <defaults>
</compile_context>

<pallas_src>
import functools

import jax
import jax.numpy as jnp
from jax.experimental import pallas as pl
from jax.experimental.pallas import tpu as pltpu


def _round_up(value, multiple):
    return ((value + multiple - 1) // multiple) * multiple


# ----------------------------------------------------------------------------
# Shared in-kernel compute: a chain of (Linear->ReLU)*...->Linear [->LayerNorm] stacks.
# First stack supports split inputs (replaces jnp.concatenate + single big matmul).
# Weights arrive pre-cast to bf16; accumulation is f32 (preferred_element_type).
# Elementwise work (ReLU, LayerNorm, residual) stays f32 (no bf16 VPU on v5e).
# ----------------------------------------------------------------------------
def _mlp_chain_compute(inputs, params, chain):
    it = iter(params)
    h_parts = list(inputs)
    for (num_inputs, num_linear, use_ln) in chain:
        # First Linear: one matmul per split input (x_a @ Wa + x_b @ Wb + ... + bias).
        acc = None
        for p in range(num_inputs):
            w = next(it)                                        # (width_p, H) bf16
            part = jnp.dot(h_parts[p].astype(jnp.bfloat16), w,
                           preferred_element_type=jnp.float32)
            acc = part if acc is None else acc + part
        h = acc + next(it)                                      # bias (1, H) f32
        # Remaining Linears with ReLU between them; identity after the last one.
        for _ in range(1, num_linear):
            h = jnp.maximum(h, 0.0)
            w = next(it)
            b = next(it)
            h = jnp.dot(h.astype(jnp.bfloat16), w,
                        preferred_element_type=jnp.float32) + b
        if use_ln:
            gamma = next(it)
            beta = next(it)
            mean = jnp.mean(h, axis=-1, keepdims=True)
            var = jnp.mean(jnp.square(h - mean), axis=-1, keepdims=True)
            h = (h - mean) * jax.lax.rsqrt(var + 1e-5) * gamma + beta
        h_parts = [h]
    return h_parts[0]


# ----------------------------------------------------------------------------
# Kernel 1: row-tiled fused MLP chain (+ optional fused residual add).
# ----------------------------------------------------------------------------
def _mlp_chain_kernel(*refs, chain, num_inputs, num_params, use_residual):
    o_ref = refs[-1]
    pos = 0
    inputs = [refs[pos + p][...] for p in range(num_inputs)]
    pos += num_inputs
    res_ref = None
    if use_residual:
        res_ref = refs[pos]
        pos += 1
    params = [refs[pos + i][...] for i in range(num_params)]
    h = _mlp_chain_compute(inputs, params, chain)
    if use_residual:
        h = h + res_ref[...]
    o_ref[...] = h.astype(o_ref.dtype)


# ----------------------------------------------------------------------------
# Kernel 2: fused endpoint-gather + edge-message MLP + scatter-add aggregation.
# grid = (node_tiles, edge_blocks): node axis "parallel", edge axis "arbitrary" (last).
#   - x (bf16) is resident (constant index_map); x_i/x_j come from one-hot MXU matmuls.
#   - messages never leave VMEM; the (tn, Fe) f32 output accumulates across edge blocks.
# ----------------------------------------------------------------------------
def _message_agg_kernel(*refs, chain, num_params):
    tgt_row_ref, tgt_col_ref, src_col_ref, x_ref, e_ref = refs[:5]
    params = [refs[5 + i][...] for i in range(num_params)]
    o_ref = refs[5 + num_params]

    n_pad = x_ref.shape[0]
    te = e_ref.shape[0]
    tn = o_ref.shape[0]

    # --- fused endpoint gather: x_i = onehot(tgt) @ x, x_j = onehot(src) @ x ---
    x_bf = x_ref[...]                                                # bf16 (n_pad, Fn)
    cols = jax.lax.broadcasted_iota(jnp.int32, (te, n_pad), 1)
    gat_i = (tgt_col_ref[...] == cols).astype(jnp.bfloat16)          # exact 0/1
    gat_j = (src_col_ref[...] == cols).astype(jnp.bfloat16)
    x_i = jnp.dot(gat_i, x_bf, preferred_element_type=jnp.float32)   # (te, Fn)
    x_j = jnp.dot(gat_j, x_bf, preferred_element_type=jnp.float32)

    # --- edge message MLP (concat removed via split first-layer weights) ---
    msg = _mlp_chain_compute([x_i, x_j, e_ref[...]], params, chain)  # (te, Fe_out) f32

    # --- scatter-add into this node tile (one-hot matmul, f32 accumulation) ---
    node_rows = (jax.lax.broadcasted_iota(jnp.int32, (tn, te), 0)
                 + pl.program_id(0) * tn)
    scat = (node_rows == tgt_row_ref[...]).astype(jnp.bfloat16)      # (tn, te)
    contrib = jnp.dot(scat, msg.astype(jnp.bfloat16),
                      preferred_element_type=jnp.float32)            # (tn, Fe_out)

    @pl.when(pl.program_id(1) == 0)
    def _():
        o_ref[...] = jnp.zeros_like(o_ref)

    # Output block is resident across the (inner) edge axis -> written back once per
    # node tile; no scratch accumulator needed.
    o_ref[...] += contrib


# ----------------------------------------------------------------------------
# Parameter flattening: split first-layer weight row-wise per input (concat removal),
# cast matmul weights to bf16; biases / LayerNorm params stay f32.
# ----------------------------------------------------------------------------
def _flatten_stack_params(stack, input_widths):
    flat = []
    w0, b0 = stack["layers"][0]
    assert w0.shape[0] == sum(input_widths)
    off = 0
    for width in input_widths:
        flat.append(w0[off:off + width].astype(jnp.bfloat16))
        off += width
    flat.append(b0)
    for w, b in stack["layers"][1:]:
        flat.append(w.astype(jnp.bfloat16))
        flat.append(b)
    if stack["ln"] is not None:
        flat.append(stack["ln"][0])
        flat.append(stack["ln"][1])
    return flat


# ----------------------------------------------------------------------------
# Wrappers
# ----------------------------------------------------------------------------
def mlp_chain_apply(inputs, stacks, residual=None, row_tile=512):
    """Apply a chain of MLP stacks (each optionally ending in LayerNorm) to the
    row-wise split `inputs`, with an optional fused residual add. One pallas_call."""
    rows = inputs[0].shape[0]
    chain = []
    flat_params = []
    in_widths = [a.shape[1] for a in inputs]
    for stack in stacks:
        chain.append((len(in_widths), len(stack["layers"]), stack["ln"] is not None))
        flat_params += _flatten_stack_params(stack, in_widths)
        in_widths = [stack["layers"][-1][0].shape[1]]
    out_dim = in_widths[0]

    tr = min(row_tile, _round_up(rows, 8))
    rows_pad = _round_up(rows, tr)

    def pad_rows(a):
        return a if a.shape[0] == rows_pad else jnp.pad(a, ((0, rows_pad - a.shape[0]), (0, 0)))

    args = [pad_rows(a) for a in inputs]
    in_specs = [pl.BlockSpec((tr, a.shape[1]), lambda i: (i, 0)) for a in inputs]
    if residual is not None:
        args.append(pad_rows(residual))
        in_specs.append(pl.BlockSpec((tr, out_dim), lambda i: (i, 0)))
    args += flat_params
    # Weights / biases / LN params: constant index_map -> resident across grid steps.
    in_specs += [pl.BlockSpec(p.shape, lambda i: (0, 0)) for p in flat_params]

    # Advisory cost estimate for XLA scheduling.
    mlp_flops = 0
    param_bytes = 0
    num_ln = 0
    for stack in stacks:
        for w, b in stack["layers"]:
            mlp_flops += 2 * rows_pad * w.shape[0] * w.shape[1]
            param_bytes += int(w.size) * 2 + int(b.size) * 4
        if stack["ln"] is not None:
            num_ln += 1
            param_bytes += int(stack["ln"][0].size + stack["ln"][1].size) * 4
    bytes_accessed = (sum(int(a.size) * 4 for a in inputs) + param_bytes
                      + rows_pad * out_dim * 4
                      + (int(residual.size) * 4 if residual is not None else 0))
    cost = pl.CostEstimate(flops=int(mlp_flops), transcendentals=int(rows_pad * num_ln),
                           bytes_accessed=int(bytes_accessed))

    kernel = functools.partial(_mlp_chain_kernel, chain=tuple(chain),
                               num_inputs=len(inputs), num_params=len(flat_params),
                               use_residual=residual is not None)
    out = pl.pallas_call(
        kernel,
        out_shape=jax.ShapeDtypeStruct((rows_pad, out_dim), jnp.float32),
        grid=(rows_pad // tr,),
        in_specs=in_specs,
        out_specs=pl.BlockSpec((tr, out_dim), lambda i: (i, 0)),
        compiler_params=pltpu.CompilerParams(
            dimension_semantics=("parallel",),
            vmem_limit_bytes=64 * 1024 * 1024),
        cost_estimate=cost,
    )(*args)
    return out if rows_pad == rows else out[:rows]


def message_aggregate(x, e, tgt, src, n_nodes, edge_stack, *,
                      node_tile=1024, edge_tile=512):
    """Fused: x_i/x_j gather + msg = edge_mlp([x_i, x_j, e]) + agg[n] = sum_{tgt==n} msg."""
    num_edges, fe_in = e.shape
    fn = x.shape[1]
    out_dim = edge_stack["layers"][-1][0].shape[1]
    flat_params = _flatten_stack_params(edge_stack, [fn, fn, fe_in])
    chain = ((3, len(edge_stack["layers"]), edge_stack["ln"] is not None),)

    te = min(edge_tile, _round_up(num_edges, 8))
    e_pad = _round_up(num_edges, te)
    tn = min(node_tile, _round_up(n_nodes, 8))
    n_pad = _round_up(n_nodes, tn)

    x_pad = x if x.shape[0] == n_pad else jnp.pad(x, ((0, n_pad - x.shape[0]), (0, 0)))
    x_bf = x_pad.astype(jnp.bfloat16)          # only feeds bf16 MXU matmuls in-kernel
    e_arr = e if e.shape[0] == e_pad else jnp.pad(e, ((0, e_pad - e.shape[0]), (0, 0)))

    tgt32 = tgt.astype(jnp.int32)
    src32 = src.astype(jnp.int32)
    # Padded (fake) edges point at row n_pad: matches no x column and no node row ->
    # zero gathered features, zero scatter contribution.  Keep this invariant.
    tgt_row = jnp.full((1, e_pad), n_pad, jnp.int32).at[0, :num_edges].set(tgt32)
    tgt_col = jnp.full((e_pad, 1), n_pad, jnp.int32).at[:num_edges, 0].set(tgt32)
    src_col = jnp.full((e_pad, 1), n_pad, jnp.int32).at[:num_edges, 0].set(src32)

    args = [tgt_row, tgt_col, src_col, x_bf, e_arr] + flat_params
    in_specs = [
        pl.BlockSpec((1, te), lambda nt, eb: (0, eb)),       # targets (row layout)
        pl.BlockSpec((te, 1), lambda nt, eb: (eb, 0)),       # targets (column layout)
        pl.BlockSpec((te, 1), lambda nt, eb: (eb, 0)),       # sources (column layout)
        pl.BlockSpec((n_pad, fn), lambda nt, eb: (0, 0)),    # resident bf16 node feats
        pl.BlockSpec((te, fe_in), lambda nt, eb: (eb, 0)),   # edge features block
    ] + [pl.BlockSpec(p.shape, lambda nt, eb: (0, 0)) for p in flat_params]

    # Advisory cost estimate (whole call).
    n_tiles = n_pad // tn
    mlp_flops = sum(2 * e_pad * w.shape[0] * w.shape[1] for w, _ in edge_stack["layers"])
    gather_flops = 2 * 2 * e_pad * n_pad * fn
    scatter_flops = 2 * n_pad * e_pad * out_dim
    param_bytes = sum(int(p.size) * p.dtype.itemsize for p in flat_params)
    bytes_accessed = (int(x_bf.size) * 2 + int(e_arr.size) * 4 + 3 * e_pad * 4
                      + param_bytes + n_pad * out_dim * 4)
    cost = pl.CostEstimate(
        flops=int(n_tiles * (mlp_flops + gather_flops) + scatter_flops),
        transcendentals=int(n_tiles * e_pad if edge_stack["ln"] is not None else 0),
        bytes_accessed=int(bytes_accessed))

    kernel = functools.partial(_message_agg_kernel, chain=chain,
                               num_params=len(flat_params))
    out = pl.pallas_call(
        kernel,
        out_shape=jax.ShapeDtypeStruct((n_pad, out_dim), jnp.float32),
        grid=(n_pad // tn, e_pad // te),
        in_specs=in_specs,
        out_specs=pl.BlockSpec((tn, out_dim), lambda nt, eb: (nt, 0)),
        compiler_params=pltpu.CompilerParams(
            dimension_semantics=("parallel", "arbitrary"),  # edge (reduction) axis last
            vmem_limit_bytes=64 * 1024 * 1024),
        cost_estimate=cost,
    )(*args)
    return out if n_pad == n_nodes else out[:n_nodes]


# ----------------------------------------------------------------------------
# Parameter construction (deterministic, PyTorch-like Linear init ranges)
# ----------------------------------------------------------------------------
def _init_linear_stack(key, sizes):
    layers = []
    for i in range(len(sizes) - 1):
        key, kw, kb = jax.random.split(key, 3)
        bound = 1.0 / (sizes[i] ** 0.5)
        w = jax.random.uniform(kw, (sizes[i], sizes[i + 1]), jnp.float32, -bound, bound)
        b = jax.random.uniform(kb, (1, sizes[i + 1]), jnp.float32, -bound, bound)
        layers.append((w, b))
    return layers


def _init_mlp_stack(key, sizes, layernorm):
    stack = {"layers": _init_linear_stack(key, sizes)}
    stack["ln"] = ((jnp.ones((1, sizes[-1]), jnp.float32),
                    jnp.zeros((1, sizes[-1]), jnp.float32)) if layernorm else None)
    return stack


def init_params(key, num_node_features, num_encoded_node_features,
                num_edge_features, num_encoded_edge_features,
                num_mlp_layers, mlp_layer_size,
                num_message_passing_steps, output_node_size):
    hid = [mlp_layer_size] * num_mlp_layers
    keys = jax.random.split(key, 3 + num_message_passing_steps)
    params = {
        "enc_node": _init_mlp_stack(
            keys[0], [num_node_features, *hid, num_encoded_node_features], True),
        "enc_edge": _init_mlp_stack(
            keys[1], [num_edge_features, *hid, num_encoded_edge_features], True),
        "decoder": _init_mlp_stack(
            keys[2], [num_encoded_node_features, *hid, output_node_size], False),
        "processor": [],
    }
    for s in range(num_message_passing_steps):
        sk = jax.random.split(keys[3 + s], 4)
        params["processor"].append({
            "node_mlp": _init_mlp_stack(
                sk[0], [num_encoded_node_features + num_encoded_edge_features,
                        *hid, num_encoded_node_features], True),
            "edge_mlp": _init_mlp_stack(
                sk[1], [num_encoded_edge_features + 2 * num_encoded_node_features,
                        *hid, num_encoded_edge_features], True),
            "edge_update_mlp": _init_mlp_stack(
                sk[2], [num_encoded_edge_features, *hid, num_encoded_edge_features], True),
            "node_update_mlp": _init_mlp_stack(
                sk[3], [num_encoded_node_features, *hid, num_encoded_node_features], True),
        })
    return params


# ----------------------------------------------------------------------------
# Forward pass (mirrors EncoderProcessorDecoder.forward)
# ----------------------------------------------------------------------------
def encoder_processor_decoder(params, x, e, edge_index):
    src = edge_index[0].astype(jnp.int32)   # j (source)
    tgt = edge_index[1].astype(jnp.int32)   # i (target / aggregation index)
    n_nodes = x.shape[0]

    # Encoder
    x = mlp_chain_apply([x], [params["enc_node"]])
    e = mlp_chain_apply([e], [params["enc_edge"]])

    # Processor: stacked InteractionNetworks
    for step in params["processor"]:
        x_res, e_res = x, e
        # gather(x_i, x_j) + message() + aggregate('add') fused; messages stay in VMEM
        agg = message_aggregate(x, e, tgt, src, n_nodes, step["edge_mlp"])
        # update(): node_mlp(cat[agg, x]) -> node_update_mlp -> + residual (one call)
        x = mlp_chain_apply([agg, x], [step["node_mlp"], step["node_update_mlp"]],
                            residual=x_res)
        # edge path: edge_update_mlp(e) + residual (one call)
        e = mlp_chain_apply([e], [step["edge_update_mlp"]], residual=e_res)

    # Decoder (no LayerNorm, identity output activation)
    return mlp_chain_apply([x], [params["decoder"]])


# ----------------------------------------------------------------------------
# Demo
# ----------------------------------------------------------------------------
if __name__ == "__main__":
    num_particles = 16
    num_edges = 32
    num_node_features = 8
    num_edge_features = 4
    num_encoded_node_features = 128    # lane-dense encoded widths (multiple of 128)
    num_encoded_edge_features = 128
    num_mlp_layers = 2
    mlp_layer_size = 128
    num_message_passing_steps = 2
    output_node_size = 3

    root = jax.random.PRNGKey(0)
    k_param, k_x, k_e, k_idx = jax.random.split(root, 4)

    params = init_params(k_param, num_node_features, num_encoded_node_features,
                         num_edge_features, num_encoded_edge_features,
                         num_mlp_layers, mlp_layer_size,
                         num_message_passing_steps, output_node_size)

    x = jax.random.normal(k_x, (num_particles, num_node_features), jnp.float32)
    e = jax.random.normal(k_e, (num_edges, num_edge_features), jnp.float32)
    edge_index = jax.random.randint(k_idx, (2, num_edges), 0, num_particles, jnp.int32)

    out = jax.jit(encoder_processor_decoder)(params, x, e, edge_index)
    out = jax.block_until_ready(out)

    assert out.shape == (num_particles, output_node_size)
    assert out.dtype == jnp.float32
    print("KERNEL_OK")
</pallas_src>

<mosaic_0001>
module attributes {stable_mosaic.version = 11 : i64} {
  func.func @_mlp_chain_kernel(%arg0: i32, %arg1: memref<32x4xf32, #tpu.memory_space<vmem>>, %arg2: memref<4x128xbf16, #tpu.memory_space<vmem>>, %arg3: memref<1x128xf32, #tpu.memory_space<vmem>>, %arg4: memref<128x128xbf16, #tpu.memory_space<vmem>>, %arg5: memref<1x128xf32, #tpu.memory_space<vmem>>, %arg6: memref<128x128xbf16, #tpu.memory_space<vmem>>, %arg7: memref<1x128xf32, #tpu.memory_space<vmem>>, %arg8: memref<1x128xf32, #tpu.memory_space<vmem>>, %arg9: memref<1x128xf32, #tpu.memory_space<vmem>>, %arg10: memref<32x128xf32, #tpu.memory_space<vmem>>) attributes {dimension_semantics = [#tpu.dimension_semantics<parallel>], iteration_bounds = array<i64: 1>, scalar_prefetch = 0 : i64, scratch_operands = 0 : i64, tpu.core_type = #tpu.core_type<tc>, window_params = [{transform_indices = @transform_0, window_bounds = array<i64: 32, 4>}, {pipeline_mode = #tpu.pipeline_mode<synchronous>, transform_indices = @transform_1, window_bounds = array<i64: 4, 128>}, {pipeline_mode = #tpu.pipeline_mode<synchronous>, transform_indices = @transform_2, window_bounds = array<i64: 1, 128>}, {pipeline_mode = #tpu.pipeline_mode<synchronous>, transform_indices = @transform_3, window_bounds = array<i64: 128, 128>}, {pipeline_mode = #tpu.pipeline_mode<synchronous>, transform_indices = @transform_4, window_bounds = array<i64: 1, 128>}, {pipeline_mode = #tpu.pipeline_mode<synchronous>, transform_indices = @transform_5, window_bounds = array<i64: 128, 128>}, {pipeline_mode = #tpu.pipeline_mode<synchronous>, transform_indices = @transform_6, window_bounds = array<i64: 1, 128>}, {pipeline_mode = #tpu.pipeline_mode<synchronous>, transform_indices = @transform_7, window_bounds = array<i64: 1, 128>}, {pipeline_mode = #tpu.pipeline_mode<synchronous>, transform_indices = @transform_8, window_bounds = array<i64: 1, 128>}, {transform_indices = @transform_9, window_bounds = array<i64: 32, 128>}]} {
    %c0 = arith.constant 0 : index
    %c0_0 = arith.constant 0 : index
    %0 = vector.load %arg1[%c0, %c0_0] : memref<32x4xf32, #tpu.memory_space<vmem>>, vector<32x4xf32>
    %c0_1 = arith.constant 0 : index
    %c0_2 = arith.constant 0 : index
    %1 = vector.load %arg2[%c0_1, %c0_2] : memref<4x128xbf16, #tpu.memory_space<vmem>>, vector<4x128xbf16>
    %c0_3 = arith.constant 0 : index
    %c0_4 = arith.constant 0 : index
    %2 = vector.load %arg3[%c0_3, %c0_4] : memref<1x128xf32, #tpu.memory_space<vmem>>, vector<1x128xf32>
    %c0_5 = arith.constant 0 : index
    %c0_6 = arith.constant 0 : index
    %3 = vector.load %arg4[%c0_5, %c0_6] : memref<128x128xbf16, #tpu.memory_space<vmem>>, vector<128x128xbf16>
    %c0_7 = arith.constant 0 : index
    %c0_8 = arith.constant 0 : index
    %4 = vector.load %arg5[%c0_7, %c0_8] : memref<1x128xf32, #tpu.memory_space<vmem>>, vector<1x128xf32>
    %c0_9 = arith.constant 0 : index
    %c0_10 = arith.constant 0 : index
    %5 = vector.load %arg6[%c0_9, %c0_10] : memref<128x128xbf16, #tpu.memory_space<vmem>>, vector<128x128xbf16>
    %c0_11 = arith.constant 0 : index
    %c0_12 = arith.constant 0 : index
    %6 = vector.load %arg7[%c0_11, %c0_12] : memref<1x128xf32, #tpu.memory_space<vmem>>, vector<1x128xf32>
    %c0_13 = arith.constant 0 : index
    %c0_14 = arith.constant 0 : index
    %7 = vector.load %arg8[%c0_13, %c0_14] : memref<1x128xf32, #tpu.memory_space<vmem>>, vector<1x128xf32>
    %c0_15 = arith.constant 0 : index
    %c0_16 = arith.constant 0 : index
    %8 = vector.load %arg9[%c0_15, %c0_16] : memref<1x128xf32, #tpu.memory_space<vmem>>, vector<1x128xf32>
    %9 = arith.truncf %0 : vector<32x4xf32> to vector<32x4xbf16>
    %cst = arith.constant dense<0.000000e+00> : vector<32x128xf32>
    %10 = tpu.matmul %9, %1, %cst {dimension_numbers = #tpu.dot_dimension_numbers<[1], [0], [0], [1], [0, 0, 1, 1], [], []>} : vector<32x4xbf16>, vector<4x128xbf16>, vector<32x128xf32> -> vector<32x128xf32>
    %11 = vector.broadcast %2 : vector<1x128xf32> to vector<32x128xf32>
    %12 = arith.addf %10, %11 : vector<32x128xf32>
    %cst_17 = arith.constant 0.000000e+00 : f32
    %13 = vector.broadcast %cst_17 : f32 to vector<32x128xf32>
    %14 = arith.maximumf %12, %13 : vector<32x128xf32>
    %15 = arith.truncf %14 : vector<32x128xf32> to vector<32x128xbf16>
    %cst_18 = arith.constant dense<0.000000e+00> : vector<32x128xf32>
    %16 = tpu.matmul %15, %3, %cst_18 {dimension_numbers = #tpu.dot_dimension_numbers<[1], [0], [0], [1], [0, 0, 1, 1], [], []>} : vector<32x128xbf16>, vector<128x128xbf16>, vector<32x128xf32> -> vector<32x128xf32>
    %17 = vector.broadcast %4 : vector<1x128xf32> to vector<32x128xf32>
    %18 = arith.addf %16, %17 : vector<32x128xf32>
    %cst_19 = arith.constant 0.000000e+00 : f32
    %19 = vector.broadcast %cst_19 : f32 to vector<32x128xf32>
    %20 = arith.maximumf %18, %19 : vector<32x128xf32>
    %21 = arith.truncf %20 : vector<32x128xf32> to vector<32x128xbf16>
    %cst_20 = arith.constant dense<0.000000e+00> : vector<32x128xf32>
    %22 = tpu.matmul %21, %5, %cst_20 {dimension_numbers = #tpu.dot_dimension_numbers<[1], [0], [0], [1], [0, 0, 1, 1], [], []>} : vector<32x128xbf16>, vector<128x128xbf16>, vector<32x128xf32> -> vector<32x128xf32>
    %23 = vector.broadcast %6 : vector<1x128xf32> to vector<32x128xf32>
    %24 = arith.addf %22, %23 : vector<32x128xf32>
    %cst_21 = arith.constant dense<0.000000e+00> : vector<32xf32>
    %25 = vector.multi_reduction <add>, %24, %cst_21 [1] : vector<32x128xf32> to vector<32xf32>
    %26 = vector.shape_cast %25 : vector<32xf32> to vector<32x1xf32>
    %cst_22 = arith.constant 1.280000e+02 : f32
    %27 = vector.broadcast %cst_22 : f32 to vector<32x1xf32>
    %28 = arith.divf %26, %27 : vector<32x1xf32>
    %29 = vector.broadcast %28 : vector<32x1xf32> to vector<32x128xf32>
    %30 = arith.subf %24, %29 : vector<32x128xf32>
    %31 = arith.mulf %30, %30 : vector<32x128xf32>
    %cst_23 = arith.constant dense<0.000000e+00> : vector<32xf32>
    %32 = vector.multi_reduction <add>, %31, %cst_23 [1] : vector<32x128xf32> to vector<32xf32>
    %33 = vector.shape_cast %32 : vector<32xf32> to vector<32x1xf32>
    %cst_24 = arith.constant 1.280000e+02 : f32
    %34 = vector.broadcast %cst_24 : f32 to vector<32x1xf32>
    %35 = arith.divf %33, %34 : vector<32x1xf32>
    %36 = vector.broadcast %28 : vector<32x1xf32> to vector<32x128xf32>
    %37 = arith.subf %24, %36 : vector<32x128xf32>
    %cst_25 = arith.constant 9.99999974E-6 : f32
    %38 = vector.broadcast %cst_25 : f32 to vector<32x1xf32>
    %39 = arith.addf %35, %38 : vector<32x1xf32>
    %40 = math.rsqrt %39 : vector<32x1xf32>
    %41 = vector.broadcast %40 : vector<32x1xf32> to vector<32x128xf32>
    %42 = arith.mulf %37, %41 : vector<32x128xf32>
    %43 = vector.broadcast %7 : vector<1x128xf32> to vector<32x128xf32>
    %44 = arith.mulf %42, %43 : vector<32x128xf32>
    %45 = vector.broadcast %8 : vector<1x128xf32> to vector<32x128xf32>
    %46 = arith.addf %44, %45 : vector<32x128xf32>
    %c0_26 = arith.constant 0 : index
    %c0_27 = arith.constant 0 : index
    %47 = vector.load %arg10[%c0_26, %c0_27] : memref<32x128xf32, #tpu.memory_space<vmem>>, vector<32x128xf32>
    tpu.vector_store %arg10[%c0_26, %c0_27], %46 {strides = array<i32>} : memref<32x128xf32, #tpu.memory_space<vmem>>, vector<32x128xf32>,
    return
  }
  func.func @transform_0(%arg0: i32) -> (i32, i32) {
    %c0_i32 = arith.constant 0 : i32
    %c0_i32_0 = arith.constant 0 : i32
    return %arg0, %c0_i32 : i32, i32
  }
  func.func @transform_1(%arg0: i32) -> (i32, i32) {
    %c0_i32 = arith.constant 0 : i32
    %c0_i32_0 = arith.constant 0 : i32
    %c0_i32_1 = arith.constant 0 : i32
    return %c0_i32, %c0_i32_0 : i32, i32
  }
  func.func @transform_2(%arg0: i32) -> (i32, i32) {
    %c0_i32 = arith.constant 0 : i32
    %c0_i32_0 = arith.constant 0 : i32
    %c0_i32_1 = arith.constant 0 : i32
    return %c0_i32, %c0_i32_0 : i32, i32
  }
  func.func @transform_3(%arg0: i32) -> (i32, i32) {
    %c0_i32 = arith.constant 0 : i32
    %c0_i32_0 = arith.constant 0 : i32
    %c0_i32_1 = arith.constant 0 : i32
    return %c0_i32, %c0_i32_0 : i32, i32
  }
  func.func @transform_4(%arg0: i32) -> (i32, i32) {
    %c0_i32 = arith.constant 0 : i32
    %c0_i32_0 = arith.constant 0 : i32
    %c0_i32_1 = arith.constant 0 : i32
    return %c0_i32, %c0_i32_0 : i32, i32
  }
  func.func @transform_5(%arg0: i32) -> (i32, i32) {
    %c0_i32 = arith.constant 0 : i32
    %c0_i32_0 = arith.constant 0 : i32
    %c0_i32_1 = arith.constant 0 : i32
    return %c0_i32, %c0_i32_0 : i32, i32
  }
  func.func @transform_6(%arg0: i32) -> (i32, i32) {
    %c0_i32 = arith.constant 0 : i32
    %c0_i32_0 = arith.constant 0 : i32
    %c0_i32_1 = arith.constant 0 : i32
    return %c0_i32, %c0_i32_0 : i32, i32
  }
  func.func @transform_7(%arg0: i32) -> (i32, i32) {
    %c0_i32 = arith.constant 0 : i32
    %c0_i32_0 = arith.constant 0 : i32
    %c0_i32_1 = arith.constant 0 : i32
    return %c0_i32, %c0_i32_0 : i32, i32
  }
  func.func @transform_8(%arg0: i32) -> (i32, i32) {
    %c0_i32 = arith.constant 0 : i32
    %c0_i32_0 = arith.constant 0 : i32
    %c0_i32_1 = arith.constant 0 : i32
    return %c0_i32, %c0_i32_0 : i32, i32
  }
  func.func @transform_9(%arg0: i32) -> (i32, i32) {
    %c0_i32 = arith.constant 0 : i32
    %c0_i32_0 = arith.constant 0 : i32
    return %arg0, %c0_i32 : i32, i32
  }
}

module attributes {stable_mosaic.version = 11 : i64} {
  func.func @_mlp_chain_kernel(%arg0: i32, %arg1: memref<16x8xf32, #tpu.memory_space<vmem>>, %arg2: memref<8x128xbf16, #tpu.memory_space<vmem>>, %arg3: memref<1x128xf32, #tpu.memory_space<vmem>>, %arg4: memref<128x128xbf16, #tpu.memory_space<vmem>>, %arg5: memref<1x128xf32, #tpu.memory_space<vmem>>, %arg6: memref<128x128xbf16, #tpu.memory_space<vmem>>, %arg7: memref<1x128xf32, #tpu.memory_space<vmem>>, %arg8: memref<1x128xf32, #tpu.memory_space<vmem>>, %arg9: memref<1x128xf32, #tpu.memory_space<vmem>>, %arg10: memref<16x128xf32, #tpu.memory_space<vmem>>) attributes {dimension_semantics = [#tpu.dimension_semantics<parallel>], iteration_bounds = array<i64: 1>, scalar_prefetch = 0 : i64, scratch_operands = 0 : i64, tpu.core_type = #tpu.core_type<tc>, window_params = [{transform_indices = @transform_0, window_bounds = array<i64: 16, 8>}, {pipeline_mode = #tpu.pipeline_mode<synchronous>, transform_indices = @transform_1, window_bounds = array<i64: 8, 128>}, {pipeline_mode = #tpu.pipeline_mode<synchronous>, transform_indices = @transform_2, window_bounds = array<i64: 1, 128>}, {pipeline_mode = #tpu.pipeline_mode<synchronous>, transform_indices = @transform_3, window_bounds = array<i64: 128, 128>}, {pipeline_mode = #tpu.pipeline_mode<synchronous>, transform_indices = @transform_4, window_bounds = array<i64: 1, 128>}, {pipeline_mode = #tpu.pipeline_mode<synchronous>, transform_indices = @transform_5, window_bounds = array<i64: 128, 128>}, {pipeline_mode = #tpu.pipeline_mode<synchronous>, transform_indices = @transform_6, window_bounds = array<i64: 1, 128>}, {pipeline_mode = #tpu.pipeline_mode<synchronous>, transform_indices = @transform_7, window_bounds = array<i64: 1, 128>}, {pipeline_mode = #tpu.pipeline_mode<synchronous>, transform_indices = @transform_8, window_bounds = array<i64: 1, 128>}, {transform_indices = @transform_9, window_bounds = array<i64: 16, 128>}]} {
    %c0 = arith.constant 0 : index
    %c0_0 = arith.constant 0 : index
    %0 = vector.load %arg1[%c0, %c0_0] : memref<16x8xf32, #tpu.memory_space<vmem>>, vector<16x8xf32>
    %c0_1 = arith.constant 0 : index
    %c0_2 = arith.constant 0 : index
    %1 = vector.load %arg2[%c0_1, %c0_2] : memref<8x128xbf16, #tpu.memory_space<vmem>>, vector<8x128xbf16>
    %c0_3 = arith.constant 0 : index
    %c0_4 = arith.constant 0 : index
    %2 = vector.load %arg3[%c0_3, %c0_4] : memref<1x128xf32, #tpu.memory_space<vmem>>, vector<1x128xf32>
    %c0_5 = arith.constant 0 : index
    %c0_6 = arith.constant 0 : index
    %3 = vector.load %arg4[%c0_5, %c0_6] : memref<128x128xbf16, #tpu.memory_space<vmem>>, vector<128x128xbf16>
    %c0_7 = arith.constant 0 : index
    %c0_8 = arith.constant 0 : index
    %4 = vector.load %arg5[%c0_7, %c0_8] : memref<1x128xf32, #tpu.memory_space<vmem>>, vector<1x128xf32>
    %c0_9 = arith.constant 0 : index
    %c0_10 = arith.constant 0 : index
    %5 = vector.load %arg6[%c0_9, %c0_10] : memref<128x128xbf16, #tpu.memory_space<vmem>>, vector<128x128xbf16>
    %c0_11 = arith.constant 0 : index
    %c0_12 = arith.constant 0 : index
    %6 = vector.load %arg7[%c0_11, %c0_12] : memref<1x128xf32, #tpu.memory_space<vmem>>, vector<1x128xf32>
    %c0_13 = arith.constant 0 : index
    %c0_14 = arith.constant 0 : index
    %7 = vector.load %arg8[%c0_13, %c0_14] : memref<1x128xf32, #tpu.memory_space<vmem>>, vector<1x128xf32>
    %c0_15 = arith.constant 0 : index
    %c0_16 = arith.constant 0 : index
    %8 = vector.load %arg9[%c0_15, %c0_16] : memref<1x128xf32, #tpu.memory_space<vmem>>, vector<1x128xf32>
    %9 = arith.truncf %0 : vector<16x8xf32> to vector<16x8xbf16>
    %cst = arith.constant dense<0.000000e+00> : vector<16x128xf32>
    %10 = tpu.matmul %9, %1, %cst {dimension_numbers = #tpu.dot_dimension_numbers<[1], [0], [0], [1], [0, 0, 1, 1], [], []>} : vector<16x8xbf16>, vector<8x128xbf16>, vector<16x128xf32> -> vector<16x128xf32>
    %11 = vector.broadcast %2 : vector<1x128xf32> to vector<16x128xf32>
    %12 = arith.addf %10, %11 : vector<16x128xf32>
    %cst_17 = arith.constant 0.000000e+00 : f32
    %13 = vector.broadcast %cst_17 : f32 to vector<16x128xf32>
    %14 = arith.maximumf %12, %13 : vector<16x128xf32>
    %15 = arith.truncf %14 : vector<16x128xf32> to vector<16x128xbf16>
    %cst_18 = arith.constant dense<0.000000e+00> : vector<16x128xf32>
    %16 = tpu.matmul %15, %3, %cst_18 {dimension_numbers = #tpu.dot_dimension_numbers<[1], [0], [0], [1], [0, 0, 1, 1], [], []>} : vector<16x128xbf16>, vector<128x128xbf16>, vector<16x128xf32> -> vector<16x128xf32>
    %17 = vector.broadcast %4 : vector<1x128xf32> to vector<16x128xf32>
    %18 = arith.addf %16, %17 : vector<16x128xf32>
    %cst_19 = arith.constant 0.000000e+00 : f32
    %19 = vector.broadcast %cst_19 : f32 to vector<16x128xf32>
    %20 = arith.maximumf %18, %19 : vector<16x128xf32>
    %21 = arith.truncf %20 : vector<16x128xf32> to vector<16x128xbf16>
    %cst_20 = arith.constant dense<0.000000e+00> : vector<16x128xf32>
    %22 = tpu.matmul %21, %5, %cst_20 {dimension_numbers = #tpu.dot_dimension_numbers<[1], [0], [0], [1], [0, 0, 1, 1], [], []>} : vector<16x128xbf16>, vector<128x128xbf16>, vector<16x128xf32> -> vector<16x128xf32>
    %23 = vector.broadcast %6 : vector<1x128xf32> to vector<16x128xf32>
    %24 = arith.addf %22, %23 : vector<16x128xf32>
    %cst_21 = arith.constant dense<0.000000e+00> : vector<16xf32>
    %25 = vector.multi_reduction <add>, %24, %cst_21 [1] : vector<16x128xf32> to vector<16xf32>
    %26 = vector.shape_cast %25 : vector<16xf32> to vector<16x1xf32>
    %cst_22 = arith.constant 1.280000e+02 : f32
    %27 = vector.broadcast %cst_22 : f32 to vector<16x1xf32>
    %28 = arith.divf %26, %27 : vector<16x1xf32>
    %29 = vector.broadcast %28 : vector<16x1xf32> to vector<16x128xf32>
    %30 = arith.subf %24, %29 : vector<16x128xf32>
    %31 = arith.mulf %30, %30 : vector<16x128xf32>
    %cst_23 = arith.constant dense<0.000000e+00> : vector<16xf32>
    %32 = vector.multi_reduction <add>, %31, %cst_23 [1] : vector<16x128xf32> to vector<16xf32>
    %33 = vector.shape_cast %32 : vector<16xf32> to vector<16x1xf32>
    %cst_24 = arith.constant 1.280000e+02 : f32
    %34 = vector.broadcast %cst_24 : f32 to vector<16x1xf32>
    %35 = arith.divf %33, %34 : vector<16x1xf32>
    %36 = vector.broadcast %28 : vector<16x1xf32> to vector<16x128xf32>
    %37 = arith.subf %24, %36 : vector<16x128xf32>
    %cst_25 = arith.constant 9.99999974E-6 : f32
    %38 = vector.broadcast %cst_25 : f32 to vector<16x1xf32>
    %39 = arith.addf %35, %38 : vector<16x1xf32>
    %40 = math.rsqrt %39 : vector<16x1xf32>
    %41 = vector.broadcast %40 : vector<16x1xf32> to vector<16x128xf32>
    %42 = arith.mulf %37, %41 : vector<16x128xf32>
    %43 = vector.broadcast %7 : vector<1x128xf32> to vector<16x128xf32>
    %44 = arith.mulf %42, %43 : vector<16x128xf32>
    %45 = vector.broadcast %8 : vector<1x128xf32> to vector<16x128xf32>
    %46 = arith.addf %44, %45 : vector<16x128xf32>
    %c0_26 = arith.constant 0 : index
    %c0_27 = arith.constant 0 : index
    %47 = vector.load %arg10[%c0_26, %c0_27] : memref<16x128xf32, #tpu.memory_space<vmem>>, vector<16x128xf32>
    tpu.vector_store %arg10[%c0_26, %c0_27], %46 {strides = array<i32>} : memref<16x128xf32, #tpu.memory_space<vmem>>, vector<16x128xf32>,
    return
  }
  func.func @transform_0(%arg0: i32) -> (i32, i32) {
    %c0_i32 = arith.constant 0 : i32
    %c0_i32_0 = arith.constant 0 : i32
    return %arg0, %c0_i32 : i32, i32
  }
  func.func @transform_1(%arg0: i32) -> (i32, i32) {
    %c0_i32 = arith.constant 0 : i32
    %c0_i32_0 = arith.constant 0 : i32
    %c0_i32_1 = arith.constant 0 : i32
    return %c0_i32, %c0_i32_0 : i32, i32
  }
  func.func @transform_2(%arg0: i32) -> (i32, i32) {
    %c0_i32 = arith.constant 0 : i32
    %c0_i32_0 = arith.constant 0 : i32
    %c0_i32_1 = arith.constant 0 : i32
    return %c0_i32, %c0_i32_0 : i32, i32
  }
  func.func @transform_3(%arg0: i32) -> (i32, i32) {
    %c0_i32 = arith.constant 0 : i32
    %c0_i32_0 = arith.constant 0 : i32
    %c0_i32_1 = arith.constant 0 : i32
    return %c0_i32, %c0_i32_0 : i32, i32
  }
  func.func @transform_4(%arg0: i32) -> (i32, i32) {
    %c0_i32 = arith.constant 0 : i32
    %c0_i32_0 = arith.constant 0 : i32
    %c0_i32_1 = arith.constant 0 : i32
    return %c0_i32, %c0_i32_0 : i32, i32
  }
  func.func @transform_5(%arg0: i32) -> (i32, i32) {
    %c0_i32 = arith.constant 0 : i32
    %c0_i32_0 = arith.constant 0 : i32
    %c0_i32_1 = arith.constant 0 : i32
    return %c0_i32, %c0_i32_0 : i32, i32
  }
  func.func @transform_6(%arg0: i32) -> (i32, i32) {
    %c0_i32 = arith.constant 0 : i32
    %c0_i32_0 = arith.constant 0 : i32
    %c0_i32_1 = arith.constant 0 : i32
    return %c0_i32, %c0_i32_0 : i32, i32
  }
  func.func @transform_7(%arg0: i32) -> (i32, i32) {
    %c0_i32 = arith.constant 0 : i32
    %c0_i32_0 = arith.constant 0 : i32
    %c0_i32_1 = arith.constant 0 : i32
    return %c0_i32, %c0_i32_0 : i32, i32
  }
  func.func @transform_8(%arg0: i32) -> (i32, i32) {
    %c0_i32 = arith.constant 0 : i32
    %c0_i32_0 = arith.constant 0 : i32
    %c0_i32_1 = arith.constant 0 : i32
    return %c0_i32, %c0_i32_0 : i32, i32
  }
  func.func @transform_9(%arg0: i32) -> (i32, i32) {
    %c0_i32 = arith.constant 0 : i32
    %c0_i32_0 = arith.constant 0 : i32
    return %arg0, %c0_i32 : i32, i32
  }
}

module attributes {stable_mosaic.version = 11 : i64} {
  func.func @_mlp_chain_kernel(%arg0: i32, %arg1: memref<16x128xf32, #tpu.memory_space<vmem>>, %arg2: memref<16x128xf32, #tpu.memory_space<vmem>>, %arg3: memref<16x128xf32, #tpu.memory_space<vmem>>, %arg4: memref<128x128xbf16, #tpu.memory_space<vmem>>, %arg5: memref<128x128xbf16, #tpu.memory_space<vmem>>, %arg6: memref<1x128xf32, #tpu.memory_space<vmem>>, %arg7: memref<128x128xbf16, #tpu.memory_space<vmem>>, %arg8: memref<1x128xf32, #tpu.memory_space<vmem>>, %arg9: memref<128x128xbf16, #tpu.memory_space<vmem>>, %arg10: memref<1x128xf32, #tpu.memory_space<vmem>>, %arg11: memref<1x128xf32, #tpu.memory_space<vmem>>, %arg12: memref<1x128xf32, #tpu.memory_space<vmem>>, %arg13: memref<128x128xbf16, #tpu.memory_space<vmem>>, %arg14: memref<1x128xf32, #tpu.memory_space<vmem>>, %arg15: memref<128x128xbf16, #tpu.memory_space<vmem>>, %arg16: memref<1x128xf32, #tpu.memory_space<vmem>>, %arg17: memref<128x128xbf16, #tpu.memory_space<vmem>>, %arg18: memref<1x128xf32, #tpu.memory_space<vmem>>, %arg19: memref<1x128xf32, #tpu.memory_space<vmem>>, %arg20: memref<1x128xf32, #tpu.memory_space<vmem>>, %arg21: memref<16x128xf32, #tpu.memory_space<vmem>>) attributes {dimension_semantics = [#tpu.dimension_semantics<parallel>], iteration_bounds = array<i64: 1>, scalar_prefetch = 0 : i64, scratch_operands = 0 : i64, tpu.core_type = #tpu.core_type<tc>, window_params = [{transform_indices = @transform_0, window_bounds = array<i64: 16, 128>}, {transform_indices = @transform_1, window_bounds = array<i64: 16, 128>}, {transform_indices = @transform_2, window_bounds = array<i64: 16, 128>}, {pipeline_mode = #tpu.pipeline_mode<synchronous>, transform_indices = @transform_3, window_bounds = array<i64: 128, 128>}, {pipeline_mode = #tpu.pipeline_mode<synchronous>, transform_indices = @transform_4, window_bounds = array<i64: 128, 128>}, {pipeline_mode = #tpu.pipeline_mode<synchronous>, transform_indices = @transform_5, window_bounds = array<i64: 1, 128>}, {pipeline_mode = #tpu.pipeline_mode<synchronous>, transform_indices = @transform_6, window_bounds = array<i64: 128, 128>}, {pipeline_mode = #tpu.pipeline_mode<synchronous>, transform_indices = @transform_7, window_bounds = array<i64: 1, 128>}, {pipeline_mode = #tpu.pipeline_mode<synchronous>, transform_indices = @transform_8, window_bounds = array<i64: 128, 128>}, {pipeline_mode = #tpu.pipeline_mode<synchronous>, transform_indices = @transform_9, window_bounds = array<i64: 1, 128>}, {pipeline_mode = #tpu.pipeline_mode<synchronous>, transform_indices = @transform_10, window_bounds = array<i64: 1, 128>}, {pipeline_mode = #tpu.pipeline_mode<synchronous>, transform_indices = @transform_11, window_bounds = array<i64: 1, 128>}, {pipeline_mode = #tpu.pipeline_mode<synchronous>, transform_indices = @transform_12, window_bounds = array<i64: 128, 128>}, {pipeline_mode = #tpu.pipeline_mode<synchronous>, transform_indices = @transform_13, window_bounds = array<i64: 1, 128>}, {pipeline_mode = #tpu.pipeline_mode<synchronous>, transform_indices = @transform_14, window_bounds = array<i64: 128, 128>}, {pipeline_mode = #tpu.pipeline_mode<synchronous>, transform_indices = @transform_15, window_bounds = array<i64: 1, 128>}, {pipeline_mode = #tpu.pipeline_mode<synchronous>, transform_indices = @transform_16, window_bounds = array<i64: 128, 128>}, {pipeline_mode = #tpu.pipeline_mode<synchronous>, transform_indices = @transform_17, window_bounds = array<i64: 1, 128>}, {pipeline_mode = #tpu.pipeline_mode<synchronous>, transform_indices = @transform_18, window_bounds = array<i64: 1, 128>}, {pipeline_mode = #tpu.pipeline_mode<synchronous>, transform_indices = @transform_19, window_bounds = array<i64: 1, 128>}, {transform_indices = @transform_20, window_bounds = array<i64: 16, 128>}]} {
    %c0 = arith.constant 0 : index
    %c0_0 = arith.constant 0 : index
    %0 = vector.load %arg1[%c0, %c0_0] : memref<16x128xf32, #tpu.memory_space<vmem>>, vector<16x128xf32>
    %c0_1 = arith.constant 0 : index
    %c0_2 = arith.constant 0 : index
    %1 = vector.load %arg2[%c0_1, %c0_2] : memref<16x128xf32, #tpu.memory_space<vmem>>, vector<16x128xf32>
    %c0_3 = arith.constant 0 : index
    %c0_4 = arith.constant 0 : index
    %2 = vector.load %arg4[%c0_3, %c0_4] : memref<128x128xbf16, #tpu.memory_space<vmem>>, vector<128x128xbf16>
    %c0_5 = arith.constant 0 : index
    %c0_6 = arith.constant 0 : index
    %3 = vector.load %arg5[%c0_5, %c0_6] : memref<128x128xbf16, #tpu.memory_space<vmem>>, vector<128x128xbf16>
    %c0_7 = arith.constant 0 : index
    %c0_8 = arith.constant 0 : index
    %4 = vector.load %arg6[%c0_7, %c0_8] : memref<1x128xf32, #tpu.memory_space<vmem>>, vector<1x128xf32>
    %c0_9 = arith.constant 0 : index
    %c0_10 = arith.constant 0 : index
    %5 = vector.load %arg7[%c0_9, %c0_10] : memref<128x128xbf16, #tpu.memory_space<vmem>>, vector<128x128xbf16>
    %c0_11 = arith.constant 0 : index
    %c0_12 = arith.constant 0 : index
    %6 = vector.load %arg8[%c0_11, %c0_12] : memref<1x128xf32, #tpu.memory_space<vmem>>, vector<1x128xf32>
    %c0_13 = arith.constant 0 : index
    %c0_14 = arith.constant 0 : index
    %7 = vector.load %arg9[%c0_13, %c0_14] : memref<128x128xbf16, #tpu.memory_space<vmem>>, vector<128x128xbf16>
    %c0_15 = arith.constant 0 : index
    %c0_16 = arith.constant 0 : index
    %8 = vector.load %arg10[%c0_15, %c0_16] : memref<1x128xf32, #tpu.memory_space<vmem>>, vector<1x128xf32>
    %c0_17 = arith.constant 0 : index
    %c0_18 = arith.constant 0 : index
    %9 = vector.load %arg11[%c0_17, %c0_18] : memref<1x128xf32, #tpu.memory_space<vmem>>, vector<1x128xf32>
    %c0_19 = arith.constant 0 : index
    %c0_20 = arith.constant 0 : index
    %10 = vector.load %arg12[%c0_19, %c0_20] : memref<1x128xf32, #tpu.memory_space<vmem>>, vector<1x128xf32>
    %c0_21 = arith.constant 0 : index
    %c0_22 = arith.constant 0 : index
    %11 = vector.load %arg13[%c0_21, %c0_22] : memref<128x128xbf16, #tpu.memory_space<vmem>>, vector<128x128xbf16>
    %c0_23 = arith.constant 0 : index
    %c0_24 = arith.constant 0 : index
    %12 = vector.load %arg14[%c0_23, %c0_24] : memref<1x128xf32, #tpu.memory_space<vmem>>, vector<1x128xf32>
    %c0_25 = arith.constant 0 : index
    %c0_26 = arith.constant 0 : index
    %13 = vector.load %arg15[%c0_25, %c0_26] : memref<128x128xbf16, #tpu.memory_space<vmem>>, vector<128x128xbf16>
    %c0_27 = arith.constant 0 : index
    %c0_28 = arith.constant 0 : index
    %14 = vector.load %arg16[%c0_27, %c0_28] : memref<1x128xf32, #tpu.memory_space<vmem>>, vector<1x128xf32>
    %c0_29 = arith.constant 0 : index
    %c0_30 = arith.constant 0 : index
    %15 = vector.load %arg17[%c0_29, %c0_30] : memref<128x128xbf16, #tpu.memory_space<vmem>>, vector<128x128xbf16>
    %c0_31 = arith.constant 0 : index
    %c0_32 = arith.constant 0 : index
    %16 = vector.load %arg18[%c0_31, %c0_32] : memref<1x128xf32, #tpu.memory_space<vmem>>, vector<1x128xf32>
    %c0_33 = arith.constant 0 : index
    %c0_34 = arith.constant 0 : index
    %17 = vector.load %arg19[%c0_33, %c0_34] : memref<1x128xf32, #tpu.memory_space<vmem>>, vector<1x128xf32>
    %c0_35 = arith.constant 0 : index
    %c0_36 = arith.constant 0 : index
    %18 = vector.load %arg20[%c0_35, %c0_36] : memref<1x128xf32, #tpu.memory_space<vmem>>, vector<1x128xf32>
    %19 = arith.truncf %0 : vector<16x128xf32> to vector<16x128xbf16>
    %cst = arith.constant dense<0.000000e+00> : vector<16x128xf32>
    %20 = tpu.matmul %19, %2, %cst {dimension_numbers = #tpu.dot_dimension_numbers<[1], [0], [0], [1], [0, 0, 1, 1], [], []>} : vector<16x128xbf16>, vector<128x128xbf16>, vector<16x128xf32> -> vector<16x128xf32>
    %21 = arith.truncf %1 : vector<16x128xf32> to vector<16x128xbf16>
    %cst_37 = arith.constant dense<0.000000e+00> : vector<16x128xf32>
    %22 = tpu.matmul %21, %3, %cst_37 {dimension_numbers = #tpu.dot_dimension_numbers<[1], [0], [0], [1], [0, 0, 1, 1], [], []>} : vector<16x128xbf16>, vector<128x128xbf16>, vector<16x128xf32> -> vector<16x128xf32>
    %23 = arith.addf %20, %22 : vector<16x128xf32>
    %24 = vector.broadcast %4 : vector<1x128xf32> to vector<16x128xf32>
    %25 = arith.addf %23, %24 : vector<16x128xf32>
    %cst_38 = arith.constant 0.000000e+00 : f32
    %26 = vector.broadcast %cst_38 : f32 to vector<16x128xf32>
    %27 = arith.maximumf %25, %26 : vector<16x128xf32>
    %28 = arith.truncf %27 : vector<16x128xf32> to vector<16x128xbf16>
    %cst_39 = arith.constant dense<0.000000e+00> : vector<16x128xf32>
    %29 = tpu.matmul %28, %5, %cst_39 {dimension_numbers = #tpu.dot_dimension_numbers<[1], [0], [0], [1], [0, 0, 1, 1], [], []>} : vector<16x128xbf16>, vector<128x128xbf16>, vector<16x128xf32> -> vector<16x128xf32>
    %30 = vector.broadcast %6 : vector<1x128xf32> to vector<16x128xf32>
    %31 = arith.addf %29, %30 : vector<16x128xf32>
    %cst_40 = arith.constant 0.000000e+00 : f32
    %32 = vector.broadcast %cst_40 : f32 to vector<16x128xf32>
    %33 = arith.maximumf %31, %32 : vector<16x128xf32>
    %34 = arith.truncf %33 : vector<16x128xf32> to vector<16x128xbf16>
    %cst_41 = arith.constant dense<0.000000e+00> : vector<16x128xf32>
    %35 = tpu.matmul %34, %7, %cst_41 {dimension_numbers = #tpu.dot_dimension_numbers<[1], [0], [0], [1], [0, 0, 1, 1], [], []>} : vector<16x128xbf16>, vector<128x128xbf16>, vector<16x128xf32> -> vector<16x128xf32>
    %36 = vector.broadcast %8 : vector<1x128xf32> to vector<16x128xf32>
    %37 = arith.addf %35, %36 : vector<16x128xf32>
    %cst_42 = arith.constant dense<0.000000e+00> : vector<16xf32>
    %38 = vector.multi_reduction <add>, %37, %cst_42 [1] : vector<16x128xf32> to vector<16xf32>
    %39 = vector.shape_cast %38 : vector<16xf32> to vector<16x1xf32>
    %cst_43 = arith.constant 1.280000e+02 : f32
    %40 = vector.broadcast %cst_43 : f32 to vector<16x1xf32>
    %41 = arith.divf %39, %40 : vector<16x1xf32>
    %42 = vector.broadcast %41 : vector<16x1xf32> to vector<16x128xf32>
    %43 = arith.subf %37, %42 : vector<16x128xf32>
    %44 = arith.mulf %43, %43 : vector<16x128xf32>
    %cst_44 = arith.constant dense<0.000000e+00> : vector<16xf32>
    %45 = vector.multi_reduction <add>, %44, %cst_44 [1] : vector<16x128xf32> to vector<16xf32>
    %46 = vector.shape_cast %45 : vector<16xf32> to vector<16x1xf32>
    %cst_45 = arith.constant 1.280000e+02 : f32
    %47 = vector.broadcast %cst_45 : f32 to vector<16x1xf32>
    %48 = arith.divf %46, %47 : vector<16x1xf32>
    %49 = vector.broadcast %41 : vector<16x1xf32> to vector<16x128xf32>
    %50 = arith.subf %37, %49 : vector<16x128xf32>
    %cst_46 = arith.constant 9.99999974E-6 : f32
    %51 = vector.broadcast %cst_46 : f32 to vector<16x1xf32>
    %52 = arith.addf %48, %51 : vector<16x1xf32>
    %53 = math.rsqrt %52 : vector<16x1xf32>
    %54 = vector.broadcast %53 : vector<16x1xf32> to vector<16x128xf32>
    %55 = arith.mulf %50, %54 : vector<16x128xf32>
    %56 = vector.broadcast %9 : vector<1x128xf32> to vector<16x128xf32>
    %57 = arith.mulf %55, %56 : vector<16x128xf32>
    %58 = vector.broadcast %10 : vector<1x128xf32> to vector<16x128xf32>
    %59 = arith.addf %57, %58 : vector<16x128xf32>
    %60 = arith.truncf %59 : vector<16x128xf32> to vector<16x128xbf16>
    %cst_47 = arith.constant dense<0.000000e+00> : vector<16x128xf32>
    %61 = tpu.matmul %60, %11, %cst_47 {dimension_numbers = #tpu.dot_dimension_numbers<[1], [0], [0], [1], [0, 0, 1, 1], [], []>} : vector<16x128xbf16>, vector<128x128xbf16>, vector<16x128xf32> -> vector<16x128xf32>
    %62 = vector.broadcast %12 : vector<1x128xf32> to vector<16x128xf32>
    %63 = arith.addf %61, %62 : vector<16x128xf32>
    %cst_48 = arith.constant 0.000000e+00 : f32
    %64 = vector.broadcast %cst_48 : f32 to vector<16x128xf32>
    %65 = arith.maximumf %63, %64 : vector<16x128xf32>
    %66 = arith.truncf %65 : vector<16x128xf32> to vector<16x128xbf16>
    %cst_49 = arith.constant dense<0.000000e+00> : vector<16x128xf32>
    %67 = tpu.matmul %66, %13, %cst_49 {dimension_numbers = #tpu.dot_dimension_numbers<[1], [0], [0], [1], [0, 0, 1, 1], [], []>} : vector<16x128xbf16>, vector<128x128xbf16>, vector<16x128xf32> -> vector<16x128xf32>
    %68 = vector.broadcast %14 : vector<1x128xf32> to vector<16x128xf32>
    %69 = arith.addf %67, %68 : vector<16x128xf32>
    %cst_50 = arith.constant 0.000000e+00 : f32
    %70 = vector.broadcast %cst_50 : f32 to vector<16x128xf32>
    %71 = arith.maximumf %69, %70 : vector<16x128xf32>
    %72 = arith.truncf %71 : vector<16x128xf32> to vector<16x128xbf16>
    %cst_51 = arith.constant dense<0.000000e+00> : vector<16x128xf32>
    %73 = tpu.matmul %72, %15, %cst_51 {dimension_numbers = #tpu.dot_dimension_numbers<[1], [0], [0], [1], [0, 0, 1, 1], [], []>} : vector<16x128xbf16>, vector<128x128xbf16>, vector<16x128xf32> -> vector<16x128xf32>
    %74 = vector.broadcast %16 : vector<1x128xf32> to vector<16x128xf32>
    %75 = arith.addf %73, %74 : vector<16x128xf32>
    %cst_52 = arith.constant dense<0.000000e+00> : vector<16xf32>
    %76 = vector.multi_reduction <add>, %75, %cst_52 [1] : vector<16x128xf32> to vector<16xf32>
    %77 = vector.shape_cast %76 : vector<16xf32> to vector<16x1xf32>
    %cst_53 = arith.constant 1.280000e+02 : f32
    %78 = vector.broadcast %cst_53 : f32 to vector<16x1xf32>
    %79 = arith.divf %77, %78 : vector<16x1xf32>
    %80 = vector.broadcast %79 : vector<16x1xf32> to vector<16x128xf32>
    %81 = arith.subf %75, %80 : vector<16x128xf32>
    %82 = arith.mulf %81, %81 : vector<16x128xf32>
    %cst_54 = arith.constant dense<0.000000e+00> : vector<16xf32>
    %83 = vector.multi_reduction <add>, %82, %cst_54 [1] : vector<16x128xf32> to vector<16xf32>
    %84 = vector.shape_cast %83 : vector<16xf32> to vector<16x1xf32>
    %cst_55 = arith.constant 1.280000e+02 : f32
    %85 = vector.broadcast %cst_55 : f32 to vector<16x1xf32>
    %86 = arith.divf %84, %85 : vector<16x1xf32>
    %87 = vector.broadcast %79 : vector<16x1xf32> to vector<16x128xf32>
    %88 = arith.subf %75, %87 : vector<16x128xf32>
    %cst_56 = arith.constant 9.99999974E-6 : f32
    %89 = vector.broadcast %cst_56 : f32 to vector<16x1xf32>
    %90 = arith.addf %86, %89 : vector<16x1xf32>
    %91 = math.rsqrt %90 : vector<16x1xf32>
    %92 = vector.broadcast %91 : vector<16x1xf32> to vector<16x128xf32>
    %93 = arith.mulf %88, %92 : vector<16x128xf32>
    %94 = vector.broadcast %17 : vector<1x128xf32> to vector<16x128xf32>
    %95 = arith.mulf %93, %94 : vector<16x128xf32>
    %96 = vector.broadcast %18 : vector<1x128xf32> to vector<16x128xf32>
    %97 = arith.addf %95, %96 : vector<16x128xf32>
    %c0_57 = arith.constant 0 : index
    %c0_58 = arith.constant 0 : index
    %98 = vector.load %arg3[%c0_57, %c0_58] : memref<16x128xf32, #tpu.memory_space<vmem>>, vector<16x128xf32>
    %99 = arith.addf %97, %98 : vector<16x128xf32>
    %c0_59 = arith.constant 0 : index
    %c0_60 = arith.constant 0 : index
    %100 = vector.load %arg21[%c0_59, %c0_60] : memref<16x128xf32, #tpu.memory_space<vmem>>, vector<16x128xf32>
    tpu.vector_store %arg21[%c0_59, %c0_60], %99 {strides = array<i32>} : memref<16x128xf32, #tpu.memory_space<vmem>>, vector<16x128xf32>,
    return
  }
  func.func @transform_0(%arg0: i32) -> (i32, i32) {
    %c0_i32 = arith.constant 0 : i32
    %c0_i32_0 = arith.constant 0 : i32
    return %arg0, %c0_i32 : i32, i32
  }
  func.func @transform_1(%arg0: i32) -> (i32, i32) {
    %c0_i32 = arith.constant 0 : i32
    %c0_i32_0 = arith.constant 0 : i32
    return %arg0, %c0_i32 : i32, i32
  }
  func.func @transform_2(%arg0: i32) -> (i32, i32) {
    %c0_i32 = arith.constant 0 : i32
    %c0_i32_0 = arith.constant 0 : i32
    return %arg0, %c0_i32 : i32, i32
  }
  func.func @transform_3(%arg0: i32) -> (i32, i32) {
    %c0_i32 = arith.constant 0 : i32
    %c0_i32_0 = arith.constant 0 : i32
    %c0_i32_1 = arith.constant 0 : i32
    return %c0_i32, %c0_i32_0 : i32, i32
  }
  func.func @transform_4(%arg0: i32) -> (i32, i32) {
    %c0_i32 = arith.constant 0 : i32
    %c0_i32_0 = arith.constant 0 : i32
    %c0_i32_1 = arith.constant 0 : i32
    return %c0_i32, %c0_i32_0 : i32, i32
  }
  func.func @transform_5(%arg0: i32) -> (i32, i32) {
    %c0_i32 = arith.constant 0 : i32
    %c0_i32_0 = arith.constant 0 : i32
    %c0_i32_1 = arith.constant 0 : i32
    return %c0_i32, %c0_i32_0 : i32, i32
  }
  func.func @transform_6(%arg0: i32) -> (i32, i32) {
    %c0_i32 = arith.constant 0 : i32
    %c0_i32_0 = arith.constant 0 : i32
    %c0_i32_1 = arith.constant 0 : i32
    return %c0_i32, %c0_i32_0 : i32, i32
  }
  func.func @transform_7(%arg0: i32) -> (i32, i32) {
    %c0_i32 = arith.constant 0 : i32
    %c0_i32_0 = arith.constant 0 : i32
    %c0_i32_1 = arith.constant 0 : i32
    return %c0_i32, %c0_i32_0 : i32, i32
  }
  func.func @transform_8(%arg0: i32) -> (i32, i32) {
    %c0_i32 = arith.constant 0 : i32
    %c0_i32_0 = arith.constant 0 : i32
    %c0_i32_1 = arith.constant 0 : i32
    return %c0_i32, %c0_i32_0 : i32, i32
  }
  func.func @transform_9(%arg0: i32) -> (i32, i32) {
    %c0_i32 = arith.constant 0 : i32
    %c0_i32_0 = arith.constant 0 : i32
    %c0_i32_1 = arith.constant 0 : i32
    return %c0_i32, %c0_i32_0 : i32, i32
  }
  func.func @transform_10(%arg0: i32) -> (i32, i32) {
    %c0_i32 = arith.constant 0 : i32
    %c0_i32_0 = arith.constant 0 : i32
    %c0_i32_1 = arith.constant 0 : i32
    return %c0_i32, %c0_i32_0 : i32, i32
  }
  func.func @transform_11(%arg0: i32) -> (i32, i32) {
    %c0_i32 = arith.constant 0 : i32
    %c0_i32_0 = arith.constant 0 : i32
    %c0_i32_1 = arith.constant 0 : i32
    return %c0_i32, %c0_i32_0 : i32, i32
  }
  func.func @transform_12(%arg0: i32) -> (i32, i32) {
    %c0_i32 = arith.constant 0 : i32
    %c0_i32_0 = arith.constant 0 : i32
    %c0_i32_1 = arith.constant 0 : i32
    return %c0_i32, %c0_i32_0 : i32, i32
  }
  func.func @transform_13(%arg0: i32) -> (i32, i32) {
    %c0_i32 = arith.constant 0 : i32
    %c0_i32_0 = arith.constant 0 : i32
    %c0_i32_1 = arith.constant 0 : i32
    return %c0_i32, %c0_i32_0 : i32, i32
  }
  func.func @transform_14(%arg0: i32) -> (i32, i32) {
    %c0_i32 = arith.constant 0 : i32
    %c0_i32_0 = arith.constant 0 : i32
    %c0_i32_1 = arith.constant 0 : i32
    return %c0_i32, %c0_i32_0 : i32, i32
  }
  func.func @transform_15(%arg0: i32) -> (i32, i32) {
    %c0_i32 = arith.constant 0 : i32
    %c0_i32_0 = arith.constant 0 : i32
    %c0_i32_1 = arith.constant 0 : i32
    return %c0_i32, %c0_i32_0 : i32, i32
  }
  func.func @transform_16(%arg0: i32) -> (i32, i32) {
    %c0_i32 = arith.constant 0 : i32
    %c0_i32_0 = arith.constant 0 : i32
    %c0_i32_1 = arith.constant 0 : i32
    return %c0_i32, %c0_i32_0 : i32, i32
  }
  func.func @transform_17(%arg0: i32) -> (i32, i32) {
    %c0_i32 = arith.constant 0 : i32
    %c0_i32_0 = arith.constant 0 : i32
    %c0_i32_1 = arith.constant 0 : i32
    return %c0_i32, %c0_i32_0 : i32, i32
  }
  func.func @transform_18(%arg0: i32) -> (i32, i32) {
    %c0_i32 = arith.constant 0 : i32
    %c0_i32_0 = arith.constant 0 : i32
    %c0_i32_1 = arith.constant 0 : i32
    return %c0_i32, %c0_i32_0 : i32, i32
  }
  func.func @transform_19(%arg0: i32) -> (i32, i32) {
    %c0_i32 = arith.constant 0 : i32
    %c0_i32_0 = arith.constant 0 : i32
    %c0_i32_1 = arith.constant 0 : i32
    return %c0_i32, %c0_i32_0 : i32, i32
  }
  func.func @transform_20(%arg0: i32) -> (i32, i32) {
    %c0_i32 = arith.constant 0 : i32
    %c0_i32_0 = arith.constant 0 : i32
    return %arg0, %c0_i32 : i32, i32
  }
}

module attributes {stable_mosaic.version = 11 : i64} {
  func.func @_message_agg_kernel(%arg0: i32, %arg1: i32, %arg2: memref<1x32xi32, #tpu.memory_space<vmem>>, %arg3: memref<32x1xi32, #tpu.memory_space<vmem>>, %arg4: memref<32x1xi32, #tpu.memory_space<vmem>>, %arg5: memref<16x128xbf16, #tpu.memory_space<vmem>>, %arg6: memref<32x128xf32, #tpu.memory_space<vmem>>, %arg7: memref<128x128xbf16, #tpu.memory_space<vmem>>, %arg8: memref<128x128xbf16, #tpu.memory_space<vmem>>, %arg9: memref<128x128xbf16, #tpu.memory_space<vmem>>, %arg10: memref<1x128xf32, #tpu.memory_space<vmem>>, %arg11: memref<128x128xbf16, #tpu.memory_space<vmem>>, %arg12: memref<1x128xf32, #tpu.memory_space<vmem>>, %arg13: memref<128x128xbf16, #tpu.memory_space<vmem>>, %arg14: memref<1x128xf32, #tpu.memory_space<vmem>>, %arg15: memref<1x128xf32, #tpu.memory_space<vmem>>, %arg16: memref<1x128xf32, #tpu.memory_space<vmem>>, %arg17: memref<16x128xf32, #tpu.memory_space<vmem>>) attributes {dimension_semantics = [#tpu.dimension_semantics<parallel>, #tpu.dimension_semantics<arbitrary>], iteration_bounds = array<i64: 1, 1>, scalar_prefetch = 0 : i64, scratch_operands = 0 : i64, tpu.core_type = #tpu.core_type<tc>, window_params = [{transform_indices = @transform_0, window_bounds = array<i64: 1, 32>}, {transform_indices = @transform_1, window_bounds = array<i64: 32, 1>}, {transform_indices = @transform_2, window_bounds = array<i64: 32, 1>}, {pipeline_mode = #tpu.pipeline_mode<synchronous>, transform_indices = @transform_3, window_bounds = array<i64: 16, 128>}, {transform_indices = @transform_4, window_bounds = array<i64: 32, 128>}, {pipeline_mode = #tpu.pipeline_mode<synchronous>, transform_indices = @transform_5, window_bounds = array<i64: 128, 128>}, {pipeline_mode = #tpu.pipeline_mode<synchronous>, transform_indices = @transform_6, window_bounds = array<i64: 128, 128>}, {pipeline_mode = #tpu.pipeline_mode<synchronous>, transform_indices = @transform_7, window_bounds = array<i64: 128, 128>}, {pipeline_mode = #tpu.pipeline_mode<synchronous>, transform_indices = @transform_8, window_bounds = array<i64: 1, 128>}, {pipeline_mode = #tpu.pipeline_mode<synchronous>, transform_indices = @transform_9, window_bounds = array<i64: 128, 128>}, {pipeline_mode = #tpu.pipeline_mode<synchronous>, transform_indices = @transform_10, window_bounds = array<i64: 1, 128>}, {pipeline_mode = #tpu.pipeline_mode<synchronous>, transform_indices = @transform_11, window_bounds = array<i64: 128, 128>}, {pipeline_mode = #tpu.pipeline_mode<synchronous>, transform_indices = @transform_12, window_bounds = array<i64: 1, 128>}, {pipeline_mode = #tpu.pipeline_mode<synchronous>, transform_indices = @transform_13, window_bounds = array<i64: 1, 128>}, {pipeline_mode = #tpu.pipeline_mode<synchronous>, transform_indices = @transform_14, window_bounds = array<i64: 1, 128>}, {transform_indices = @transform_15, window_bounds = array<i64: 16, 128>}]} {
    %c0 = arith.constant 0 : index
    %c0_0 = arith.constant 0 : index
    %0 = vector.load %arg7[%c0, %c0_0] : memref<128x128xbf16, #tpu.memory_space<vmem>>, vector<128x128xbf16>
    %c0_1 = arith.constant 0 : index
    %c0_2 = arith.constant 0 : index
    %1 = vector.load %arg8[%c0_1, %c0_2] : memref<128x128xbf16, #tpu.memory_space<vmem>>, vector<128x128xbf16>
    %c0_3 = arith.constant 0 : index
    %c0_4 = arith.constant 0 : index
    %2 = vector.load %arg9[%c0_3, %c0_4] : memref<128x128xbf16, #tpu.memory_space<vmem>>, vector<128x128xbf16>
    %c0_5 = arith.constant 0 : index
    %c0_6 = arith.constant 0 : index
    %3 = vector.load %arg10[%c0_5, %c0_6] : memref<1x128xf32, #tpu.memory_space<vmem>>, vector<1x128xf32>
    %c0_7 = arith.constant 0 : index
    %c0_8 = arith.constant 0 : index
    %4 = vector.load %arg11[%c0_7, %c0_8] : memref<128x128xbf16, #tpu.memory_space<vmem>>, vector<128x128xbf16>
    %c0_9 = arith.constant 0 : index
    %c0_10 = arith.constant 0 : index
    %5 = vector.load %arg12[%c0_9, %c0_10] : memref<1x128xf32, #tpu.memory_space<vmem>>, vector<1x128xf32>
    %c0_11 = arith.constant 0 : index
    %c0_12 = arith.constant 0 : index
    %6 = vector.load %arg13[%c0_11, %c0_12] : memref<128x128xbf16, #tpu.memory_space<vmem>>, vector<128x128xbf16>
    %c0_13 = arith.constant 0 : index
    %c0_14 = arith.constant 0 : index
    %7 = vector.load %arg14[%c0_13, %c0_14] : memref<1x128xf32, #tpu.memory_space<vmem>>, vector<1x128xf32>
    %c0_15 = arith.constant 0 : index
    %c0_16 = arith.constant 0 : index
    %8 = vector.load %arg15[%c0_15, %c0_16] : memref<1x128xf32, #tpu.memory_space<vmem>>, vector<1x128xf32>
    %c0_17 = arith.constant 0 : index
    %c0_18 = arith.constant 0 : index
    %9 = vector.load %arg16[%c0_17, %c0_18] : memref<1x128xf32, #tpu.memory_space<vmem>>, vector<1x128xf32>
    %c0_19 = arith.constant 0 : index
    %c0_20 = arith.constant 0 : index
    %10 = vector.load %arg5[%c0_19, %c0_20] : memref<16x128xbf16, #tpu.memory_space<vmem>>, vector<16x128xbf16>
    %11 = tpu.iota {dimensions = array<i32: 1>} : vector<32x16xi32>
    %c0_21 = arith.constant 0 : index
    %c0_22 = arith.constant 0 : index
    %12 = vector.load %arg3[%c0_21, %c0_22] : memref<32x1xi32, #tpu.memory_space<vmem>>, vector<32x1xi32>
    %13 = vector.broadcast %12 : vector<32x1xi32> to vector<32x16xi32>
    %14 = arith.cmpi eq, %13, %11 : vector<32x16xi32>
    %15 = arith.extui %14 : vector<32x16xi1> to vector<32x16xi32>
    %16 = arith.sitofp %15 : vector<32x16xi32> to vector<32x16xf32>
    %17 = arith.truncf %16 : vector<32x16xf32> to vector<32x16xbf16>
    %c0_23 = arith.constant 0 : index
    %c0_24 = arith.constant 0 : index
    %18 = vector.load %arg4[%c0_23, %c0_24] : memref<32x1xi32, #tpu.memory_space<vmem>>, vector<32x1xi32>
    %19 = vector.broadcast %18 : vector<32x1xi32> to vector<32x16xi32>
    %20 = arith.cmpi eq, %19, %11 : vector<32x16xi32>
    %21 = arith.extui %20 : vector<32x16xi1> to vector<32x16xi32>
    %22 = arith.sitofp %21 : vector<32x16xi32> to vector<32x16xf32>
    %23 = arith.truncf %22 : vector<32x16xf32> to vector<32x16xbf16>
    %cst = arith.constant dense<0.000000e+00> : vector<32x128xf32>
    %24 = tpu.matmul %17, %10, %cst {dimension_numbers = #tpu.dot_dimension_numbers<[1], [0], [0], [1], [0, 0, 1, 1], [], []>} : vector<32x16xbf16>, vector<16x128xbf16>, vector<32x128xf32> -> vector<32x128xf32>
    %cst_25 = arith.constant dense<0.000000e+00> : vector<32x128xf32>
    %25 = tpu.matmul %23, %10, %cst_25 {dimension_numbers = #tpu.dot_dimension_numbers<[1], [0], [0], [1], [0, 0, 1, 1], [], []>} : vector<32x16xbf16>, vector<16x128xbf16>, vector<32x128xf32> -> vector<32x128xf32>
    %c0_26 = arith.constant 0 : index
    %c0_27 = arith.constant 0 : index
    %26 = vector.load %arg6[%c0_26, %c0_27] : memref<32x128xf32, #tpu.memory_space<vmem>>, vector<32x128xf32>
    %27 = arith.truncf %24 : vector<32x128xf32> to vector<32x128xbf16>
    %cst_28 = arith.constant dense<0.000000e+00> : vector<32x128xf32>
    %28 = tpu.matmul %27, %0, %cst_28 {dimension_numbers = #tpu.dot_dimension_numbers<[1], [0], [0], [1], [0, 0, 1, 1], [], []>} : vector<32x128xbf16>, vector<128x128xbf16>, vector<32x128xf32> -> vector<32x128xf32>
    %29 = arith.truncf %25 : vector<32x128xf32> to vector<32x128xbf16>
    %cst_29 = arith.constant dense<0.000000e+00> : vector<32x128xf32>
    %30 = tpu.matmul %29, %1, %cst_29 {dimension_numbers = #tpu.dot_dimension_numbers<[1], [0], [0], [1], [0, 0, 1, 1], [], []>} : vector<32x128xbf16>, vector<128x128xbf16>, vector<32x128xf32> -> vector<32x128xf32>
    %31 = arith.addf %28, %30 : vector<32x128xf32>
    %32 = arith.truncf %26 : vector<32x128xf32> to vector<32x128xbf16>
    %cst_30 = arith.constant dense<0.000000e+00> : vector<32x128xf32>
    %33 = tpu.matmul %32, %2, %cst_30 {dimension_numbers = #tpu.dot_dimension_numbers<[1], [0], [0], [1], [0, 0, 1, 1], [], []>} : vector<32x128xbf16>, vector<128x128xbf16>, vector<32x128xf32> -> vector<32x128xf32>
    %34 = arith.addf %31, %33 : vector<32x128xf32>
    %35 = vector.broadcast %3 : vector<1x128xf32> to vector<32x128xf32>
    %36 = arith.addf %34, %35 : vector<32x128xf32>
    %cst_31 = arith.constant 0.000000e+00 : f32
    %37 = vector.broadcast %cst_31 : f32 to vector<32x128xf32>
    %38 = arith.maximumf %36, %37 : vector<32x128xf32>
    %39 = arith.truncf %38 : vector<32x128xf32> to vector<32x128xbf16>
    %cst_32 = arith.constant dense<0.000000e+00> : vector<32x128xf32>
    %40 = tpu.matmul %39, %4, %cst_32 {dimension_numbers = #tpu.dot_dimension_numbers<[1], [0], [0], [1], [0, 0, 1, 1], [], []>} : vector<32x128xbf16>, vector<128x128xbf16>, vector<32x128xf32> -> vector<32x128xf32>
    %41 = vector.broadcast %5 : vector<1x128xf32> to vector<32x128xf32>
    %42 = arith.addf %40, %41 : vector<32x128xf32>
    %cst_33 = arith.constant 0.000000e+00 : f32
    %43 = vector.broadcast %cst_33 : f32 to vector<32x128xf32>
    %44 = arith.maximumf %42, %43 : vector<32x128xf32>
    %45 = arith.truncf %44 : vector<32x128xf32> to vector<32x128xbf16>
    %cst_34 = arith.constant dense<0.000000e+00> : vector<32x128xf32>
    %46 = tpu.matmul %45, %6, %cst_34 {dimension_numbers = #tpu.dot_dimension_numbers<[1], [0], [0], [1], [0, 0, 1, 1], [], []>} : vector<32x128xbf16>, vector<128x128xbf16>, vector<32x128xf32> -> vector<32x128xf32>
    %47 = vector.broadcast %7 : vector<1x128xf32> to vector<32x128xf32>
    %48 = arith.addf %46, %47 : vector<32x128xf32>
    %cst_35 = arith.constant dense<0.000000e+00> : vector<32xf32>
    %49 = vector.multi_reduction <add>, %48, %cst_35 [1] : vector<32x128xf32> to vector<32xf32>
    %50 = vector.shape_cast %49 : vector<32xf32> to vector<32x1xf32>
    %cst_36 = arith.constant 1.280000e+02 : f32
    %51 = vector.broadcast %cst_36 : f32 to vector<32x1xf32>
    %52 = arith.divf %50, %51 : vector<32x1xf32>
    %53 = vector.broadcast %52 : vector<32x1xf32> to vector<32x128xf32>
    %54 = arith.subf %48, %53 : vector<32x128xf32>
    %55 = arith.mulf %54, %54 : vector<32x128xf32>
    %cst_37 = arith.constant dense<0.000000e+00> : vector<32xf32>
    %56 = vector.multi_reduction <add>, %55, %cst_37 [1] : vector<32x128xf32> to vector<32xf32>
    %57 = vector.shape_cast %56 : vector<32xf32> to vector<32x1xf32>
    %cst_38 = arith.constant 1.280000e+02 : f32
    %58 = vector.broadcast %cst_38 : f32 to vector<32x1xf32>
    %59 = arith.divf %57, %58 : vector<32x1xf32>
    %60 = vector.broadcast %52 : vector<32x1xf32> to vector<32x128xf32>
    %61 = arith.subf %48, %60 : vector<32x128xf32>
    %cst_39 = arith.constant 9.99999974E-6 : f32
    %62 = vector.broadcast %cst_39 : f32 to vector<32x1xf32>
    %63 = arith.addf %59, %62 : vector<32x1xf32>
    %64 = math.rsqrt %63 : vector<32x1xf32>
    %65 = vector.broadcast %64 : vector<32x1xf32> to vector<32x128xf32>
    %66 = arith.mulf %61, %65 : vector<32x128xf32>
    %67 = vector.broadcast %8 : vector<1x128xf32> to vector<32x128xf32>
    %68 = arith.mulf %66, %67 : vector<32x128xf32>
    %69 = vector.broadcast %9 : vector<1x128xf32> to vector<32x128xf32>
    %70 = arith.addf %68, %69 : vector<32x128xf32>
    %71 = tpu.iota {dimensions = array<i32: 0>} : vector<16x32xi32>
    %c16_i32 = arith.constant 16 : i32
    %72 = arith.muli %arg0, %c16_i32 : i32
    %73 = vector.broadcast %72 : i32 to vector<16x32xi32>
    %74 = arith.addi %71, %73 : vector<16x32xi32>
    %c0_40 = arith.constant 0 : index
    %c0_41 = arith.constant 0 : index
    %75 = vector.load %arg2[%c0_40, %c0_41] : memref<1x32xi32, #tpu.memory_space<vmem>>, vector<1x32xi32>
    %76 = vector.broadcast %75 : vector<1x32xi32> to vector<16x32xi32>
    %77 = arith.cmpi eq, %74, %76 : vector<16x32xi32>
    %78 = arith.extui %77 : vector<16x32xi1> to vector<16x32xi32>
    %79 = arith.sitofp %78 : vector<16x32xi32> to vector<16x32xf32>
    %80 = arith.truncf %79 : vector<16x32xf32> to vector<16x32xbf16>
    %81 = arith.truncf %70 : vector<32x128xf32> to vector<32x128xbf16>
    %cst_42 = arith.constant dense<0.000000e+00> : vector<16x128xf32>
    %82 = tpu.matmul %80, %81, %cst_42 {dimension_numbers = #tpu.dot_dimension_numbers<[1], [0], [0], [1], [0, 0, 1, 1], [], []>} : vector<16x32xbf16>, vector<32x128xbf16>, vector<16x128xf32> -> vector<16x128xf32>
    %c0_i32 = arith.constant 0 : i32
    %83 = arith.cmpi eq, %arg1, %c0_i32 : i32
    %84 = arith.extui %83 : i1 to i32
    %c0_i32_43 = arith.constant 0 : i32
    %85 = arith.cmpi ne, %84, %c0_i32_43 : i32
    scf.if %85 {
      %cst_48 = arith.constant 0.000000e+00 : f32
      %89 = vector.broadcast %cst_48 : f32 to vector<16x128xf32>
      %c0_49 = arith.constant 0 : index
      %c0_50 = arith.constant 0 : index
      %90 = vector.load %arg17[%c0_49, %c0_50] : memref<16x128xf32, #tpu.memory_space<vmem>>, vector<16x128xf32>
      tpu.vector_store %arg17[%c0_49, %c0_50], %89 {strides = array<i32>} : memref<16x128xf32, #tpu.memory_space<vmem>>, vector<16x128xf32>,
    } else {
    }
    %c0_44 = arith.constant 0 : index
    %c0_45 = arith.constant 0 : index
    %86 = vector.load %arg17[%c0_44, %c0_45] : memref<16x128xf32, #tpu.memory_space<vmem>>, vector<16x128xf32>
    %87 = arith.addf %86, %82 : vector<16x128xf32>
    %c0_46 = arith.constant 0 : index
    %c0_47 = arith.constant 0 : index
    %88 = vector.load %arg17[%c0_46, %c0_47] : memref<16x128xf32, #tpu.memory_space<vmem>>, vector<16x128xf32>
    tpu.vector_store %arg17[%c0_46, %c0_47], %87 {strides = array<i32>} : memref<16x128xf32, #tpu.memory_space<vmem>>, vector<16x128xf32>,
    return
  }
  func.func @transform_0(%arg0: i32, %arg1: i32) -> (i32, i32) {
    %c0_i32 = arith.constant 0 : i32
    %c0_i32_0 = arith.constant 0 : i32
    return %c0_i32, %arg1 : i32, i32
  }
  func.func @transform_1(%arg0: i32, %arg1: i32) -> (i32, i32) {
    %c0_i32 = arith.constant 0 : i32
    %c0_i32_0 = arith.constant 0 : i32
    return %arg1, %c0_i32 : i32, i32
  }
  func.func @transform_2(%arg0: i32, %arg1: i32) -> (i32, i32) {
    %c0_i32 = arith.constant 0 : i32
    %c0_i32_0 = arith.constant 0 : i32
    return %arg1, %c0_i32 : i32, i32
  }
  func.func @transform_3(%arg0: i32, %arg1: i32) -> (i32, i32) {
    %c0_i32 = arith.constant 0 : i32
    %c0_i32_0 = arith.constant 0 : i32
    %c0_i32_1 = arith.constant 0 : i32
    return %c0_i32, %c0_i32_0 : i32, i32
  }
  func.func @transform_4(%arg0: i32, %arg1: i32) -> (i32, i32) {
    %c0_i32 = arith.constant 0 : i32
    %c0_i32_0 = arith.constant 0 : i32
    return %arg1, %c0_i32 : i32, i32
  }
  func.func @transform_5(%arg0: i32, %arg1: i32) -> (i32, i32) {
    %c0_i32 = arith.constant 0 : i32
    %c0_i32_0 = arith.constant 0 : i32
    %c0_i32_1 = arith.constant 0 : i32
    return %c0_i32, %c0_i32_0 : i32, i32
  }
  func.func @transform_6(%arg0: i32, %arg1: i32) -> (i32, i32) {
    %c0_i32 = arith.constant 0 : i32
    %c0_i32_0 = arith.constant 0 : i32
    %c0_i32_1 = arith.constant 0 : i32
    return %c0_i32, %c0_i32_0 : i32, i32
  }
  func.func @transform_7(%arg0: i32, %arg1: i32) -> (i32, i32) {
    %c0_i32 = arith.constant 0 : i32
    %c0_i32_0 = arith.constant 0 : i32
    %c0_i32_1 = arith.constant 0 : i32
    return %c0_i32, %c0_i32_0 : i32, i32
  }
  func.func @transform_8(%arg0: i32, %arg1: i32) -> (i32, i32) {
    %c0_i32 = arith.constant 0 : i32
    %c0_i32_0 = arith.constant 0 : i32
    %c0_i32_1 = arith.constant 0 : i32
    return %c0_i32, %c0_i32_0 : i32, i32
  }
  func.func @transform_9(%arg0: i32, %arg1: i32) -> (i32, i32) {
    %c0_i32 = arith.constant 0 : i32
    %c0_i32_0 = arith.constant 0 : i32
    %c0_i32_1 = arith.constant 0 : i32
    return %c0_i32, %c0_i32_0 : i32, i32
  }
  func.func @transform_10(%arg0: i32, %arg1: i32) -> (i32, i32) {
    %c0_i32 = arith.constant 0 : i32
    %c0_i32_0 = arith.constant 0 : i32
    %c0_i32_1 = arith.constant 0 : i32
    return %c0_i32, %c0_i32_0 : i32, i32
  }
  func.func @transform_11(%arg0: i32, %arg1: i32) -> (i32, i32) {
    %c0_i32 = arith.constant 0 : i32
    %c0_i32_0 = arith.constant 0 : i32
    %c0_i32_1 = arith.constant 0 : i32
    return %c0_i32, %c0_i32_0 : i32, i32
  }
  func.func @transform_12(%arg0: i32, %arg1: i32) -> (i32, i32) {
    %c0_i32 = arith.constant 0 : i32
    %c0_i32_0 = arith.constant 0 : i32
    %c0_i32_1 = arith.constant 0 : i32
    return %c0_i32, %c0_i32_0 : i32, i32
  }
  func.func @transform_13(%arg0: i32, %arg1: i32) -> (i32, i32) {
    %c0_i32 = arith.constant 0 : i32
    %c0_i32_0 = arith.constant 0 : i32
    %c0_i32_1 = arith.constant 0 : i32
    return %c0_i32, %c0_i32_0 : i32, i32
  }
  func.func @transform_14(%arg0: i32, %arg1: i32) -> (i32, i32) {
    %c0_i32 = arith.constant 0 : i32
    %c0_i32_0 = arith.constant 0 : i32
    %c0_i32_1 = arith.constant 0 : i32
    return %c0_i32, %c0_i32_0 : i32, i32
  }
  func.func @transform_15(%arg0: i32, %arg1: i32) -> (i32, i32) {
    %c0_i32 = arith.constant 0 : i32
    %c0_i32_0 = arith.constant 0 : i32
    return %arg0, %c0_i32 : i32, i32
  }
}

module attributes {stable_mosaic.version = 11 : i64} {
  func.func @_mlp_chain_kernel(%arg0: i32, %arg1: memref<32x128xf32, #tpu.memory_space<vmem>>, %arg2: memref<32x128xf32, #tpu.memory_space<vmem>>, %arg3: memref<128x128xbf16, #tpu.memory_space<vmem>>, %arg4: memref<1x128xf32, #tpu.memory_space<vmem>>, %arg5: memref<128x128xbf16, #tpu.memory_space<vmem>>, %arg6: memref<1x128xf32, #tpu.memory_space<vmem>>, %arg7: memref<128x128xbf16, #tpu.memory_space<vmem>>, %arg8: memref<1x128xf32, #tpu.memory_space<vmem>>, %arg9: memref<1x128xf32, #tpu.memory_space<vmem>>, %arg10: memref<1x128xf32, #tpu.memory_space<vmem>>, %arg11: memref<32x128xf32, #tpu.memory_space<vmem>>) attributes {dimension_semantics = [#tpu.dimension_semantics<parallel>], iteration_bounds = array<i64: 1>, scalar_prefetch = 0 : i64, scratch_operands = 0 : i64, tpu.core_type = #tpu.core_type<tc>, window_params = [{transform_indices = @transform_0, window_bounds = array<i64: 32, 128>}, {transform_indices = @transform_1, window_bounds = array<i64: 32, 128>}, {pipeline_mode = #tpu.pipeline_mode<synchronous>, transform_indices = @transform_2, window_bounds = array<i64: 128, 128>}, {pipeline_mode = #tpu.pipeline_mode<synchronous>, transform_indices = @transform_3, window_bounds = array<i64: 1, 128>}, {pipeline_mode = #tpu.pipeline_mode<synchronous>, transform_indices = @transform_4, window_bounds = array<i64: 128, 128>}, {pipeline_mode = #tpu.pipeline_mode<synchronous>, transform_indices = @transform_5, window_bounds = array<i64: 1, 128>}, {pipeline_mode = #tpu.pipeline_mode<synchronous>, transform_indices = @transform_6, window_bounds = array<i64: 128, 128>}, {pipeline_mode = #tpu.pipeline_mode<synchronous>, transform_indices = @transform_7, window_bounds = array<i64: 1, 128>}, {pipeline_mode = #tpu.pipeline_mode<synchronous>, transform_indices = @transform_8, window_bounds = array<i64: 1, 128>}, {pipeline_mode = #tpu.pipeline_mode<synchronous>, transform_indices = @transform_9, window_bounds = array<i64: 1, 128>}, {transform_indices = @transform_10, window_bounds = array<i64: 32, 128>}]} {
    %c0 = arith.constant 0 : index
    %c0_0 = arith.constant 0 : index
    %0 = vector.load %arg1[%c0, %c0_0] : memref<32x128xf32, #tpu.memory_space<vmem>>, vector<32x128xf32>
    %c0_1 = arith.constant 0 : index
    %c0_2 = arith.constant 0 : index
    %1 = vector.load %arg3[%c0_1, %c0_2] : memref<128x128xbf16, #tpu.memory_space<vmem>>, vector<128x128xbf16>
    %c0_3 = arith.constant 0 : index
    %c0_4 = arith.constant 0 : index
    %2 = vector.load %arg4[%c0_3, %c0_4] : memref<1x128xf32, #tpu.memory_space<vmem>>, vector<1x128xf32>
    %c0_5 = arith.constant 0 : index
    %c0_6 = arith.constant 0 : index
    %3 = vector.load %arg5[%c0_5, %c0_6] : memref<128x128xbf16, #tpu.memory_space<vmem>>, vector<128x128xbf16>
    %c0_7 = arith.constant 0 : index
    %c0_8 = arith.constant 0 : index
    %4 = vector.load %arg6[%c0_7, %c0_8] : memref<1x128xf32, #tpu.memory_space<vmem>>, vector<1x128xf32>
    %c0_9 = arith.constant 0 : index
    %c0_10 = arith.constant 0 : index
    %5 = vector.load %arg7[%c0_9, %c0_10] : memref<128x128xbf16, #tpu.memory_space<vmem>>, vector<128x128xbf16>
    %c0_11 = arith.constant 0 : index
    %c0_12 = arith.constant 0 : index
    %6 = vector.load %arg8[%c0_11, %c0_12] : memref<1x128xf32, #tpu.memory_space<vmem>>, vector<1x128xf32>
    %c0_13 = arith.constant 0 : index
    %c0_14 = arith.constant 0 : index
    %7 = vector.load %arg9[%c0_13, %c0_14] : memref<1x128xf32, #tpu.memory_space<vmem>>, vector<1x128xf32>
    %c0_15 = arith.constant 0 : index
    %c0_16 = arith.constant 0 : index
    %8 = vector.load %arg10[%c0_15, %c0_16] : memref<1x128xf32, #tpu.memory_space<vmem>>, vector<1x128xf32>
    %9 = arith.truncf %0 : vector<32x128xf32> to vector<32x128xbf16>
    %cst = arith.constant dense<0.000000e+00> : vector<32x128xf32>
    %10 = tpu.matmul %9, %1, %cst {dimension_numbers = #tpu.dot_dimension_numbers<[1], [0], [0], [1], [0, 0, 1, 1], [], []>} : vector<32x128xbf16>, vector<128x128xbf16>, vector<32x128xf32> -> vector<32x128xf32>
    %11 = vector.broadcast %2 : vector<1x128xf32> to vector<32x128xf32>
    %12 = arith.addf %10, %11 : vector<32x128xf32>
    %cst_17 = arith.constant 0.000000e+00 : f32
    %13 = vector.broadcast %cst_17 : f32 to vector<32x128xf32>
    %14 = arith.maximumf %12, %13 : vector<32x128xf32>
    %15 = arith.truncf %14 : vector<32x128xf32> to vector<32x128xbf16>
    %cst_18 = arith.constant dense<0.000000e+00> : vector<32x128xf32>
    %16 = tpu.matmul %15, %3, %cst_18 {dimension_numbers = #tpu.dot_dimension_numbers<[1], [0], [0], [1], [0, 0, 1, 1], [], []>} : vector<32x128xbf16>, vector<128x128xbf16>, vector<32x128xf32> -> vector<32x128xf32>
    %17 = vector.broadcast %4 : vector<1x128xf32> to vector<32x128xf32>
    %18 = arith.addf %16, %17 : vector<32x128xf32>
    %cst_19 = arith.constant 0.000000e+00 : f32
    %19 = vector.broadcast %cst_19 : f32 to vector<32x128xf32>
    %20 = arith.maximumf %18, %19 : vector<32x128xf32>
    %21 = arith.truncf %20 : vector<32x128xf32> to vector<32x128xbf16>
    %cst_20 = arith.constant dense<0.000000e+00> : vector<32x128xf32>
    %22 = tpu.matmul %21, %5, %cst_20 {dimension_numbers = #tpu.dot_dimension_numbers<[1], [0], [0], [1], [0, 0, 1, 1], [], []>} : vector<32x128xbf16>, vector<128x128xbf16>, vector<32x128xf32> -> vector<32x128xf32>
    %23 = vector.broadcast %6 : vector<1x128xf32> to vector<32x128xf32>
    %24 = arith.addf %22, %23 : vector<32x128xf32>
    %cst_21 = arith.constant dense<0.000000e+00> : vector<32xf32>
    %25 = vector.multi_reduction <add>, %24, %cst_21 [1] : vector<32x128xf32> to vector<32xf32>
    %26 = vector.shape_cast %25 : vector<32xf32> to vector<32x1xf32>
    %cst_22 = arith.constant 1.280000e+02 : f32
    %27 = vector.broadcast %cst_22 : f32 to vector<32x1xf32>
    %28 = arith.divf %26, %27 : vector<32x1xf32>
    %29 = vector.broadcast %28 : vector<32x1xf32> to vector<32x128xf32>
    %30 = arith.subf %24, %29 : vector<32x128xf32>
    %31 = arith.mulf %30, %30 : vector<32x128xf32>
    %cst_23 = arith.constant dense<0.000000e+00> : vector<32xf32>
    %32 = vector.multi_reduction <add>, %31, %cst_23 [1] : vector<32x128xf32> to vector<32xf32>
    %33 = vector.shape_cast %32 : vector<32xf32> to vector<32x1xf32>
    %cst_24 = arith.constant 1.280000e+02 : f32
    %34 = vector.broadcast %cst_24 : f32 to vector<32x1xf32>
    %35 = arith.divf %33, %34 : vector<32x1xf32>
    %36 = vector.broadcast %28 : vector<32x1xf32> to vector<32x128xf32>
    %37 = arith.subf %24, %36 : vector<32x128xf32>
    %cst_25 = arith.constant 9.99999974E-6 : f32
    %38 = vector.broadcast %cst_25 : f32 to vector<32x1xf32>
    %39 = arith.addf %35, %38 : vector<32x1xf32>
    %40 = math.rsqrt %39 : vector<32x1xf32>
    %41 = vector.broadcast %40 : vector<32x1xf32> to vector<32x128xf32>
    %42 = arith.mulf %37, %41 : vector<32x128xf32>
    %43 = vector.broadcast %7 : vector<1x128xf32> to vector<32x128xf32>
    %44 = arith.mulf %42, %43 : vector<32x128xf32>
    %45 = vector.broadcast %8 : vector<1x128xf32> to vector<32x128xf32>
    %46 = arith.addf %44, %45 : vector<32x128xf32>
    %c0_26 = arith.constant 0 : index
    %c0_27 = arith.constant 0 : index
    %47 = vector.load %arg2[%c0_26, %c0_27] : memref<32x128xf32, #tpu.memory_space<vmem>>, vector<32x128xf32>
    %48 = arith.addf %46, %47 : vector<32x128xf32>
    %c0_28 = arith.constant 0 : index
    %c0_29 = arith.constant 0 : index
    %49 = vector.load %arg11[%c0_28, %c0_29] : memref<32x128xf32, #tpu.memory_space<vmem>>, vector<32x128xf32>
    tpu.vector_store %arg11[%c0_28, %c0_29], %48 {strides = array<i32>} : memref<32x128xf32, #tpu.memory_space<vmem>>, vector<32x128xf32>,
    return
  }
  func.func @transform_0(%arg0: i32) -> (i32, i32) {
    %c0_i32 = arith.constant 0 : i32
    %c0_i32_0 = arith.constant 0 : i32
    return %arg0, %c0_i32 : i32, i32
  }
  func.func @transform_1(%arg0: i32) -> (i32, i32) {
    %c0_i32 = arith.constant 0 : i32
    %c0_i32_0 = arith.constant 0 : i32
    return %arg0, %c0_i32 : i32, i32
  }
  func.func @transform_2(%arg0: i32) -> (i32, i32) {
    %c0_i32 = arith.constant 0 : i32
    %c0_i32_0 = arith.constant 0 : i32
    %c0_i32_1 = arith.constant 0 : i32
    return %c0_i32, %c0_i32_0 : i32, i32
  }
  func.func @transform_3(%arg0: i32) -> (i32, i32) {
    %c0_i32 = arith.constant 0 : i32
    %c0_i32_0 = arith.constant 0 : i32
    %c0_i32_1 = arith.constant 0 : i32
    return %c0_i32, %c0_i32_0 : i32, i32
  }
  func.func @transform_4(%arg0: i32) -> (i32, i32) {
    %c0_i32 = arith.constant 0 : i32
    %c0_i32_0 = arith.constant 0 : i32
    %c0_i32_1 = arith.constant 0 : i32
    return %c0_i32, %c0_i32_0 : i32, i32
  }
  func.func @transform_5(%arg0: i32) -> (i32, i32) {
    %c0_i32 = arith.constant 0 : i32
    %c0_i32_0 = arith.constant 0 : i32
    %c0_i32_1 = arith.constant 0 : i32
    return %c0_i32, %c0_i32_0 : i32, i32
  }
  func.func @transform_6(%arg0: i32) -> (i32, i32) {
    %c0_i32 = arith.constant 0 : i32
    %c0_i32_0 = arith.constant 0 : i32
    %c0_i32_1 = arith.constant 0 : i32
    return %c0_i32, %c0_i32_0 : i32, i32
  }
  func.func @transform_7(%arg0: i32) -> (i32, i32) {
    %c0_i32 = arith.constant 0 : i32
    %c0_i32_0 = arith.constant 0 : i32
    %c0_i32_1 = arith.constant 0 : i32
    return %c0_i32, %c0_i32_0 : i32, i32
  }
  func.func @transform_8(%arg0: i32) -> (i32, i32) {
    %c0_i32 = arith.constant 0 : i32
    %c0_i32_0 = arith.constant 0 : i32
    %c0_i32_1 = arith.constant 0 : i32
    return %c0_i32, %c0_i32_0 : i32, i32
  }
  func.func @transform_9(%arg0: i32) -> (i32, i32) {
    %c0_i32 = arith.constant 0 : i32
    %c0_i32_0 = arith.constant 0 : i32
    %c0_i32_1 = arith.constant 0 : i32
    return %c0_i32, %c0_i32_0 : i32, i32
  }
  func.func @transform_10(%arg0: i32) -> (i32, i32) {
    %c0_i32 = arith.constant 0 : i32
    %c0_i32_0 = arith.constant 0 : i32
    return %arg0, %c0_i32 : i32, i32
  }
}

module attributes {stable_mosaic.version = 11 : i64} {
  func.func @_mlp_chain_kernel(%arg0: i32, %arg1: memref<16x128xf32, #tpu.memory_space<vmem>>, %arg2: memref<128x128xbf16, #tpu.memory_space<vmem>>, %arg3: memref<1x128xf32, #tpu.memory_space<vmem>>, %arg4: memref<128x128xbf16, #tpu.memory_space<vmem>>, %arg5: memref<1x128xf32, #tpu.memory_space<vmem>>, %arg6: memref<128x3xbf16, #tpu.memory_space<vmem>>, %arg7: memref<1x3xf32, #tpu.memory_space<vmem>>, %arg8: memref<16x3xf32, #tpu.memory_space<vmem>>) attributes {dimension_semantics = [#tpu.dimension_semantics<parallel>], iteration_bounds = array<i64: 1>, scalar_prefetch = 0 : i64, scratch_operands = 0 : i64, tpu.core_type = #tpu.core_type<tc>, window_params = [{transform_indices = @transform_0, window_bounds = array<i64: 16, 128>}, {pipeline_mode = #tpu.pipeline_mode<synchronous>, transform_indices = @transform_1, window_bounds = array<i64: 128, 128>}, {pipeline_mode = #tpu.pipeline_mode<synchronous>, transform_indices = @transform_2, window_bounds = array<i64: 1, 128>}, {pipeline_mode = #tpu.pipeline_mode<synchronous>, transform_indices = @transform_3, window_bounds = array<i64: 128, 128>}, {pipeline_mode = #tpu.pipeline_mode<synchronous>, transform_indices = @transform_4, window_bounds = array<i64: 1, 128>}, {pipeline_mode = #tpu.pipeline_mode<synchronous>, transform_indices = @transform_5, window_bounds = array<i64: 128, 3>}, {pipeline_mode = #tpu.pipeline_mode<synchronous>, transform_indices = @transform_6, window_bounds = array<i64: 1, 3>}, {transform_indices = @transform_7, window_bounds = array<i64: 16, 3>}]} {
    %c0 = arith.constant 0 : index
    %c0_0 = arith.constant 0 : index
    %0 = vector.load %arg1[%c0, %c0_0] : memref<16x128xf32, #tpu.memory_space<vmem>>, vector<16x128xf32>
    %c0_1 = arith.constant 0 : index
    %c0_2 = arith.constant 0 : index
    %1 = vector.load %arg2[%c0_1, %c0_2] : memref<128x128xbf16, #tpu.memory_space<vmem>>, vector<128x128xbf16>
    %c0_3 = arith.constant 0 : index
    %c0_4 = arith.constant 0 : index
    %2 = vector.load %arg3[%c0_3, %c0_4] : memref<1x128xf32, #tpu.memory_space<vmem>>, vector<1x128xf32>
    %c0_5 = arith.constant 0 : index
    %c0_6 = arith.constant 0 : index
    %3 = vector.load %arg4[%c0_5, %c0_6] : memref<128x128xbf16, #tpu.memory_space<vmem>>, vector<128x128xbf16>
    %c0_7 = arith.constant 0 : index
    %c0_8 = arith.constant 0 : index
    %4 = vector.load %arg5[%c0_7, %c0_8] : memref<1x128xf32, #tpu.memory_space<vmem>>, vector<1x128xf32>
    %c0_9 = arith.constant 0 : index
    %c0_10 = arith.constant 0 : index
    %5 = vector.load %arg6[%c0_9, %c0_10] : memref<128x3xbf16, #tpu.memory_space<vmem>>, vector<128x3xbf16>
    %c0_11 = arith.constant 0 : index
    %c0_12 = arith.constant 0 : index
    %6 = vector.load %arg7[%c0_11, %c0_12] : memref<1x3xf32, #tpu.memory_space<vmem>>, vector<1x3xf32>
    %7 = arith.truncf %0 : vector<16x128xf32> to vector<16x128xbf16>
    %cst = arith.constant dense<0.000000e+00> : vector<16x128xf32>
    %8 = tpu.matmul %7, %1, %cst {dimension_numbers = #tpu.dot_dimension_numbers<[1], [0], [0], [1], [0, 0, 1, 1], [], []>} : vector<16x128xbf16>, vector<128x128xbf16>, vector<16x128xf32> -> vector<16x128xf32>
    %9 = vector.broadcast %2 : vector<1x128xf32> to vector<16x128xf32>
    %10 = arith.addf %8, %9 : vector<16x128xf32>
    %cst_13 = arith.constant 0.000000e+00 : f32
    %11 = vector.broadcast %cst_13 : f32 to vector<16x128xf32>
    %12 = arith.maximumf %10, %11 : vector<16x128xf32>
    %13 = arith.truncf %12 : vector<16x128xf32> to vector<16x128xbf16>
    %cst_14 = arith.constant dense<0.000000e+00> : vector<16x128xf32>
    %14 = tpu.matmul %13, %3, %cst_14 {dimension_numbers = #tpu.dot_dimension_numbers<[1], [0], [0], [1], [0, 0, 1, 1], [], []>} : vector<16x128xbf16>, vector<128x128xbf16>, vector<16x128xf32> -> vector<16x128xf32>
    %15 = vector.broadcast %4 : vector<1x128xf32> to vector<16x128xf32>
    %16 = arith.addf %14, %15 : vector<16x128xf32>
    %cst_15 = arith.constant 0.000000e+00 : f32
    %17 = vector.broadcast %cst_15 : f32 to vector<16x128xf32>
    %18 = arith.maximumf %16, %17 : vector<16x128xf32>
    %19 = arith.truncf %18 : vector<16x128xf32> to vector<16x128xbf16>
    %cst_16 = arith.constant dense<0.000000e+00> : vector<16x3xf32>
    %20 = tpu.matmul %19, %5, %cst_16 {dimension_numbers = #tpu.dot_dimension_numbers<[1], [0], [0], [1], [0, 0, 1, 1], [], []>} : vector<16x128xbf16>, vector<128x3xbf16>, vector<16x3xf32> -> vector<16x3xf32>
    %21 = vector.broadcast %6 : vector<1x3xf32> to vector<16x3xf32>
    %22 = arith.addf %20, %21 : vector<16x3xf32>
    %c0_17 = arith.constant 0 : index
    %c0_18 = arith.constant 0 : index
    %23 = vector.load %arg8[%c0_17, %c0_18] : memref<16x3xf32, #tpu.memory_space<vmem>>, vector<16x3xf32>
    tpu.vector_store %arg8[%c0_17, %c0_18], %22 {strides = array<i32>} : memref<16x3xf32, #tpu.memory_space<vmem>>, vector<16x3xf32>,
    return
  }
  func.func @transform_0(%arg0: i32) -> (i32, i32) {
    %c0_i32 = arith.constant 0 : i32
    %c0_i32_0 = arith.constant 0 : i32
    return %arg0, %c0_i32 : i32, i32
  }
  func.func @transform_1(%arg0: i32) -> (i32, i32) {
    %c0_i32 = arith.constant 0 : i32
    %c0_i32_0 = arith.constant 0 : i32
    %c0_i32_1 = arith.constant 0 : i32
    return %c0_i32, %c0_i32_0 : i32, i32
  }
  func.func @transform_2(%arg0: i32) -> (i32, i32) {
    %c0_i32 = arith.constant 0 : i32
    %c0_i32_0 = arith.constant 0 : i32
    %c0_i32_1 = arith.constant 0 : i32
    return %c0_i32, %c0_i32_0 : i32, i32
  }
  func.func @transform_3(%arg0: i32) -> (i32, i32) {
    %c0_i32 = arith.constant 0 : i32
    %c0_i32_0 = arith.constant 0 : i32
    %c0_i32_1 = arith.constant 0 : i32
    return %c0_i32, %c0_i32_0 : i32, i32
  }
  func.func @transform_4(%arg0: i32) -> (i32, i32) {
    %c0_i32 = arith.constant 0 : i32
    %c0_i32_0 = arith.constant 0 : i32
    %c0_i32_1 = arith.constant 0 : i32
    return %c0_i32, %c0_i32_0 : i32, i32
  }
  func.func @transform_5(%arg0: i32) -> (i32, i32) {
    %c0_i32 = arith.constant 0 : i32
    %c0_i32_0 = arith.constant 0 : i32
    %c0_i32_1 = arith.constant 0 : i32
    return %c0_i32, %c0_i32_0 : i32, i32
  }
  func.func @transform_6(%arg0: i32) -> (i32, i32) {
    %c0_i32 = arith.constant 0 : i32
    %c0_i32_0 = arith.constant 0 : i32
    %c0_i32_1 = arith.constant 0 : i32
    return %c0_i32, %c0_i32_0 : i32, i32
  }
  func.func @transform_7(%arg0: i32) -> (i32, i32) {
    %c0_i32 = arith.constant 0 : i32
    %c0_i32_0 = arith.constant 0 : i32
    return %arg0, %c0_i32 : i32, i32
  }
}

</mosaic_0001>

<llo_original>
// kernel: encoder_processor_decoder.8
$region0: #{encoder_processor_decoder.8}
  #allocation0 [shape = 'u32[]', space=smem, size = 0x4, offset = 0x4, fixed_abs, tag = 'smem constant byte address 0x4 - core index']
  #allocation1 [shape = 'u32[144,128]{1,0:T(1,128)}', space=vmem, size = 0x12000, scoped, tag = 'internal scratch']
  %s0 = inlined_call_operand.hbm [shape: f32[16,8], index: 0, kind: input, shape index: {}]
  %s1 = inlined_call_operand.hbm [shape: bf16[8,128], index: 1, kind: input, shape index: {}]
  %s2 = inlined_call_operand.hbm [shape: f32[1,128], index: 2, kind: input, shape index: {}]
  %s3 = inlined_call_operand.hbm [shape: bf16[128,128], index: 3, kind: input, shape index: {}]
  %s4 = inlined_call_operand.hbm [shape: f32[1,128], index: 4, kind: input, shape index: {}]
  %s5 = inlined_call_operand.hbm [shape: bf16[128,128], index: 5, kind: input, shape index: {}]
  %s6 = inlined_call_operand.hbm [shape: f32[1,128], index: 6, kind: input, shape index: {}]
  %s7 = inlined_call_operand.hbm [shape: f32[1,128], index: 7, kind: input, shape index: {}]
  %s8 = inlined_call_operand.hbm [shape: f32[1,128], index: 8, kind: input, shape index: {}]
  %s9 = inlined_call_operand.hbm [shape: f32[16,128], index: 9, kind: output, shape index: {}]
  %s10 = sld [smem:[#allocation0]]
  $region82: #{encoder_processor_decoder.8} parent=0
    _
  %s12 = ssub.s32 1, %s10
  %s13 = scalar_select 0, %s12, %s10
  $region1: #{encoder_processor_decoder.8} parent=0
    #allocation2 [shape = 'u8[8192]{0}', space=vmem, size = 0x2000, scoped, tag = 'input window, operand 0, single buffered']
    #allocation3 [shape = 's32[1]{0}', space=sflag, size = 0x4, scoped, tag = 'scoped memory for encoder_processor_decoder.8']
    #allocation4 [shape = 's32[1]{0}', space=sflag, size = 0x4, scoped, tag = 'scoped memory for encoder_processor_decoder.8']
    #allocation5 [shape = 'u8[2048]{0}', space=vmem, size = 0x800, scoped, tag = 'input window, operand 1, single buffered']
    #allocation6 [shape = 's32[1]{0}', space=sflag, size = 0x4, scoped, tag = 'scoped memory for encoder_processor_decoder.8']
    #allocation7 [shape = 'u8[512]{0}', space=vmem, size = 0x400, scoped, tag = 'input window, operand 2, single buffered']
    #allocation8 [shape = 'u8[32768]{0}', space=vmem, size = 0x8000, scoped, tag = 'input window, operand 3, single buffered']
    #allocation9 [shape = 's32[1]{0}', space=sflag, size = 0x4, scoped, tag = 'scoped memory for encoder_processor_decoder.8']
    #allocation10 [shape = 'u8[512]{0}', space=vmem, size = 0x400, scoped, tag = 'input window, operand 4, single buffered']
    #allocation11 [shape = 'u8[32768]{0}', space=vmem, size = 0x8000, scoped, tag = 'input window, operand 5, single buffered']
    #allocation12 [shape = 's32[1]{0}', space=sflag, size = 0x4, scoped, tag = 'scoped memory for encoder_processor_decoder.8']
    #allocation13 [shape = 'u8[512]{0}', space=vmem, size = 0x400, scoped, tag = 'input window, operand 6, single buffered']
    #allocation14 [shape = 'u8[512]{0}', space=vmem, size = 0x400, scoped, tag = 'input window, operand 7, single buffered']
    #allocation15 [shape = 's32[1]{0}', space=sflag, size = 0x4, scoped, tag = 'scoped memory for encoder_processor_decoder.8']
    #allocation16 [shape = 'u8[512]{0}', space=vmem, size = 0x400, scoped, tag = 'input window, operand 8, single buffered']
    #allocation17 [shape = 'u8[8192]{0}', space=vmem, size = 0x2000, scoped, tag = 'output window, operand 0, single buffered']
    %14 = vsyncpa [#allocation3], 0
    %15 = vsyncpa [#allocation6], 0
    %16 = vsyncpa [#allocation9], 0
    %17 = vsyncpa [#allocation12], 0
    %18 = vsyncpa [#allocation15], 0
    %19 = vsyncpa [#allocation4], 0
    // Predicated region
    $region2: #{encoder_processor_decoder.8} parent=1 // pred_check
      _
    $region3: #{encoder_processor_decoder.8} parent=1 // pred_check_branch
      %21 = sbr.rel (0) target = $region5
    $region4: #{encoder_processor_decoder.8} parent=1 // pred_region
      %s23 = ssub.s32 256, 256
      %24 = vsyncadd [#allocation3], %s23
      %s25 = sshll.u32 [#allocation2], 4
      %s26 = int_to_ptr.vmem [resolvable:$true] %s25
      %31 = dma.hbm_to_vmem [thread:$0]  %s0, 256, %s26, [#allocation3], 128, 128, 8
    $region5: #{encoder_processor_decoder.8} parent=1 // pred_fallthru
      _
    // Predicated region
    $region6: #{encoder_processor_decoder.8} parent=1 // pred_check
      _
    $region7: #{encoder_processor_decoder.8} parent=1 // pred_check_branch
      %33 = sbr.rel (0) target = $region9
    $region8: #{encoder_processor_decoder.8} parent=1 // pred_region
      %s35 = ssub.s32 64, 64
      %36 = vsyncadd [#allocation6], %s35
      %s38 = sshll.u32 [#allocation5], 4
      %s39 = int_to_ptr.vmem [resolvable:$true] %s38
      %41 = dma.hbm_to_vmem [thread:$0]  %s1, 64, %s39, [#allocation6]
    $region9: #{encoder_processor_decoder.8} parent=1 // pred_fallthru
      _
    // Predicated region
    $region10: #{encoder_processor_decoder.8} parent=1 // pred_check
      _
    $region11: #{encoder_processor_decoder.8} parent=1 // pred_check_branch
      %43 = sbr.rel (0) target = $region13
    $region12: #{encoder_processor_decoder.8} parent=1 // pred_region
      %s45 = ssub.s32 16, 16
      %46 = vsyncadd [#allocation6], %s45
      %s48 = sshll.u32 [#allocation7], 4
      %s49 = int_to_ptr.vmem [resolvable:$true] %s48
      %51 = dma.hbm_to_vmem [thread:$0]  %s2, 16, %s49, [#allocation6]
    $region13: #{encoder_processor_decoder.8} parent=1 // pred_fallthru
      _
    // Predicated region
    $region14: #{encoder_processor_decoder.8} parent=1 // pred_check
      _
    $region15: #{encoder_processor_decoder.8} parent=1 // pred_check_branch
      %53 = sbr.rel (0) target = $region17
    $region16: #{encoder_processor_decoder.8} parent=1 // pred_region
      %s55 = ssub.s32 1024, 1024
      %56 = vsyncadd [#allocation9], %s55
      %s57 = sshll.u32 [#allocation8], 4
      %s58 = int_to_ptr.vmem [resolvable:$true] %s57
      %63 = dma.hbm_to_vmem [thread:$0]  %s3, 1024, %s58, [#allocation9], 64, 64, 4
    $region17: #{encoder_processor_decoder.8} parent=1 // pred_fallthru
      _
    // Predicated region
    $region18: #{encoder_processor_decoder.8} parent=1 // pred_check
      _
    $region19: #{encoder_processor_decoder.8} parent=1 // pred_check_branch
      %65 = sbr.rel (0) target = $region21
    $region20: #{encoder_processor_decoder.8} parent=1 // pred_region
      %s67 = ssub.s32 16, 16
      %68 = vsyncadd [#allocation9], %s67
      %s70 = sshll.u32 [#allocation10], 4
      %s71 = int_to_ptr.vmem [resolvable:$true] %s70
      %73 = dma.hbm_to_vmem [thread:$0]  %s4, 16, %s71, [#allocation9]
    $region21: #{encoder_processor_decoder.8} parent=1 // pred_fallthru
      _
    // Predicated region
    $region22: #{encoder_processor_decoder.8} parent=1 // pred_check
      _
    $region23: #{encoder_processor_decoder.8} parent=1 // pred_check_branch
      %75 = sbr.rel (0) target = $region25
    $region24: #{encoder_processor_decoder.8} parent=1 // pred_region
      %s77 = ssub.s32 1024, 1024
      %78 = vsyncadd [#allocation12], %s77
      %s79 = sshll.u32 [#allocation11], 4
      %s80 = int_to_ptr.vmem [resolvable:$true] %s79
      %85 = dma.hbm_to_vmem [thread:$0]  %s5, 1024, %s80, [#allocation12], 64, 64, 4
    $region25: #{encoder_processor_decoder.8} parent=1 // pred_fallthru
      _
    // Predicated region
    $region26: #{encoder_processor_decoder.8} parent=1 // pred_check
      _
    $region27: #{encoder_processor_decoder.8} parent=1 // pred_check_branch
      %87 = sbr.rel (0) target = $region29
    $region28: #{encoder_processor_decoder.8} parent=1 // pred_region
      %s89 = ssub.s32 16, 16
      %90 = vsyncadd [#allocation12], %s89
      %s92 = sshll.u32 [#allocation13], 4
      %s93 = int_to_ptr.vmem [resolvable:$true] %s92
      %95 = dma.hbm_to_vmem [thread:$0]  %s6, 16, %s93, [#allocation12]
    $region29: #{encoder_processor_decoder.8} parent=1 // pred_fallthru
      _
    // Predicated region
    $region30: #{encoder_processor_decoder.8} parent=1 // pred_check
      _
    $region31: #{encoder_processor_decoder.8} parent=1 // pred_check_branch
      %97 = sbr.rel (0) target = $region33
    $region32: #{encoder_processor_decoder.8} parent=1 // pred_region
      %s99 = ssub.s32 16, 16
      %100 = vsyncadd [#allocation15], %s99
      %s102 = sshll.u32 [#allocation14], 4
      %s103 = int_to_ptr.vmem [resolvable:$true] %s102
      %105 = dma.hbm_to_vmem [thread:$0]  %s7, 16, %s103, [#allocation15]
    $region33: #{encoder_processor_decoder.8} parent=1 // pred_fallthru
      _
    // Predicated region
    $region34: #{encoder_processor_decoder.8} parent=1 // pred_check
      _
    $region35: #{encoder_processor_decoder.8} parent=1 // pred_check_branch
      %107 = sbr.rel (0) target = $region37
    $region36: #{encoder_processor_decoder.8} parent=1 // pred_region
      %s109 = ssub.s32 16, 16
      %110 = vsyncadd [#allocation15], %s109
      %s112 = sshll.u32 [#allocation16], 4
      %s113 = int_to_ptr.vmem [resolvable:$true] %s112
      %115 = dma.hbm_to_vmem [thread:$0]  %s8, 16, %s113, [#allocation15]
    $region37: #{encoder_processor_decoder.8} parent=1 // pred_fallthru
      _
    // Predicated region
    $region38: #{encoder_processor_decoder.8} parent=1 // pred_check
      _
    $region39: #{encoder_processor_decoder.8} parent=1 // pred_check_branch
      %117 = sbr.rel (0) target = $region41
    $region40: #{encoder_processor_decoder.8} parent=1 // pred_region
      %118 = dma.done [#allocation3], 256
    $region41: #{encoder_processor_decoder.8} parent=1 // pred_fallthru
      _
    // Predicated region
    $region42: #{encoder_processor_decoder.8} parent=1 // pred_check
      _
    $region43: #{encoder_processor_decoder.8} parent=1 // pred_check_branch
      %120 = sbr.rel (0) target = $region45
    $region44: #{encoder_processor_decoder.8} parent=1 // pred_region
      %121 = dma.done [#allocation6], 64
    $region45: #{encoder_processor_decoder.8} parent=1 // pred_fallthru
      _
    // Predicated region
    $region46: #{encoder_processor_decoder.8} parent=1 // pred_check
      _
    $region47: #{encoder_processor_decoder.8} parent=1 // pred_check_branch
      %123 = sbr.rel (0) target = $region49
    $region48: #{encoder_processor_decoder.8} parent=1 // pred_region
      %124 = dma.done [#allocation6], 16
    $region49: #{encoder_processor_decoder.8} parent=1 // pred_fallthru
      _
    // Predicated region
    $region50: #{encoder_processor_decoder.8} parent=1 // pred_check
      _
    $region51: #{encoder_processor_decoder.8} parent=1 // pred_check_branch
      %126 = sbr.rel (0) target = $region53
    $region52: #{encoder_processor_decoder.8} parent=1 // pred_region
      %127 = dma.done [#allocation9], 1024
    $region53: #{encoder_processor_decoder.8} parent=1 // pred_fallthru
      _
    // Predicated region
    $region54: #{encoder_processor_decoder.8} parent=1 // pred_check
      _
    $region55: #{encoder_processor_decoder.8} parent=1 // pred_check_branch
      %129 = sbr.rel (0) target = $region57
    $region56: #{encoder_processor_decoder.8} parent=1 // pred_region
      %130 = dma.done [#allocation9], 16
    $region57: #{encoder_processor_decoder.8} parent=1 // pred_fallthru
      _
    // Predicated region
    $region58: #{encoder_processor_decoder.8} parent=1 // pred_check
      _
    $region59: #{encoder_processor_decoder.8} parent=1 // pred_check_branch
      %132 = sbr.rel (0) target = $region61
    $region60: #{encoder_processor_decoder.8} parent=1 // pred_region
      %133 = dma.done [#allocation12], 1024
    $region61: #{encoder_processor_decoder.8} parent=1 // pred_fallthru
      _
    // Predicated region
    $region62: #{encoder_processor_decoder.8} parent=1 // pred_check
      _
    $region63: #{encoder_processor_decoder.8} parent=1 // pred_check_branch
      %135 = sbr.rel (0) target = $region65
    $region64: #{encoder_processor_decoder.8} parent=1 // pred_region
      %136 = dma.done [#allocation12], 16
    $region65: #{encoder_processor_decoder.8} parent=1 // pred_fallthru
      _
    // Predicated region
    $region66: #{encoder_processor_decoder.8} parent=1 // pred_check
      _
    $region67: #{encoder_processor_decoder.8} parent=1 // pred_check_branch
      %138 = sbr.rel (0) target = $region69
    $region68: #{encoder_processor_decoder.8} parent=1 // pred_region
      %139 = dma.done [#allocation15], 16
    $region69: #{encoder_processor_decoder.8} parent=1 // pred_fallthru
      _
    // Predicated region
    $region70: #{encoder_processor_decoder.8} parent=1 // pred_check
      _
    $region71: #{encoder_processor_decoder.8} parent=1 // pred_check_branch
      %141 = sbr.rel (0) target = $region73
    $region72: #{encoder_processor_decoder.8} parent=1 // pred_region
      %142 = dma.done [#allocation15], 16
    $region73: #{encoder_processor_decoder.8} parent=1 // pred_fallthru
      _
    %v144 = vld [vmem:[#allocation2] sm:$0xff]
    %v145 = vld [vmem:[#allocation2 + $0x8] sm:$0xff]
    %v146 = vld [vmem:[#allocation5] sm:$0xf]
    %v147 = vld [vmem:[#allocation7] sm:$0x1]
    %v148 = vld [vmem:[#allocation8] sm:$0xf]
    %v149 = vld [vmem:[#allocation8 + $0x4] sm:$0xf]
    %v150 = vld [vmem:[#allocation8 + $0x8] sm:$0xf]
    %v151 = vld [vmem:[#allocation8 + $0xc] sm:$0xf]
    %v152 = vld [vmem:[#allocation8 + $0x10] sm:$0xf]
    %v153 = vld [vmem:[#allocation8 + $0x14] sm:$0xf]
    %v154 = vld [vmem:[#allocation8 + $0x18] sm:$0xf]
    %v155 = vld [vmem:[#allocation8 + $0x1c] sm:$0xf]
    %v156 = vld [vmem:[#allocation8 + $0x20] sm:$0xf]
    %v157 = vld [vmem:[#allocation8 + $0x24] sm:$0xf]
    %v158 = vld [vmem:[#allocation8 + $0x28] sm:$0xf]
    %v159 = vld [vmem:[#allocation8 + $0x2c] sm:$0xf]
    %v160 = vld [vmem:[#allocation8 + $0x30] sm:$0xf]
    %v161 = vld [vmem:[#allocation8 + $0x34] sm:$0xf]
    %v162 = vld [vmem:[#allocation8 + $0x38] sm:$0xf]
    %v163 = vld [vmem:[#allocation8 + $0x3c] sm:$0xf]
    %v164 = vld [vmem:[#allocation10] sm:$0x1]
    %v165 = vld [vmem:[#allocation11] sm:$0xf]
    %v166 = vld [vmem:[#allocation11 + $0x4] sm:$0xf]
    %v167 = vld [vmem:[#allocation11 + $0x8] sm:$0xf]
    %v168 = vld [vmem:[#allocation11 + $0xc] sm:$0xf]
    %v169 = vld [vmem:[#allocation11 + $0x10] sm:$0xf]
    %v170 = vld [vmem:[#allocation11 + $0x14] sm:$0xf]
    %v171 = vld [vmem:[#allocation11 + $0x18] sm:$0xf]
    %v172 = vld [vmem:[#allocation11 + $0x1c] sm:$0xf]
    %v173 = vld [vmem:[#allocation11 + $0x20] sm:$0xf]
    %v174 = vld [vmem:[#allocation11 + $0x24] sm:$0xf]
    %v175 = vld [vmem:[#allocation11 + $0x28] sm:$0xf]
    %v176 = vld [vmem:[#allocation11 + $0x2c] sm:$0xf]
    %v177 = vld [vmem:[#allocation11 + $0x30] sm:$0xf]
    %v178 = vld [vmem:[#allocation11 + $0x34] sm:$0xf]
    %v179 = vld [vmem:[#allocation11 + $0x38] sm:$0xf]
    %v180 = vld [vmem:[#allocation11 + $0x3c] sm:$0xf]
    %v181 = vld [vmem:[#allocation13] sm:$0x1]
    %v182 = vld [vmem:[#allocation14] sm:$0x1]
    %v183 = vld [vmem:[#allocation16] sm:$0x1]
    %v184 = vpack.c.bf16 %v145, %v144
    %v186 = vlaneseq
    %v187 = vshrl.u32 %v186, 7
    %v188 = vsub.s32 0, %v187
    %v189 = vrot.slane %v147, %v188
    %vm191 = vcmask 64512
    %v193 = vsel %vm191, %v184, 0
    %vm195 = vcmask 1043456
    %v197 = vsel %vm195, %v146, 0
    %199 = vmatprep.subr.bf16.mxu0 0
    %200 = vmatpush1.bf16.msra.mxu0 %v197
    %201 = vmatprep.subr.bf16.mxu0 0
    %202 = vmatpush1.bf16.msra.mxu0 0
    %203 = vmatprep.subr.bf16.mxu0 0
    %204 = vmatpush1.bf16.msra.mxu0 0
    %205 = vmatprep.subr.bf16.mxu0 0
    %206 = vmatpush1.bf16.msra.mxu0 0
    %207 = vmatprep.subr.bf16.mxu0 0
    %208 = vmatpush1.bf16.msra.mxu0 0
    %209 = vmatprep.subr.bf16.mxu0 0
    %210 = vmatpush1.bf16.msra.mxu0 0
    %211 = vmatprep.subr.bf16.mxu0 0
    %212 = vmatpush1.bf16.msra.mxu0 0
    %213 = vmatprep.subr.bf16.mxu0 0
    %214 = vmatpush1.bf16.msra.mxu0 0
    %215 = vmatprep.subr.bf16.mxu0 0
    %216 = vmatpush1.bf16.msra.mxu0 0
    %217 = vmatprep.subr.bf16.mxu0 0
    %218 = vmatpush1.bf16.msra.mxu0 0
    %219 = vmatprep.subr.bf16.mxu0 0
    %220 = vmatpush1.bf16.msra.mxu0 0
    %221 = vmatprep.subr.bf16.mxu0 0
    %222 = vmatpush1.bf16.msra.mxu0 0
    %223 = vmatprep.subr.bf16.mxu0 0
    %224 = vmatpush1.bf16.msra.mxu0 0
    %225 = vmatprep.subr.bf16.mxu0 0
    %226 = vmatpush1.bf16.msra.mxu0 0
    %227 = vmatprep.subr.bf16.mxu0 0
    %228 = vmatpush1.bf16.msra.mxu0 0
    %229 = vmatprep.subr.bf16.mxu0 0
    %230 = vmatpush1.bf16.msra.mxu0 0
    %231 = vmatprep.mubr.bf16.mxu0 0
    %232 = vmatmul.mubr.bf16.gmra.mrb[0].mxu0 %v193
    %v233 = vpop.f32.mrb[0].mxu0
    %v234 = vadd.f32 %v189, %v233
    %v235 = vpop.f32.mrb[0].mxu0
    %v236 = vpop.f32.mrb[0].mxu0
    %v237 = vadd.f32 %v189, %v236
    %v238 = vpop.f32.mrb[0].mxu0
    %239 = vdwg.mxu0
    %v240 = vmax.f32 %v234, 0.0
    %v241 = vmax.f32 %v237, 0.0
    %v242 = vpack.c.bf16 %v241, %v240
    %v244 = vlaneseq
    %v245 = vshrl.u32 %v244, 7
    %v246 = vsub.s32 0, %v245
    %v247 = vrot.slane %v164, %v246
    %v265 = vunpack.c.l.b16 %v148
    %v266 = vunpack.c.l.b16 %v149
    %v267 = vunpack.c.l.b16 %v150
    %v268 = vunpack.c.l.b16 %v151
    %v269 = vunpack.c.l.b16 %v152
    %v270 = vunpack.c.l.b16 %v153
    %v271 = vunpack.c.l.b16 %v154
    %v272 = vunpack.c.l.b16 %v155
    %v273 = vunpack.c.l.b16 %v156
    %v274 = vunpack.c.l.b16 %v157
    %v275 = vunpack.c.l.b16 %v158
    %v276 = vunpack.c.l.b16 %v159
    %v277 = vunpack.c.l.b16 %v160
    %v278 = vunpack.c.l.b16 %v161
    %v279 = vunpack.c.l.b16 %v162
    %v280 = vunpack.c.l.b16 %v163
    %v281 = vpack.c.b16 %v266, %v265
    %v282 = vpack.c.b16 %v268, %v267
    %v283 = vpack.c.b16 %v270, %v269
    %v284 = vpack.c.b16 %v272, %v271
    %v285 = vpack.c.b16 %v274, %v273
    %v286 = vpack.c.b16 %v276, %v275
    %v287 = vpack.c.b16 %v278, %v277
    %v288 = vpack.c.b16 %v280, %v279
    %297 = vmatprep.subr.bf16.mxu0 0
    %298 = vmatpush1.bf16.msra.mxu0 %v281
    %299 = vmatprep.subr.bf16.mxu0 0
    %300 = vmatpush1.bf16.msra.mxu0 %v282
    %301 = vmatprep.subr.bf16.mxu0 0
    %302 = vmatpush1.bf16.msra.mxu0 %v283
    %303 = vmatprep.subr.bf16.mxu0 0
    %304 = vmatpush1.bf16.msra.mxu0 %v284
    %305 = vmatprep.subr.bf16.mxu0 0
    %306 = vmatpush1.bf16.msra.mxu0 %v285
    %307 = vmatprep.subr.bf16.mxu0 0
    %308 = vmatpush1.bf16.msra.mxu0 %v286
    %309 = vmatprep.subr.bf16.mxu0 0
    %310 = vmatpush1.bf16.msra.mxu0 %v287
    %311 = vmatprep.subr.bf16.mxu0 0
    %312 = vmatpush1.bf16.msra.mxu0 %v288
    %313 = vmatprep.subr.bf16.mxu0 0
    %314 = vmatpush1.bf16.msra.mxu0 0
    %315 = vmatprep.subr.bf16.mxu0 0
    %316 = vmatpush1.bf16.msra.mxu0 0
    %317 = vmatprep.subr.bf16.mxu0 0
    %318 = vmatpush1.bf16.msra.mxu0 0
    %319 = vmatprep.subr.bf16.mxu0 0
    %320 = vmatpush1.bf16.msra.mxu0 0
    %321 = vmatprep.subr.bf16.mxu0 0
    %322 = vmatpush1.bf16.msra.mxu0 0
    %323 = vmatprep.subr.bf16.mxu0 0
    %324 = vmatpush1.bf16.msra.mxu0 0
    %325 = vmatprep.subr.bf16.mxu0 0
    %326 = vmatpush1.bf16.msra.mxu0 0
    %327 = vmatprep.subr.bf16.mxu0 0
    %328 = vmatpush1.bf16.msra.mxu0 0
    %329 = vmatprep.mubr.bf16.mxu0 0
    %330 = vmatmul.mubr.bf16.gmra.mrb[0].mxu0 %v242
    %v331 = vpop.f32.mrb[0].mxu0
    %v332 = vadd.f32 %v247, %v331
    %v333 = vpop.f32.mrb[0].mxu0
    %v334 = vpop.f32.mrb[0].mxu0
    %v335 = vadd.f32 %v247, %v334
    %v336 = vpop.f32.mrb[0].mxu0
    %337 = vdwg.mxu0
    %v338 = vmax.f32 %v332, 0.0
    %v339 = vmax.f32 %v335, 0.0
    %v340 = vpack.c.bf16 %v339, %v338
    %v342 = vlaneseq
    %v343 = vshrl.u32 %v342, 7
    %v344 = vsub.s32 0, %v343
    %v345 = vrot.slane %v181, %v344
    %v363 = vunpack.c.l.b16 %v165
    %v364 = vunpack.c.l.b16 %v166
    %v365 = vunpack.c.l.b16 %v167
    %v366 = vunpack.c.l.b16 %v168
    %v367 = vunpack.c.l.b16 %v169
    %v368 = vunpack.c.l.b16 %v170
    %v369 = vunpack.c.l.b16 %v171
    %v370 = vunpack.c.l.b16 %v172
    %v371 = vunpack.c.l.b16 %v173
    %v372 = vunpack.c.l.b16 %v174
    %v373 = vunpack.c.l.b16 %v175
    %v374 = vunpack.c.l.b16 %v176
    %v375 = vunpack.c.l.b16 %v177
    %v376 = vunpack.c.l.b16 %v178
    %v377 = vunpack.c.l.b16 %v179
    %v378 = vunpack.c.l.b16 %v180
    %v379 = vpack.c.b16 %v364, %v363
    %v380 = vpack.c.b16 %v366, %v365
    %v381 = vpack.c.b16 %v368, %v367
    %v382 = vpack.c.b16 %v370, %v369
    %v383 = vpack.c.b16 %v372, %v371
    %v384 = vpack.c.b16 %v374, %v373
    %v385 = vpack.c.b16 %v376, %v375
    %v386 = vpack.c.b16 %v378, %v377
    %395 = vmatprep.subr.bf16.mxu0 0
    %396 = vmatpush1.bf16.msra.mxu0 %v379
    %397 = vmatprep.subr.bf16.mxu0 0
    %398 = vmatpush1.bf16.msra.mxu0 %v380
    %399 = vmatprep.subr.bf16.mxu0 0
    %400 = vmatpush1.bf16.msra.mxu0 %v381
    %401 = vmatprep.subr.bf16.mxu0 0
    %402 = vmatpush1.bf16.msra.mxu0 %v382
    %403 = vmatprep.subr.bf16.mxu0 0
    %404 = vmatpush1.bf16.msra.mxu0 %v383
    %405 = vmatprep.subr.bf16.mxu0 0
    %406 = vmatpush1.bf16.msra.mxu0 %v384
    %407 = vmatprep.subr.bf16.mxu0 0
    %408 = vmatpush1.bf16.msra.mxu0 %v385
    %409 = vmatprep.subr.bf16.mxu0 0
    %410 = vmatpush1.bf16.msra.mxu0 %v386
    %411 = vmatprep.subr.bf16.mxu0 0
    %412 = vmatpush1.bf16.msra.mxu0 0
    %413 = vmatprep.subr.bf16.mxu0 0
    %414 = vmatpush1.bf16.msra.mxu0 0
    %415 = vmatprep.subr.bf16.mxu0 0
    %416 = vmatpush1.bf16.msra.mxu0 0
    %417 = vmatprep.subr.bf16.mxu0 0
    %418 = vmatpush1.bf16.msra.mxu0 0
    %419 = vmatprep.subr.bf16.mxu0 0
    %420 = vmatpush1.bf16.msra.mxu0 0
    %421 = vmatprep.subr.bf16.mxu0 0
    %422 = vmatpush1.bf16.msra.mxu0 0
    %423 = vmatprep.subr.bf16.mxu0 0
    %424 = vmatpush1.bf16.msra.mxu0 0
    %425 = vmatprep.subr.bf16.mxu0 0
    %426 = vmatpush1.bf16.msra.mxu0 0
    %427 = vmatprep.mubr.bf16.mxu0 0
    %428 = vmatmul.mubr.bf16.gmra.mrb[0].mxu0 %v340
    %v429 = vpop.f32.mrb[0].mxu0
    %v430 = vadd.f32 %v345, %v429
    %v431 = vpop.f32.mrb[0].mxu0
    %v432 = vpop.f32.mrb[0].mxu0
    %v433 = vadd.f32 %v345, %v432
    %v434 = vpop.f32.mrb[0].mxu0
    %435 = vdwg.mxu0
    %436 = vadd.xlane.f32.xlu0 %v430
    %v437 = vpop.xlane.xlu0 %436
    %438 = vadd.xlane.f32.xlu0 %v433
    %v439 = vpop.xlane.xlu0 %438
    %v440 = vrcp.pop 128.0
    %v441 = vmul.f32 %v437, %v440
    %v442 = vmul.f32 %v439, %v440
    %v443 = vsub.f32 %v430, %v441
    %v444 = vsub.f32 %v433, %v442
    %v445 = vmul.f32 %v443, %v443
    %v446 = vmul.f32 %v444, %v444
    %447 = vadd.xlane.f32.xlu0 %v445
    %v448 = vpop.xlane.xlu0 %447
    %449 = vadd.xlane.f32.xlu0 %v446
    %v450 = vpop.xlane.xlu0 %449
    %v451 = vmul.f32 %v448, %v440
    %v452 = vmul.f32 %v450, %v440
    %v453 = vadd.f32 %v451, 1e-05
    %v454 = vadd.f32 %v452, 1e-05
    %v455 = vrsqrt.pop %v453
    %v456 = vrsqrt.pop %v454
    %v457 = vmul.f32 %v443, %v455
    %v458 = vmul.f32 %v444, %v456
    %v460 = vlaneseq
    %v461 = vshrl.u32 %v460, 7
    %v462 = vsub.s32 0, %v461
    %v463 = vrot.slane %v182, %v462
    %v465 = vmul.f32 %v457, %v463
    %v466 = vmul.f32 %v458, %v463
    %v468 = vlaneseq
    %v469 = vshrl.u32 %v468, 7
    %v470 = vsub.s32 0, %v469
    %v471 = vrot.slane %v183, %v470
    %v473 = vadd.f32 %v465, %v471
    %v474 = vadd.f32 %v466, %v471
    %475 = vst [vmem:[#allocation17] sm:$0xff] %v473
    %476 = vst [vmem:[#allocation17 + $0x8] sm:$0xff] %v474
    // Predicated region
    $region74: #{encoder_processor_decoder.8} parent=1 // pred_check
      _
    $region75: #{encoder_processor_decoder.8} parent=1 // pred_check_branch
      %478 = sbr.rel (0) target = $region77
    $region76: #{encoder_processor_decoder.8} parent=1 // pred_region
      %s480 = ssub.s32 256, 256
      %481 = vsyncadd [#allocation4], %s480
      %s482 = sshll.u32 [#allocation17], 4
      %s483 = int_to_ptr.vmem [resolvable:$true] %s482
      %488 = dma.vmem_to_hbm [thread:$0]  %s483, 256, %s9, [#allocation4], 128, 128, 8
    $region77: #{encoder_processor_decoder.8} parent=1 // pred_fallthru
      _
    // Predicated region
    $region78: #{encoder_processor_decoder.8} parent=1 // pred_check
      _
    $region79: #{encoder_processor_decoder.8} parent=1 // pred_check_branch
      %490 = sbr.rel (0) target = $region81
    $region80: #{encoder_processor_decoder.8} parent=1 // pred_region
      %491 = dma.done [#allocation4], 256
    $region81: #{encoder_processor_decoder.8} parent=1 // pred_fallthru
      _
    %492 = vsyncpa [#allocation3], 1
    %493 = vsyncpa [#allocation6], 1
    %494 = vsyncpa [#allocation9], 1
    %495 = vsyncpa [#allocation12], 1
    %496 = vsyncpa [#allocation15], 1
    %497 = vsyncpa [#allocation4], 1

// kernel: encoder_processor_decoder.9
$region0: #{encoder_processor_decoder.9}
  #allocation0 [shape = 'u32[]', space=smem, size = 0x4, offset = 0x4, fixed_abs, tag = 'smem constant byte address 0x4 - core index']
  #allocation1 [shape = 'u32[144,128]{1,0:T(1,128)}', space=vmem, size = 0x12000, scoped, tag = 'internal scratch']
  %s0 = inlined_call_operand.hbm [shape: f32[32,4], index: 0, kind: input, shape index: {}]
  %s1 = inlined_call_operand.hbm [shape: bf16[4,128], index: 1, kind: input, shape index: {}]
  %s2 = inlined_call_operand.hbm [shape: f32[1,128], index: 2, kind: input, shape index: {}]
  %s3 = inlined_call_operand.hbm [shape: bf16[128,128], index: 3, kind: input, shape index: {}]
  %s4 = inlined_call_operand.hbm [shape: f32[1,128], index: 4, kind: input, shape index: {}]
  %s5 = inlined_call_operand.hbm [shape: bf16[128,128], index: 5, kind: input, shape index: {}]
  %s6 = inlined_call_operand.hbm [shape: f32[1,128], index: 6, kind: input, shape index: {}]
  %s7 = inlined_call_operand.hbm [shape: f32[1,128], index: 7, kind: input, shape index: {}]
  %s8 = inlined_call_operand.hbm [shape: f32[1,128], index: 8, kind: input, shape index: {}]
  %s9 = inlined_call_operand.hbm [shape: f32[32,128], index: 9, kind: output, shape index: {}]
  %s10 = sld [smem:[#allocation0]]
  $region82: #{encoder_processor_decoder.9} parent=0
    _
  %s12 = ssub.s32 1, %s10
  %s13 = scalar_select 0, %s12, %s10
  $region1: #{encoder_processor_decoder.9} parent=0
    #allocation2 [shape = 'u8[16384]{0}', space=vmem, size = 0x4000, scoped, tag = 'input window, operand 0, single buffered']
    #allocation3 [shape = 's32[1]{0}', space=sflag, size = 0x4, scoped, tag = 'scoped memory for encoder_processor_decoder.9']
    #allocation4 [shape = 's32[1]{0}', space=sflag, size = 0x4, scoped, tag = 'scoped memory for encoder_processor_decoder.9']
    #allocation5 [shape = 'u8[1024]{0}', space=vmem, size = 0x400, scoped, tag = 'input window, operand 1, single buffered']
    #allocation6 [shape = 's32[1]{0}', space=sflag, size = 0x4, scoped, tag = 'scoped memory for encoder_processor_decoder.9']
    #allocation7 [shape = 'u8[512]{0}', space=vmem, size = 0x400, scoped, tag = 'input window, operand 2, single buffered']
    #allocation8 [shape = 'u8[32768]{0}', space=vmem, size = 0x8000, scoped, tag = 'input window, operand 3, single buffered']
    #allocation9 [shape = 's32[1]{0}', space=sflag, size = 0x4, scoped, tag = 'scoped memory for encoder_processor_decoder.9']
    #allocation10 [shape = 'u8[512]{0}', space=vmem, size = 0x400, scoped, tag = 'input window, operand 4, single buffered']
    #allocation11 [shape = 'u8[32768]{0}', space=vmem, size = 0x8000, scoped, tag = 'input window, operand 5, single buffered']
    #allocation12 [shape = 's32[1]{0}', space=sflag, size = 0x4, scoped, tag = 'scoped memory for encoder_processor_decoder.9']
    #allocation13 [shape = 'u8[512]{0}', space=vmem, size = 0x400, scoped, tag = 'input window, operand 6, single buffered']
    #allocation14 [shape = 'u8[512]{0}', space=vmem, size = 0x400, scoped, tag = 'input window, operand 7, single buffered']
    #allocation15 [shape = 's32[1]{0}', space=sflag, size = 0x4, scoped, tag = 'scoped memory for encoder_processor_decoder.9']
    #allocation16 [shape = 'u8[512]{0}', space=vmem, size = 0x400, scoped, tag = 'input window, operand 8, single buffered']
    #allocation17 [shape = 'u8[16384]{0}', space=vmem, size = 0x4000, scoped, tag = 'output window, operand 0, single buffered']
    %14 = vsyncpa [#allocation3], 0
    %15 = vsyncpa [#allocation6], 0
    %16 = vsyncpa [#allocation9], 0
    %17 = vsyncpa [#allocation12], 0
    %18 = vsyncpa [#allocation15], 0
    %19 = vsyncpa [#allocation4], 0
    // Predicated region
    $region2: #{encoder_processor_decoder.9} parent=1 // pred_check
      _
    $region3: #{encoder_processor_decoder.9} parent=1 // pred_check_branch
      %21 = sbr.rel (0) target = $region5
    $region4: #{encoder_processor_decoder.9} parent=1 // pred_region
      %s23 = ssub.s32 512, 512
      %24 = vsyncadd [#allocation3], %s23
      %s25 = sshll.u32 [#allocation2], 4
      %s26 = int_to_ptr.vmem [resolvable:$true] %s25
      %31 = dma.hbm_to_vmem [thread:$0]  %s0, 512, %s26, [#allocation3], 128, 128, 8
    $region5: #{encoder_processor_decoder.9} parent=1 // pred_fallthru
      _
    // Predicated region
    $region6: #{encoder_processor_decoder.9} parent=1 // pred_check
      _
    $region7: #{encoder_processor_decoder.9} parent=1 // pred_check_branch
      %33 = sbr.rel (0) target = $region9
    $region8: #{encoder_processor_decoder.9} parent=1 // pred_region
      %s35 = ssub.s32 32, 32
      %36 = vsyncadd [#allocation6], %s35
      %s38 = sshll.u32 [#allocation5], 4
      %s39 = int_to_ptr.vmem [resolvable:$true] %s38
      %41 = dma.hbm_to_vmem [thread:$0]  %s1, 32, %s39, [#allocation6]
    $region9: #{encoder_processor_decoder.9} parent=1 // pred_fallthru
      _
    // Predicated region
    $region10: #{encoder_processor_decoder.9} parent=1 // pred_check
      _
    $region11: #{encoder_processor_decoder.9} parent=1 // pred_check_branch
      %43 = sbr.rel (0) target = $region13
    $region12: #{encoder_processor_decoder.9} parent=1 // pred_region
      %s45 = ssub.s32 16, 16
      %46 = vsyncadd [#allocation6], %s45
      %s48 = sshll.u32 [#allocation7], 4
      %s49 = int_to_ptr.vmem [resolvable:$true] %s48
      %51 = dma.hbm_to_vmem [thread:$0]  %s2, 16, %s49, [#allocation6]
    $region13: #{encoder_processor_decoder.9} parent=1 // pred_fallthru
      _
    // Predicated region
    $region14: #{encoder_processor_decoder.9} parent=1 // pred_check
      _
    $region15: #{encoder_processor_decoder.9} parent=1 // pred_check_branch
      %53 = sbr.rel (0) target = $region17
    $region16: #{encoder_processor_decoder.9} parent=1 // pred_region
      %s55 = ssub.s32 1024, 1024
      %56 = vsyncadd [#allocation9], %s55
      %s57 = sshll.u32 [#allocation8], 4
      %s58 = int_to_ptr.vmem [resolvable:$true] %s57
      %63 = dma.hbm_to_vmem [thread:$0]  %s3, 1024, %s58, [#allocation9], 64, 64, 4
    $region17: #{encoder_processor_decoder.9} parent=1 // pred_fallthru
      _
    // Predicated region
    $region18: #{encoder_processor_decoder.9} parent=1 // pred_check
      _
    $region19: #{encoder_processor_decoder.9} parent=1 // pred_check_branch
      %65 = sbr.rel (0) target = $region21
    $region20: #{encoder_processor_decoder.9} parent=1 // pred_region
      %s67 = ssub.s32 16, 16
      %68 = vsyncadd [#allocation9], %s67
      %s70 = sshll.u32 [#allocation10], 4
      %s71 = int_to_ptr.vmem [resolvable:$true] %s70
      %73 = dma.hbm_to_vmem [thread:$0]  %s4, 16, %s71, [#allocation9]
    $region21: #{encoder_processor_decoder.9} parent=1 // pred_fallthru
      _
    // Predicated region
    $region22: #{encoder_processor_decoder.9} parent=1 // pred_check
      _
    $region23: #{encoder_processor_decoder.9} parent=1 // pred_check_branch
      %75 = sbr.rel (0) target = $region25
    $region24: #{encoder_processor_decoder.9} parent=1 // pred_region
      %s77 = ssub.s32 1024, 1024
      %78 = vsyncadd [#allocation12], %s77
      %s79 = sshll.u32 [#allocation11], 4
      %s80 = int_to_ptr.vmem [resolvable:$true] %s79
      %85 = dma.hbm_to_vmem [thread:$0]  %s5, 1024, %s80, [#allocation12], 64, 64, 4
    $region25: #{encoder_processor_decoder.9} parent=1 // pred_fallthru
      _
    // Predicated region
    $region26: #{encoder_processor_decoder.9} parent=1 // pred_check
      _
    $region27: #{encoder_processor_decoder.9} parent=1 // pred_check_branch
      %87 = sbr.rel (0) target = $region29
    $region28: #{encoder_processor_decoder.9} parent=1 // pred_region
      %s89 = ssub.s32 16, 16
      %90 = vsyncadd [#allocation12], %s89
      %s92 = sshll.u32 [#allocation13], 4
      %s93 = int_to_ptr.vmem [resolvable:$true] %s92
      %95 = dma.hbm_to_vmem [thread:$0]  %s6, 16, %s93, [#allocation12]
    $region29: #{encoder_processor_decoder.9} parent=1 // pred_fallthru
      _
    // Predicated region
    $region30: #{encoder_processor_decoder.9} parent=1 // pred_check
      _
    $region31: #{encoder_processor_decoder.9} parent=1 // pred_check_branch
      %97 = sbr.rel (0) target = $region33
    $region32: #{encoder_processor_decoder.9} parent=1 // pred_region
      %s99 = ssub.s32 16, 16
      %100 = vsyncadd [#allocation15], %s99
      %s102 = sshll.u32 [#allocation14], 4
      %s103 = int_to_ptr.vmem [resolvable:$true] %s102
      %105 = dma.hbm_to_vmem [thread:$0]  %s7, 16, %s103, [#allocation15]
    $region33: #{encoder_processor_decoder.9} parent=1 // pred_fallthru
      _
    // Predicated region
    $region34: #{encoder_processor_decoder.9} parent=1 // pred_check
      _
    $region35: #{encoder_processor_decoder.9} parent=1 // pred_check_branch
      %107 = sbr.rel (0) target = $region37
    $region36: #{encoder_processor_decoder.9} parent=1 // pred_region
      %s109 = ssub.s32 16, 16
      %110 = vsyncadd [#allocation15], %s109
      %s112 = sshll.u32 [#allocation16], 4
      %s113 = int_to_ptr.vmem [resolvable:$true] %s112
      %115 = dma.hbm_to_vmem [thread:$0]  %s8, 16, %s113, [#allocation15]
    $region37: #{encoder_processor_decoder.9} parent=1 // pred_fallthru
      _
    // Predicated region
    $region38: #{encoder_processor_decoder.9} parent=1 // pred_check
      _
    $region39: #{encoder_processor_decoder.9} parent=1 // pred_check_branch
      %117 = sbr.rel (0) target = $region41
    $region40: #{encoder_processor_decoder.9} parent=1 // pred_region
      %118 = dma.done [#allocation3], 512
    $region41: #{encoder_processor_decoder.9} parent=1 // pred_fallthru
      _
    // Predicated region
    $region42: #{encoder_processor_decoder.9} parent=1 // pred_check
      _
    $region43: #{encoder_processor_decoder.9} parent=1 // pred_check_branch
      %120 = sbr.rel (0) target = $region45
    $region44: #{encoder_processor_decoder.9} parent=1 // pred_region
      %121 = dma.done [#allocation6], 32
    $region45: #{encoder_processor_decoder.9} parent=1 // pred_fallthru
      _
    // Predicated region
    $region46: #{encoder_processor_decoder.9} parent=1 // pred_check
      _
    $region47: #{encoder_processor_decoder.9} parent=1 // pred_check_branch
      %123 = sbr.rel (0) target = $region49
    $region48: #{encoder_processor_decoder.9} parent=1 // pred_region
      %124 = dma.done [#allocation6], 16
    $region49: #{encoder_processor_decoder.9} parent=1 // pred_fallthru
      _
    // Predicated region
    $region50: #{encoder_processor_decoder.9} parent=1 // pred_check
      _
    $region51: #{encoder_processor_decoder.9} parent=1 // pred_check_branch
      %126 = sbr.rel (0) target = $region53
    $region52: #{encoder_processor_decoder.9} parent=1 // pred_region
      %127 = dma.done [#allocation9], 1024
    $region53: #{encoder_processor_decoder.9} parent=1 // pred_fallthru
      _
    // Predicated region
    $region54: #{encoder_processor_decoder.9} parent=1 // pred_check
      _
    $region55: #{encoder_processor_decoder.9} parent=1 // pred_check_branch
      %129 = sbr.rel (0) target = $region57
    $region56: #{encoder_processor_decoder.9} parent=1 // pred_region
      %130 = dma.done [#allocation9], 16
    $region57: #{encoder_processor_decoder.9} parent=1 // pred_fallthru
      _
    // Predicated region
    $region58: #{encoder_processor_decoder.9} parent=1 // pred_check
      _
    $region59: #{encoder_processor_decoder.9} parent=1 // pred_check_branch
      %132 = sbr.rel (0) target = $region61
    $region60: #{encoder_processor_decoder.9} parent=1 // pred_region
      %133 = dma.done [#allocation12], 1024
    $region61: #{encoder_processor_decoder.9} parent=1 // pred_fallthru
      _
    // Predicated region
    $region62: #{encoder_processor_decoder.9} parent=1 // pred_check
      _
    $region63: #{encoder_processor_decoder.9} parent=1 // pred_check_branch
      %135 = sbr.rel (0) target = $region65
    $region64: #{encoder_processor_decoder.9} parent=1 // pred_region
      %136 = dma.done [#allocation12], 16
    $region65: #{encoder_processor_decoder.9} parent=1 // pred_fallthru
      _
    // Predicated region
    $region66: #{encoder_processor_decoder.9} parent=1 // pred_check
      _
    $region67: #{encoder_processor_decoder.9} parent=1 // pred_check_branch
      %138 = sbr.rel (0) target = $region69
    $region68: #{encoder_processor_decoder.9} parent=1 // pred_region
      %139 = dma.done [#allocation15], 16
    $region69: #{encoder_processor_decoder.9} parent=1 // pred_fallthru
      _
    // Predicated region
    $region70: #{encoder_processor_decoder.9} parent=1 // pred_check
      _
    $region71: #{encoder_processor_decoder.9} parent=1 // pred_check_branch
      %141 = sbr.rel (0) target = $region73
    $region72: #{encoder_processor_decoder.9} parent=1 // pred_region
      %142 = dma.done [#allocation15], 16
    $region73: #{encoder_processor_decoder.9} parent=1 // pred_fallthru
      _
    %v144 = vld [vmem:[#allocation2] sm:$0xff]
    %v145 = vld [vmem:[#allocation2 + $0x8] sm:$0xff]
    %v146 = vld [vmem:[#allocation2 + $0x10] sm:$0xff]
    %v147 = vld [vmem:[#allocation2 + $0x18] sm:$0xff]
    %v148 = vld [vmem:[#allocation5] sm:$0x3]
    %v149 = vld [vmem:[#allocation7] sm:$0x1]
    %v150 = vld [vmem:[#allocation8] sm:$0xf]
    %v151 = vld [vmem:[#allocation8 + $0x4] sm:$0xf]
    %v152 = vld [vmem:[#allocation8 + $0x8] sm:$0xf]
    %v153 = vld [vmem:[#allocation8 + $0xc] sm:$0xf]
    %v154 = vld [vmem:[#allocation8 + $0x10] sm:$0xf]
    %v155 = vld [vmem:[#allocation8 + $0x14] sm:$0xf]
    %v156 = vld [vmem:[#allocation8 + $0x18] sm:$0xf]
    %v157 = vld [vmem:[#allocation8 + $0x1c] sm:$0xf]
    %v158 = vld [vmem:[#allocation8 + $0x20] sm:$0xf]
    %v159 = vld [vmem:[#allocation8 + $0x24] sm:$0xf]
    %v160 = vld [vmem:[#allocation8 + $0x28] sm:$0xf]
    %v161 = vld [vmem:[#allocation8 + $0x2c] sm:$0xf]
    %v162 = vld [vmem:[#allocation8 + $0x30] sm:$0xf]
    %v163 = vld [vmem:[#allocation8 + $0x34] sm:$0xf]
    %v164 = vld [vmem:[#allocation8 + $0x38] sm:$0xf]
    %v165 = vld [vmem:[#allocation8 + $0x3c] sm:$0xf]
    %v166 = vld [vmem:[#allocation10] sm:$0x1]
    %v167 = vld [vmem:[#allocation11] sm:$0xf]
    %v168 = vld [vmem:[#allocation11 + $0x4] sm:$0xf]
    %v169 = vld [vmem:[#allocation11 + $0x8] sm:$0xf]
    %v170 = vld [vmem:[#allocation11 + $0xc] sm:$0xf]
    %v171 = vld [vmem:[#allocation11 + $0x10] sm:$0xf]
    %v172 = vld [vmem:[#allocation11 + $0x14] sm:$0xf]
    %v173 = vld [vmem:[#allocation11 + $0x18] sm:$0xf]
    %v174 = vld [vmem:[#allocation11 + $0x1c] sm:$0xf]
    %v175 = vld [vmem:[#allocation11 + $0x20] sm:$0xf]
    %v176 = vld [vmem:[#allocation11 + $0x24] sm:$0xf]
    %v177 = vld [vmem:[#allocation11 + $0x28] sm:$0xf]
    %v178 = vld [vmem:[#allocation11 + $0x2c] sm:$0xf]
    %v179 = vld [vmem:[#allocation11 + $0x30] sm:$0xf]
    %v180 = vld [vmem:[#allocation11 + $0x34] sm:$0xf]
    %v181 = vld [vmem:[#allocation11 + $0x38] sm:$0xf]
    %v182 = vld [vmem:[#allocation11 + $0x3c] sm:$0xf]
    %v183 = vld [vmem:[#allocation13] sm:$0x1]
    %v184 = vld [vmem:[#allocation14] sm:$0x1]
    %v185 = vld [vmem:[#allocation16] sm:$0x1]
    %v186 = vpack.c.bf16 %v145, %v144
    %v187 = vpack.c.bf16 %v147, %v146
    %v189 = vlaneseq
    %v190 = vshrl.u32 %v189, 7
    %v191 = vsub.s32 0, %v190
    %v192 = vrot.slane %v149, %v191
    %vm194 = vcmask 31744
    %v196 = vsel %vm194, %v186, 0
    %v199 = vsel %vm194, %v187, 0
    %vm201 = vcmask 1041408
    %v203 = vsel %vm201, %v148, 0
    %205 = vmatprep.subr.bf16.mxu0 0
    %206 = vmatpush1.bf16.msra.mxu0 %v203
    %207 = vmatprep.subr.bf16.mxu0 0
    %208 = vmatpush1.bf16.msra.mxu0 0
    %209 = vmatprep.subr.bf16.mxu0 0
    %210 = vmatpush1.bf16.msra.mxu0 0
    %211 = vmatprep.subr.bf16.mxu0 0
    %212 = vmatpush1.bf16.msra.mxu0 0
    %213 = vmatprep.subr.bf16.mxu0 0
    %214 = vmatpush1.bf16.msra.mxu0 0
    %215 = vmatprep.subr.bf16.mxu0 0
    %216 = vmatpush1.bf16.msra.mxu0 0
    %217 = vmatprep.subr.bf16.mxu0 0
    %218 = vmatpush1.bf16.msra.mxu0 0
    %219 = vmatprep.subr.bf16.mxu0 0
    %220 = vmatpush1.bf16.msra.mxu0 0
    %221 = vmatprep.subr.bf16.mxu0 0
    %222 = vmatpush1.bf16.msra.mxu0 0
    %223 = vmatprep.subr.bf16.mxu0 0
    %224 = vmatpush1.bf16.msra.mxu0 0
    %225 = vmatprep.subr.bf16.mxu0 0
    %226 = vmatpush1.bf16.msra.mxu0 0
    %227 = vmatprep.subr.bf16.mxu0 0
    %228 = vmatpush1.bf16.msra.mxu0 0
    %229 = vmatprep.subr.bf16.mxu0 0
    %230 = vmatpush1.bf16.msra.mxu0 0
    %231 = vmatprep.subr.bf16.mxu0 0
    %232 = vmatpush1.bf16.msra.mxu0 0
    %233 = vmatprep.subr.bf16.mxu0 0
    %234 = vmatpush1.bf16.msra.mxu0 0
    %235 = vmatprep.subr.bf16.mxu0 0
    %236 = vmatpush1.bf16.msra.mxu0 0
    %237 = vmatprep.mubr.bf16.mxu0 0
    %238 = vmatmul.mubr.bf16.gmra.mrb[0].mxu0 %v196
    %v239 = vpop.f32.mrb[0].mxu0
    %v240 = vadd.f32 %v192, %v239
    %v241 = vpop.f32.mrb[0].mxu0
    %v242 = vpop.f32.mrb[0].mxu0
    %v243 = vadd.f32 %v192, %v242
    %v244 = vpop.f32.mrb[0].mxu0
    %245 = vmatprep.mubr.bf16.mxu0 0
    %246 = vmatmul.mubr.bf16.gmra.mrb[0].mxu0 %v199
    %v247 = vpop.f32.mrb[0].mxu0
    %v248 = vadd.f32 %v192, %v247
    %v249 = vpop.f32.mrb[0].mxu0
    %v250 = vpop.f32.mrb[0].mxu0
    %v251 = vadd.f32 %v192, %v250
    %v252 = vpop.f32.mrb[0].mxu0
    %253 = vdwg.mxu0
    %v254 = vmax.f32 %v240, 0.0
    %v255 = vmax.f32 %v243, 0.0
    %v256 = vmax.f32 %v248, 0.0
    %v257 = vmax.f32 %v251, 0.0
    %v258 = vpack.c.bf16 %v255, %v254
    %v259 = vpack.c.bf16 %v257, %v256
    %v261 = vlaneseq
    %v262 = vshrl.u32 %v261, 7
    %v263 = vsub.s32 0, %v262
    %v264 = vrot.slane %v166, %v263
    %v282 = vunpack.c.l.b16 %v150
    %v283 = vunpack.c.l.b16 %v151
    %v284 = vunpack.c.l.b16 %v152
    %v285 = vunpack.c.l.b16 %v153
    %v286 = vunpack.c.l.b16 %v154
    %v287 = vunpack.c.l.b16 %v155
    %v288 = vunpack.c.l.b16 %v156
    %v289 = vunpack.c.l.b16 %v157
    %v290 = vunpack.c.l.b16 %v158
    %v291 = vunpack.c.l.b16 %v159
    %v292 = vunpack.c.l.b16 %v160
    %v293 = vunpack.c.l.b16 %v161
    %v294 = vunpack.c.l.b16 %v162
    %v295 = vunpack.c.l.b16 %v163
    %v296 = vunpack.c.l.b16 %v164
    %v297 = vunpack.c.l.b16 %v165
    %v298 = vpack.c.b16 %v283, %v282
    %v299 = vpack.c.b16 %v285, %v284
    %v300 = vpack.c.b16 %v287, %v286
    %v301 = vpack.c.b16 %v289, %v288
    %v302 = vpack.c.b16 %v291, %v290
    %v303 = vpack.c.b16 %v293, %v292
    %v304 = vpack.c.b16 %v295, %v294
    %v305 = vpack.c.b16 %v297, %v296
    %314 = vmatprep.subr.bf16.mxu0 0
    %315 = vmatpush1.bf16.msra.mxu0 %v298
    %316 = vmatprep.subr.bf16.mxu0 0
    %317 = vmatpush1.bf16.msra.mxu0 %v299
    %318 = vmatprep.subr.bf16.mxu0 0
    %319 = vmatpush1.bf16.msra.mxu0 %v300
    %320 = vmatprep.subr.bf16.mxu0 0
    %321 = vmatpush1.bf16.msra.mxu0 %v301
    %322 = vmatprep.subr.bf16.mxu0 0
    %323 = vmatpush1.bf16.msra.mxu0 %v302
    %324 = vmatprep.subr.bf16.mxu0 0
    %325 = vmatpush1.bf16.msra.mxu0 %v303
    %326 = vmatprep.subr.bf16.mxu0 0
    %327 = vmatpush1.bf16.msra.mxu0 %v304
    %328 = vmatprep.subr.bf16.mxu0 0
    %329 = vmatpush1.bf16.msra.mxu0 %v305
    %330 = vmatprep.subr.bf16.mxu0 0
    %331 = vmatpush1.bf16.msra.mxu0 0
    %332 = vmatprep.subr.bf16.mxu0 0
    %333 = vmatpush1.bf16.msra.mxu0 0
    %334 = vmatprep.subr.bf16.mxu0 0
    %335 = vmatpush1.bf16.msra.mxu0 0
    %336 = vmatprep.subr.bf16.mxu0 0
    %337 = vmatpush1.bf16.msra.mxu0 0
    %338 = vmatprep.subr.bf16.mxu0 0
    %339 = vmatpush1.bf16.msra.mxu0 0
    %340 = vmatprep.subr.bf16.mxu0 0
    %341 = vmatpush1.bf16.msra.mxu0 0
    %342 = vmatprep.subr.bf16.mxu0 0
    %343 = vmatpush1.bf16.msra.mxu0 0
    %344 = vmatprep.subr.bf16.mxu0 0
    %345 = vmatpush1.bf16.msra.mxu0 0
    %346 = vmatprep.mubr.bf16.mxu0 0
    %347 = vmatmul.mubr.bf16.gmra.mrb[0].mxu0 %v258
    %v348 = vpop.f32.mrb[0].mxu0
    %v349 = vadd.f32 %v264, %v348
    %v350 = vpop.f32.mrb[0].mxu0
    %v351 = vpop.f32.mrb[0].mxu0
    %v352 = vadd.f32 %v264, %v351
    %v353 = vpop.f32.mrb[0].mxu0
    %354 = vmatprep.mubr.bf16.mxu0 0
    %355 = vmatmul.mubr.bf16.gmra.mrb[0].mxu0 %v259
    %v356 = vpop.f32.mrb[0].mxu0
    %v357 = vadd.f32 %v264, %v356
    %v358 = vpop.f32.mrb[0].mxu0
    %v359 = vpop.f32.mrb[0].mxu0
    %v360 = vadd.f32 %v264, %v359
    %v361 = vpop.f32.mrb[0].mxu0
    %362 = vdwg.mxu0
    %v363 = vmax.f32 %v349, 0.0
    %v364 = vmax.f32 %v352, 0.0
    %v365 = vmax.f32 %v357, 0.0
    %v366 = vmax.f32 %v360, 0.0
    %v367 = vpack.c.bf16 %v364, %v363
    %v368 = vpack.c.bf16 %v366, %v365
    %v370 = vlaneseq
    %v371 = vshrl.u32 %v370, 7
    %v372 = vsub.s32 0, %v371
    %v373 = vrot.slane %v183, %v372
    %v391 = vunpack.c.l.b16 %v167
    %v392 = vunpack.c.l.b16 %v168
    %v393 = vunpack.c.l.b16 %v169
    %v394 = vunpack.c.l.b16 %v170
    %v395 = vunpack.c.l.b16 %v171
    %v396 = vunpack.c.l.b16 %v172
    %v397 = vunpack.c.l.b16 %v173
    %v398 = vunpack.c.l.b16 %v174
    %v399 = vunpack.c.l.b16 %v175
    %v400 = vunpack.c.l.b16 %v176
    %v401 = vunpack.c.l.b16 %v177
    %v402 = vunpack.c.l.b16 %v178
    %v403 = vunpack.c.l.b16 %v179
    %v404 = vunpack.c.l.b16 %v180
    %v405 = vunpack.c.l.b16 %v181
    %v406 = vunpack.c.l.b16 %v182
    %v407 = vpack.c.b16 %v392, %v391
    %v408 = vpack.c.b16 %v394, %v393
    %v409 = vpack.c.b16 %v396, %v395
    %v410 = vpack.c.b16 %v398, %v397
    %v411 = vpack.c.b16 %v400, %v399
    %v412 = vpack.c.b16 %v402, %v401
    %v413 = vpack.c.b16 %v404, %v403
    %v414 = vpack.c.b16 %v406, %v405
    %423 = vmatprep.subr.bf16.mxu0 0
    %424 = vmatpush1.bf16.msra.mxu0 %v407
    %425 = vmatprep.subr.bf16.mxu0 0
    %426 = vmatpush1.bf16.msra.mxu0 %v408
    %427 = vmatprep.subr.bf16.mxu0 0
    %428 = vmatpush1.bf16.msra.mxu0 %v409
    %429 = vmatprep.subr.bf16.mxu0 0
    %430 = vmatpush1.bf16.msra.mxu0 %v410
    %431 = vmatprep.subr.bf16.mxu0 0
    %432 = vmatpush1.bf16.msra.mxu0 %v411
    %433 = vmatprep.subr.bf16.mxu0 0
    %434 = vmatpush1.bf16.msra.mxu0 %v412
    %435 = vmatprep.subr.bf16.mxu0 0
    %436 = vmatpush1.bf16.msra.mxu0 %v413
    %437 = vmatprep.subr.bf16.mxu0 0
    %438 = vmatpush1.bf16.msra.mxu0 %v414
    %439 = vmatprep.subr.bf16.mxu0 0
    %440 = vmatpush1.bf16.msra.mxu0 0
    %441 = vmatprep.subr.bf16.mxu0 0
    %442 = vmatpush1.bf16.msra.mxu0 0
    %443 = vmatprep.subr.bf16.mxu0 0
    %444 = vmatpush1.bf16.msra.mxu0 0
    %445 = vmatprep.subr.bf16.mxu0 0
    %446 = vmatpush1.bf16.msra.mxu0 0
    %447 = vmatprep.subr.bf16.mxu0 0
    %448 = vmatpush1.bf16.msra.mxu0 0
    %449 = vmatprep.subr.bf16.mxu0 0
    %450 = vmatpush1.bf16.msra.mxu0 0
    %451 = vmatprep.subr.bf16.mxu0 0
    %452 = vmatpush1.bf16.msra.mxu0 0
    %453 = vmatprep.subr.bf16.mxu0 0
    %454 = vmatpush1.bf16.msra.mxu0 0
    %455 = vmatprep.mubr.bf16.mxu0 0
    %456 = vmatmul.mubr.bf16.gmra.mrb[0].mxu0 %v367
    %v457 = vpop.f32.mrb[0].mxu0
    %v458 = vadd.f32 %v373, %v457
    %v459 = vpop.f32.mrb[0].mxu0
    %v460 = vpop.f32.mrb[0].mxu0
    %v461 = vadd.f32 %v373, %v460
    %v462 = vpop.f32.mrb[0].mxu0
    %463 = vmatprep.mubr.bf16.mxu0 0
    %464 = vmatmul.mubr.bf16.gmra.mrb[0].mxu0 %v368
    %v465 = vpop.f32.mrb[0].mxu0
    %v466 = vadd.f32 %v373, %v465
    %v467 = vpop.f32.mrb[0].mxu0
    %v468 = vpop.f32.mrb[0].mxu0
    %v469 = vadd.f32 %v373, %v468
    %v470 = vpop.f32.mrb[0].mxu0
    %471 = vdwg.mxu0
    %472 = vadd.xlane.f32.xlu0 %v458
    %v473 = vpop.xlane.xlu0 %472
    %474 = vadd.xlane.f32.xlu0 %v461
    %v475 = vpop.xlane.xlu0 %474
    %476 = vadd.xlane.f32.xlu0 %v466
    %v477 = vpop.xlane.xlu0 %476
    %478 = vadd.xlane.f32.xlu0 %v469
    %v479 = vpop.xlane.xlu0 %478
    %v480 = vrcp.pop 128.0
    %v481 = vmul.f32 %v473, %v480
    %v482 = vmul.f32 %v475, %v480
    %v483 = vmul.f32 %v477, %v480
    %v484 = vmul.f32 %v479, %v480
    %v485 = vsub.f32 %v458, %v481
    %v486 = vsub.f32 %v461, %v482
    %v487 = vsub.f32 %v466, %v483
    %v488 = vsub.f32 %v469, %v484
    %v489 = vmul.f32 %v485, %v485
    %v490 = vmul.f32 %v486, %v486
    %v491 = vmul.f32 %v487, %v487
    %v492 = vmul.f32 %v488, %v488
    %493 = vadd.xlane.f32.xlu0 %v489
    %v494 = vpop.xlane.xlu0 %493
    %495 = vadd.xlane.f32.xlu0 %v490
    %v496 = vpop.xlane.xlu0 %495
    %497 = vadd.xlane.f32.xlu0 %v491
    %v498 = vpop.xlane.xlu0 %497
    %499 = vadd.xlane.f32.xlu0 %v492
    %v500 = vpop.xlane.xlu0 %499
    %v501 = vmul.f32 %v494, %v480
    %v502 = vmul.f32 %v496, %v480
    %v503 = vmul.f32 %v498, %v480
    %v504 = vmul.f32 %v500, %v480
    %v505 = vadd.f32 %v501, 1e-05
    %v506 = vadd.f32 %v502, 1e-05
    %v507 = vadd.f32 %v503, 1e-05
    %v508 = vadd.f32 %v504, 1e-05
    %v509 = vrsqrt.pop %v505
    %v510 = vrsqrt.pop %v506
    %v511 = vrsqrt.pop %v507
    %v512 = vrsqrt.pop %v508
    %v513 = vmul.f32 %v485, %v509
    %v514 = vmul.f32 %v486, %v510
    %v515 = vmul.f32 %v487, %v511
    %v516 = vmul.f32 %v488, %v512
    %v518 = vlaneseq
    %v519 = vshrl.u32 %v518, 7
    %v520 = vsub.s32 0, %v519
    %v521 = vrot.slane %v184, %v520
    %v523 = vmul.f32 %v513, %v521
    %v524 = vmul.f32 %v514, %v521
    %v525 = vmul.f32 %v515, %v521
    %v526 = vmul.f32 %v516, %v521
    %v528 = vlaneseq
    %v529 = vshrl.u32 %v528, 7
    %v530 = vsub.s32 0, %v529
    %v531 = vrot.slane %v185, %v530
    %v533 = vadd.f32 %v523, %v531
    %v534 = vadd.f32 %v524, %v531
    %v535 = vadd.f32 %v525, %v531
    %v536 = vadd.f32 %v526, %v531
    %537 = vst [vmem:[#allocation17] sm:$0xff] %v533
    %538 = vst [vmem:[#allocation17 + $0x8] sm:$0xff] %v534
    %539 = vst [vmem:[#allocation17 + $0x10] sm:$0xff] %v535
    %540 = vst [vmem:[#allocation17 + $0x18] sm:$0xff] %v536
    // Predicated region
    $region74: #{encoder_processor_decoder.9} parent=1 // pred_check
      _
    $region75: #{encoder_processor_decoder.9} parent=1 // pred_check_branch
      %542 = sbr.rel (0) target = $region77
    $region76: #{encoder_processor_decoder.9} parent=1 // pred_region
      %s544 = ssub.s32 512, 512
      %545 = vsyncadd [#allocation4], %s544
      %s546 = sshll.u32 [#allocation17], 4
      %s547 = int_to_ptr.vmem [resolvable:$true] %s546
      %552 = dma.vmem_to_hbm [thread:$0]  %s547, 512, %s9, [#allocation4], 128, 128, 8
    $region77: #{encoder_processor_decoder.9} parent=1 // pred_fallthru
      _
    // Predicated region
    $region78: #{encoder_processor_decoder.9} parent=1 // pred_check
      _
    $region79: #{encoder_processor_decoder.9} parent=1 // pred_check_branch
      %554 = sbr.rel (0) target = $region81
    $region80: #{encoder_processor_decoder.9} parent=1 // pred_region
      %555 = dma.done [#allocation4], 512
    $region81: #{encoder_processor_decoder.9} parent=1 // pred_fallthru
      _
    %556 = vsyncpa [#allocation3], 1
    %557 = vsyncpa [#allocation6], 1
    %558 = vsyncpa [#allocation9], 1
    %559 = vsyncpa [#allocation12], 1
    %560 = vsyncpa [#allocation15], 1
    %561 = vsyncpa [#allocation4], 1

// kernel: encoder_processor_decoder.11
$region0: #{encoder_processor_decoder.11}
  #allocation0 [shape = 'u32[]', space=smem, size = 0x4, offset = 0x4, fixed_abs, tag = 'smem constant byte address 0x4 - core index']
  #allocation1 [shape = 'u32[144,128]{1,0:T(1,128)}', space=vmem, size = 0x12000, scoped, tag = 'internal scratch']
  %s0 = inlined_call_operand.hbm [shape: f32[16,128], index: 0, kind: input, shape index: {}]
  %s1 = inlined_call_operand.hbm [shape: f32[16,128], index: 1, kind: input, shape index: {}, may-alias: {1,2}]
  %s2 = inlined_call_operand.hbm [shape: f32[16,128], index: 2, kind: input, shape index: {}, may-alias: {1,2}]
  %s3 = inlined_call_operand.hbm [shape: bf16[128,128], index: 3, kind: input, shape index: {}]
  %s4 = inlined_call_operand.hbm [shape: bf16[128,128], index: 4, kind: input, shape index: {}]
  %s5 = inlined_call_operand.hbm [shape: f32[1,128], index: 5, kind: input, shape index: {}]
  %s6 = inlined_call_operand.hbm [shape: bf16[128,128], index: 6, kind: input, shape index: {}]
  %s7 = inlined_call_operand.hbm [shape: f32[1,128], index: 7, kind: input, shape index: {}]
  %s8 = inlined_call_operand.hbm [shape: bf16[128,128], index: 8, kind: input, shape index: {}]
  %s9 = inlined_call_operand.hbm [shape: f32[1,128], index: 9, kind: input, shape index: {}]
  %s10 = inlined_call_operand.hbm [shape: f32[1,128], index: 10, kind: input, shape index: {}]
  %s11 = inlined_call_operand.hbm [shape: f32[1,128], index: 11, kind: input, shape index: {}]
  %s12 = inlined_call_operand.hbm [shape: bf16[128,128], index: 12, kind: input, shape index: {}]
  %s13 = inlined_call_operand.hbm [shape: f32[1,128], index: 13, kind: input, shape index: {}]
  %s14 = inlined_call_operand.hbm [shape: bf16[128,128], index: 14, kind: input, shape index: {}]
  %s15 = inlined_call_operand.hbm [shape: f32[1,128], index: 15, kind: input, shape index: {}]
  %s16 = inlined_call_operand.hbm [shape: bf16[128,128], index: 16, kind: input, shape index: {}]
  %s17 = inlined_call_operand.hbm [shape: f32[1,128], index: 17, kind: input, shape index: {}]
  %s18 = inlined_call_operand.hbm [shape: f32[1,128], index: 18, kind: input, shape index: {}]
  %s19 = inlined_call_operand.hbm [shape: f32[1,128], index: 19, kind: input, shape index: {}]
  %s20 = inlined_call_operand.hbm [shape: f32[16,128], index: 20, kind: output, shape index: {}]
  %s21 = sld [smem:[#allocation0]]
  $region170: #{encoder_processor_decoder.11} parent=0
    _
  %s23 = ssub.s32 1, %s21
  %s24 = scalar_select 0, %s23, %s21
  $region1: #{encoder_processor_decoder.11} parent=0
    #allocation2 [shape = 'u8[8192]{0}', space=vmem, size = 0x2000, scoped, tag = 'input window, operand 0, single buffered']
    #allocation3 [shape = 's32[1]{0}', space=sflag, size = 0x4, scoped, tag = 'scoped memory for encoder_processor_decoder.11']
    #allocation4 [shape = 's32[1]{0}', space=sflag, size = 0x4, scoped, tag = 'scoped memory for encoder_processor_decoder.11']
    #allocation5 [shape = 'u8[8192]{0}', space=vmem, size = 0x2000, scoped, tag = 'input window, operand 1, single buffered']
    #allocation6 [shape = 's32[1]{0}', space=sflag, size = 0x4, scoped, tag = 'scoped memory for encoder_processor_decoder.11']
    #allocation7 [shape = 'u8[8192]{0}', space=vmem, size = 0x2000, scoped, tag = 'input window, operand 2, single buffered']
    #allocation8 [shape = 'u8[32768]{0}', space=vmem, size = 0x8000, scoped, tag = 'input window, operand 3, single buffered']
    #allocation9 [shape = 's32[1]{0}', space=sflag, size = 0x4, scoped, tag = 'scoped memory for encoder_processor_decoder.11']
    #allocation10 [shape = 'u8[32768]{0}', space=vmem, size = 0x8000, scoped, tag = 'input window, operand 4, single buffered']
    #allocation11 [shape = 'u8[512]{0}', space=vmem, size = 0x400, scoped, tag = 'input window, operand 5, single buffered']
    #allocation12 [shape = 's32[1]{0}', space=sflag, size = 0x4, scoped, tag = 'scoped memory for encoder_processor_decoder.11']
    #allocation13 [shape = 'u8[32768]{0}', space=vmem, size = 0x8000, scoped, tag = 'input window, operand 6, single buffered']
    #allocation14 [shape = 'u8[512]{0}', space=vmem, size = 0x400, scoped, tag = 'input window, operand 7, single buffered']
    #allocation15 [shape = 's32[1]{0}', space=sflag, size = 0x4, scoped, tag = 'scoped memory for encoder_processor_decoder.11']
    #allocation16 [shape = 'u8[32768]{0}', space=vmem, size = 0x8000, scoped, tag = 'input window, operand 8, single buffered']
    #allocation17 [shape = 'u8[512]{0}', space=vmem, size = 0x400, scoped, tag = 'input window, operand 9, single buffered']
    #allocation18 [shape = 's32[1]{0}', space=sflag, size = 0x4, scoped, tag = 'scoped memory for encoder_processor_decoder.11']
    #allocation19 [shape = 'u8[512]{0}', space=vmem, size = 0x400, scoped, tag = 'input window, operand 10, single buffered']
    #allocation20 [shape = 'u8[512]{0}', space=vmem, size = 0x400, scoped, tag = 'input window, operand 11, single buffered']
    #allocation21 [shape = 's32[1]{0}', space=sflag, size = 0x4, scoped, tag = 'scoped memory for encoder_processor_decoder.11']
    #allocation22 [shape = 'u8[32768]{0}', space=vmem, size = 0x8000, scoped, tag = 'input window, operand 12, single buffered']
    #allocation23 [shape = 'u8[512]{0}', space=vmem, size = 0x400, scoped, tag = 'input window, operand 13, single buffered']
    #allocation24 [shape = 's32[1]{0}', space=sflag, size = 0x4, scoped, tag = 'scoped memory for encoder_processor_decoder.11']
    #allocation25 [shape = 'u8[32768]{0}', space=vmem, size = 0x8000, scoped, tag = 'input window, operand 14, single buffered']
    #allocation26 [shape = 'u8[512]{0}', space=vmem, size = 0x400, scoped, tag = 'input window, operand 15, single buffered']
    #allocation27 [shape = 's32[1]{0}', space=sflag, size = 0x4, scoped, tag = 'scoped memory for encoder_processor_decoder.11']
    #allocation28 [shape = 'u8[32768]{0}', space=vmem, size = 0x8000, scoped, tag = 'input window, operand 16, single buffered']
    #allocation29 [shape = 'u8[512]{0}', space=vmem, size = 0x400, scoped, tag = 'input window, operand 17, single buffered']
    #allocation30 [shape = 's32[1]{0}', space=sflag, size = 0x4, scoped, tag = 'scoped memory for encoder_processor_decoder.11']
    #allocation31 [shape = 'u8[512]{0}', space=vmem, size = 0x400, scoped, tag = 'input window, operand 18, single buffered']
    #allocation32 [shape = 'u8[512]{0}', space=vmem, size = 0x400, scoped, tag = 'input window, operand 19, single buffered']
    #allocation33 [shape = 's32[1]{0}', space=sflag, size = 0x4, scoped, tag = 'scoped memory for encoder_processor_decoder.11']
    #allocation34 [shape = 'u8[8192]{0}', space=vmem, size = 0x2000, scoped, tag = 'output window, operand 0, single buffered']
    %25 = vsyncpa [#allocation3], 0
    %26 = vsyncpa [#allocation6], 0
    %27 = vsyncpa [#allocation9], 0
    %28 = vsyncpa [#allocation12], 0
    %29 = vsyncpa [#allocation15], 0
    %30 = vsyncpa [#allocation18], 0
    %31 = vsyncpa [#allocation21], 0
    %32 = vsyncpa [#allocation24], 0
    %33 = vsyncpa [#allocation27], 0
    %34 = vsyncpa [#allocation30], 0
    %35 = vsyncpa [#allocation33], 0
    %36 = vsyncpa [#allocation4], 0
    // Predicated region
    $region2: #{encoder_processor_decoder.11} parent=1 // pred_check
      _
    $region3: #{encoder_processor_decoder.11} parent=1 // pred_check_branch
      %38 = sbr.rel (0) target = $region5
    $region4: #{encoder_processor_decoder.11} parent=1 // pred_region
      %s40 = ssub.s32 256, 256
      %41 = vsyncadd [#allocation3], %s40
      %s42 = sshll.u32 [#allocation2], 4
      %s43 = int_to_ptr.vmem [resolvable:$true] %s42
      %48 = dma.hbm_to_vmem [thread:$0]  %s0, 256, %s43, [#allocation3], 128, 128, 8
    $region5: #{encoder_processor_decoder.11} parent=1 // pred_fallthru
      _
    // Predicated region
    $region6: #{encoder_processor_decoder.11} parent=1 // pred_check
      _
    $region7: #{encoder_processor_decoder.11} parent=1 // pred_check_branch
      %50 = sbr.rel (0) target = $region9
    $region8: #{encoder_processor_decoder.11} parent=1 // pred_region
      %s52 = ssub.s32 256, 256
      %53 = vsyncadd [#allocation6], %s52
      %s54 = sshll.u32 [#allocation5], 4
      %s55 = int_to_ptr.vmem [resolvable:$true] %s54
      %60 = dma.hbm_to_vmem [thread:$0]  %s1, 256, %s55, [#allocation6], 128, 128, 8
    $region9: #{encoder_processor_decoder.11} parent=1 // pred_fallthru
      _
    // Predicated region
    $region10: #{encoder_processor_decoder.11} parent=1 // pred_check
      _
    $region11: #{encoder_processor_decoder.11} parent=1 // pred_check_branch
      %62 = sbr.rel (0) target = $region13
    $region12: #{encoder_processor_decoder.11} parent=1 // pred_region
      %s64 = ssub.s32 256, 256
      %65 = vsyncadd [#allocation6], %s64
      %s66 = sshll.u32 [#allocation7], 4
      %s67 = int_to_ptr.vmem [resolvable:$true] %s66
      %72 = dma.hbm_to_vmem [thread:$0]  %s2, 256, %s67, [#allocation6], 128, 128, 8
    $region13: #{encoder_processor_decoder.11} parent=1 // pred_fallthru
      _
    // Predicated region
    $region14: #{encoder_processor_decoder.11} parent=1 // pred_check
      _
    $region15: #{encoder_processor_decoder.11} parent=1 // pred_check_branch
      %74 = sbr.rel (0) target = $region17
    $region16: #{encoder_processor_decoder.11} parent=1 // pred_region
      %s76 = ssub.s32 1024, 1024
      %77 = vsyncadd [#allocation9], %s76
      %s78 = sshll.u32 [#allocation8], 4
      %s79 = int_to_ptr.vmem [resolvable:$true] %s78
      %84 = dma.hbm_to_vmem [thread:$0]  %s3, 1024, %s79, [#allocation9], 64, 64, 4
    $region17: #{encoder_processor_decoder.11} parent=1 // pred_fallthru
      _
    // Predicated region
    $region18: #{encoder_processor_decoder.11} parent=1 // pred_check
      _
    $region19: #{encoder_processor_decoder.11} parent=1 // pred_check_branch
      %86 = sbr.rel (0) target = $region21
    $region20: #{encoder_processor_decoder.11} parent=1 // pred_region
      %s88 = ssub.s32 1024, 1024
      %89 = vsyncadd [#allocation9], %s88
      %s90 = sshll.u32 [#allocation10], 4
      %s91 = int_to_ptr.vmem [resolvable:$true] %s90
      %96 = dma.hbm_to_vmem [thread:$0]  %s4, 1024, %s91, [#allocation9], 64, 64, 4
    $region21: #{encoder_processor_decoder.11} parent=1 // pred_fallthru
      _
    // Predicated region
    $region22: #{encoder_processor_decoder.11} parent=1 // pred_check
      _
    $region23: #{encoder_processor_decoder.11} parent=1 // pred_check_branch
      %98 = sbr.rel (0) target = $region25
    $region24: #{encoder_processor_decoder.11} parent=1 // pred_region
      %s100 = ssub.s32 16, 16
      %101 = vsyncadd [#allocation12], %s100
      %s103 = sshll.u32 [#allocation11], 4
      %s104 = int_to_ptr.vmem [resolvable:$true] %s103
      %106 = dma.hbm_to_vmem [thread:$0]  %s5, 16, %s104, [#allocation12]
    $region25: #{encoder_processor_decoder.11} parent=1 // pred_fallthru
      _
    // Predicated region
    $region26: #{encoder_processor_decoder.11} parent=1 // pred_check
      _
    $region27: #{encoder_processor_decoder.11} parent=1 // pred_check_branch
      %108 = sbr.rel (0) target = $region29
    $region28: #{encoder_processor_decoder.11} parent=1 // pred_region
      %s110 = ssub.s32 1024, 1024
      %111 = vsyncadd [#allocation12], %s110
      %s112 = sshll.u32 [#allocation13], 4
      %s113 = int_to_ptr.vmem [resolvable:$true] %s112
      %118 = dma.hbm_to_vmem [thread:$0]  %s6, 1024, %s113, [#allocation12], 64, 64, 4
    $region29: #{encoder_processor_decoder.11} parent=1 // pred_fallthru
      _
    // Predicated region
    $region30: #{encoder_processor_decoder.11} parent=1 // pred_check
      _
    $region31: #{encoder_processor_decoder.11} parent=1 // pred_check_branch
      %120 = sbr.rel (0) target = $region33
    $region32: #{encoder_processor_decoder.11} parent=1 // pred_region
      %s122 = ssub.s32 16, 16
      %123 = vsyncadd [#allocation15], %s122
      %s125 = sshll.u32 [#allocation14], 4
      %s126 = int_to_ptr.vmem [resolvable:$true] %s125
      %128 = dma.hbm_to_vmem [thread:$0]  %s7, 16, %s126, [#allocation15]
    $region33: #{encoder_processor_decoder.11} parent=1 // pred_fallthru
      _
    // Predicated region
    $region34: #{encoder_processor_decoder.11} parent=1 // pred_check
      _
    $region35: #{encoder_processor_decoder.11} parent=1 // pred_check_branch
      %130 = sbr.rel (0) target = $region37
    $region36: #{encoder_processor_decoder.11} parent=1 // pred_region
      %s132 = ssub.s32 1024, 1024
      %133 = vsyncadd [#allocation15], %s132
      %s134 = sshll.u32 [#allocation16], 4
      %s135 = int_to_ptr.vmem [resolvable:$true] %s134
      %140 = dma.hbm_to_vmem [thread:$0]  %s8, 1024, %s135, [#allocation15], 64, 64, 4
    $region37: #{encoder_processor_decoder.11} parent=1 // pred_fallthru
      _
    // Predicated region
    $region38: #{encoder_processor_decoder.11} parent=1 // pred_check
      _
    $region39: #{encoder_processor_decoder.11} parent=1 // pred_check_branch
      %142 = sbr.rel (0) target = $region41
    $region40: #{encoder_processor_decoder.11} parent=1 // pred_region
      %s144 = ssub.s32 16, 16
      %145 = vsyncadd [#allocation18], %s144
      %s147 = sshll.u32 [#allocation17], 4
      %s148 = int_to_ptr.vmem [resolvable:$true] %s147
      %150 = dma.hbm_to_vmem [thread:$0]  %s9, 16, %s148, [#allocation18]
    $region41: #{encoder_processor_decoder.11} parent=1 // pred_fallthru
      _
    // Predicated region
    $region42: #{encoder_processor_decoder.11} parent=1 // pred_check
      _
    $region43: #{encoder_processor_decoder.11} parent=1 // pred_check_branch
      %152 = sbr.rel (0) target = $region45
    $region44: #{encoder_processor_decoder.11} parent=1 // pred_region
      %s154 = ssub.s32 16, 16
      %155 = vsyncadd [#allocation18], %s154
      %s157 = sshll.u32 [#allocation19], 4
      %s158 = int_to_ptr.vmem [resolvable:$true] %s157
      %160 = dma.hbm_to_vmem [thread:$0]  %s10, 16, %s158, [#allocation18]
    $region45: #{encoder_processor_decoder.11} parent=1 // pred_fallthru
      _
    // Predicated region
    $region46: #{encoder_processor_decoder.11} parent=1 // pred_check
      _
    $region47: #{encoder_processor_decoder.11} parent=1 // pred_check_branch
      %162 = sbr.rel (0) target = $region49
    $region48: #{encoder_processor_decoder.11} parent=1 // pred_region
      %s164 = ssub.s32 16, 16
      %165 = vsyncadd [#allocation21], %s164
      %s167 = sshll.u32 [#allocation20], 4
      %s168 = int_to_ptr.vmem [resolvable:$true] %s167
      %170 = dma.hbm_to_vmem [thread:$0]  %s11, 16, %s168, [#allocation21]
    $region49: #{encoder_processor_decoder.11} parent=1 // pred_fallthru
      _
    // Predicated region
    $region50: #{encoder_processor_decoder.11} parent=1 // pred_check
      _
    $region51: #{encoder_processor_decoder.11} parent=1 // pred_check_branch
      %172 = sbr.rel (0) target = $region53
    $region52: #{encoder_processor_decoder.11} parent=1 // pred_region
      %s174 = ssub.s32 1024, 1024
      %175 = vsyncadd [#allocation21], %s174
      %s176 = sshll.u32 [#allocation22], 4
      %s177 = int_to_ptr.vmem [resolvable:$true] %s176
      %182 = dma.hbm_to_vmem [thread:$0]  %s12, 1024, %s177, [#allocation21], 64, 64, 4
    $region53: #{encoder_processor_decoder.11} parent=1 // pred_fallthru
      _
    // Predicated region
    $region54: #{encoder_processor_decoder.11} parent=1 // pred_check
      _
    $region55: #{encoder_processor_decoder.11} parent=1 // pred_check_branch
      %184 = sbr.rel (0) target = $region57
    $region56: #{encoder_processor_decoder.11} parent=1 // pred_region
      %s186 = ssub.s32 16, 16
      %187 = vsyncadd [#allocation24], %s186
      %s189 = sshll.u32 [#allocation23], 4
      %s190 = int_to_ptr.vmem [resolvable:$true] %s189
      %192 = dma.hbm_to_vmem [thread:$0]  %s13, 16, %s190, [#allocation24]
    $region57: #{encoder_processor_decoder.11} parent=1 // pred_fallthru
      _
    // Predicated region
    $region58: #{encoder_processor_decoder.11} parent=1 // pred_check
      _
    $region59: #{encoder_processor_decoder.11} parent=1 // pred_check_branch
      %194 = sbr.rel (0) target = $region61
    $region60: #{encoder_processor_decoder.11} parent=1 // pred_region
      %s196 = ssub.s32 1024, 1024
      %197 = vsyncadd [#allocation24], %s196
      %s198 = sshll.u32 [#allocation25], 4
      %s199 = int_to_ptr.vmem [resolvable:$true] %s198
      %204 = dma.hbm_to_vmem [thread:$0]  %s14, 1024, %s199, [#allocation24], 64, 64, 4
    $region61: #{encoder_processor_decoder.11} parent=1 // pred_fallthru
      _
    // Predicated region
    $region62: #{encoder_processor_decoder.11} parent=1 // pred_check
      _
    $region63: #{encoder_processor_decoder.11} parent=1 // pred_check_branch
      %206 = sbr.rel (0) target = $region65
    $region64: #{encoder_processor_decoder.11} parent=1 // pred_region
      %s208 = ssub.s32 16, 16
      %209 = vsyncadd [#allocation27], %s208
      %s211 = sshll.u32 [#allocation26], 4
      %s212 = int_to_ptr.vmem [resolvable:$true] %s211
      %214 = dma.hbm_to_vmem [thread:$0]  %s15, 16, %s212, [#allocation27]
    $region65: #{encoder_processor_decoder.11} parent=1 // pred_fallthru
      _
    // Predicated region
    $region66: #{encoder_processor_decoder.11} parent=1 // pred_check
      _
    $region67: #{encoder_processor_decoder.11} parent=1 // pred_check_branch
      %216 = sbr.rel (0) target = $region69
    $region68: #{encoder_processor_decoder.11} parent=1 // pred_region
      %s218 = ssub.s32 1024, 1024
      %219 = vsyncadd [#allocation27], %s218
      %s220 = sshll.u32 [#allocation28], 4
      %s221 = int_to_ptr.vmem [resolvable:$true] %s220
      %226 = dma.hbm_to_vmem [thread:$0]  %s16, 1024, %s221, [#allocation27], 64, 64, 4
    $region69: #{encoder_processor_decoder.11} parent=1 // pred_fallthru
      _
    // Predicated region
    $region70: #{encoder_processor_decoder.11} parent=1 // pred_check
      _
    $region71: #{encoder_processor_decoder.11} parent=1 // pred_check_branch
      %228 = sbr.rel (0) target = $region73
    $region72: #{encoder_processor_decoder.11} parent=1 // pred_region
      %s230 = ssub.s32 16, 16
      %231 = vsyncadd [#allocation30], %s230
      %s233 = sshll.u32 [#allocation29], 4
      %s234 = int_to_ptr.vmem [resolvable:$true] %s233
      %236 = dma.hbm_to_vmem [thread:$0]  %s17, 16, %s234, [#allocation30]
    $region73: #{encoder_processor_decoder.11} parent=1 // pred_fallthru
      _
    // Predicated region
    $region74: #{encoder_processor_decoder.11} parent=1 // pred_check
      _
    $region75: #{encoder_processor_decoder.11} parent=1 // pred_check_branch
      %238 = sbr.rel (0) target = $region77
    $region76: #{encoder_processor_decoder.11} parent=1 // pred_region
      %s240 = ssub.s32 16, 16
      %241 = vsyncadd [#allocation30], %s240
      %s243 = sshll.u32 [#allocation31], 4
      %s244 = int_to_ptr.vmem [resolvable:$true] %s243
      %246 = dma.hbm_to_vmem [thread:$0]  %s18, 16, %s244, [#allocation30]
    $region77: #{encoder_processor_decoder.11} parent=1 // pred_fallthru
      _
    // Predicated region
    $region78: #{encoder_processor_decoder.11} parent=1 // pred_check
      _
    $region79: #{encoder_processor_decoder.11} parent=1 // pred_check_branch
      %248 = sbr.rel (0) target = $region81
    $region80: #{encoder_processor_decoder.11} parent=1 // pred_region
      %s250 = ssub.s32 16, 16
      %251 = vsyncadd [#allocation33], %s250
      %s253 = sshll.u32 [#allocation32], 4
      %s254 = int_to_ptr.vmem [resolvable:$true] %s253
      %256 = dma.hbm_to_vmem [thread:$0]  %s19, 16, %s254, [#allocation33]
    $region81: #{encoder_processor_decoder.11} parent=1 // pred_fallthru
      _
    // Predicated region
    $region82: #{encoder_processor_decoder.11} parent=1 // pred_check
      _
    $region83: #{encoder_processor_decoder.11} parent=1 // pred_check_branch
      %258 = sbr.rel (0) target = $region85
    $region84: #{encoder_processor_decoder.11} parent=1 // pred_region
      %259 = dma.done [#allocation3], 256
    $region85: #{encoder_processor_decoder.11} parent=1 // pred_fallthru
      _
    // Predicated region
    $region86: #{encoder_processor_decoder.11} parent=1 // pred_check
      _
    $region87: #{encoder_processor_decoder.11} parent=1 // pred_check_branch
      %261 = sbr.rel (0) target = $region89
    $region88: #{encoder_processor_decoder.11} parent=1 // pred_region
      %262 = dma.done [#allocation6], 256
    $region89: #{encoder_processor_decoder.11} parent=1 // pred_fallthru
      _
    // Predicated region
    $region90: #{encoder_processor_decoder.11} parent=1 // pred_check
      _
    $region91: #{encoder_processor_decoder.11} parent=1 // pred_check_branch
      %264 = sbr.rel (0) target = $region93
    $region92: #{encoder_processor_decoder.11} parent=1 // pred_region
      %265 = dma.done [#allocation6], 256
    $region93: #{encoder_processor_decoder.11} parent=1 // pred_fallthru
      _
    // Predicated region
    $region94: #{encoder_processor_decoder.11} parent=1 // pred_check
      _
    $region95: #{encoder_processor_decoder.11} parent=1 // pred_check_branch
      %267 = sbr.rel (0) target = $region97
    $region96: #{encoder_processor_decoder.11} parent=1 // pred_region
      %268 = dma.done [#allocation9], 1024
    $region97: #{encoder_processor_decoder.11} parent=1 // pred_fallthru
      _
    // Predicated region
    $region98: #{encoder_processor_decoder.11} parent=1 // pred_check
      _
    $region99: #{encoder_processor_decoder.11} parent=1 // pred_check_branch
      %270 = sbr.rel (0) target = $region101
    $region100: #{encoder_processor_decoder.11} parent=1 // pred_region
      %271 = dma.done [#allocation9], 1024
    $region101: #{encoder_processor_decoder.11} parent=1 // pred_fallthru
      _
    // Predicated region
    $region102: #{encoder_processor_decoder.11} parent=1 // pred_check
      _
    $region103: #{encoder_processor_decoder.11} parent=1 // pred_check_branch
      %273 = sbr.rel (0) target = $region105
    $region104: #{encoder_processor_decoder.11} parent=1 // pred_region
      %274 = dma.done [#allocation12], 16
    $region105: #{encoder_processor_decoder.11} parent=1 // pred_fallthru
      _
    // Predicated region
    $region106: #{encoder_processor_decoder.11} parent=1 // pred_check
      _
    $region107: #{encoder_processor_decoder.11} parent=1 // pred_check_branch
      %276 = sbr.rel (0) target = $region109
    $region108: #{encoder_processor_decoder.11} parent=1 // pred_region
      %277 = dma.done [#allocation12], 1024
    $region109: #{encoder_processor_decoder.11} parent=1 // pred_fallthru
      _
    // Predicated region
    $region110: #{encoder_processor_decoder.11} parent=1 // pred_check
      _
    $region111: #{encoder_processor_decoder.11} parent=1 // pred_check_branch
      %279 = sbr.rel (0) target = $region113
    $region112: #{encoder_processor_decoder.11} parent=1 // pred_region
      %280 = dma.done [#allocation15], 16
    $region113: #{encoder_processor_decoder.11} parent=1 // pred_fallthru
      _
    // Predicated region
    $region114: #{encoder_processor_decoder.11} parent=1 // pred_check
      _
    $region115: #{encoder_processor_decoder.11} parent=1 // pred_check_branch
      %282 = sbr.rel (0) target = $region117
    $region116: #{encoder_processor_decoder.11} parent=1 // pred_region
      %283 = dma.done [#allocation15], 1024
    $region117: #{encoder_processor_decoder.11} parent=1 // pred_fallthru
      _
    // Predicated region
    $region118: #{encoder_processor_decoder.11} parent=1 // pred_check
      _
    $region119: #{encoder_processor_decoder.11} parent=1 // pred_check_branch
      %285 = sbr.rel (0) target = $region121
    $region120: #{encoder_processor_decoder.11} parent=1 // pred_region
      %286 = dma.done [#allocation18], 16
    $region121: #{encoder_processor_decoder.11} parent=1 // pred_fallthru
      _
    // Predicated region
    $region122: #{encoder_processor_decoder.11} parent=1 // pred_check
      _
    $region123: #{encoder_processor_decoder.11} parent=1 // pred_check_branch
      %288 = sbr.rel (0) target = $region125
    $region124: #{encoder_processor_decoder.11} parent=1 // pred_region
      %289 = dma.done [#allocation18], 16
    $region125: #{encoder_processor_decoder.11} parent=1 // pred_fallthru
      _
    // Predicated region
    $region126: #{encoder_processor_decoder.11} parent=1 // pred_check
      _
    $region127: #{encoder_processor_decoder.11} parent=1 // pred_check_branch
      %291 = sbr.rel (0) target = $region129
    $region128: #{encoder_processor_decoder.11} parent=1 // pred_region
      %292 = dma.done [#allocation21], 16
    $region129: #{encoder_processor_decoder.11} parent=1 // pred_fallthru
      _
    // Predicated region
    $region130: #{encoder_processor_decoder.11} parent=1 // pred_check
      _
    $region131: #{encoder_processor_decoder.11} parent=1 // pred_check_branch
      %294 = sbr.rel (0) target = $region133
    $region132: #{encoder_processor_decoder.11} parent=1 // pred_region
      %295 = dma.done [#allocation21], 1024
    $region133: #{encoder_processor_decoder.11} parent=1 // pred_fallthru
      _
    // Predicated region
    $region134: #{encoder_processor_decoder.11} parent=1 // pred_check
      _
    $region135: #{encoder_processor_decoder.11} parent=1 // pred_check_branch
      %297 = sbr.rel (0) target = $region137
    $region136: #{encoder_processor_decoder.11} parent=1 // pred_region
      %298 = dma.done [#allocation24], 16
    $region137: #{encoder_processor_decoder.11} parent=1 // pred_fallthru
      _
    // Predicated region
    $region138: #{encoder_processor_decoder.11} parent=1 // pred_check
      _
    $region139: #{encoder_processor_decoder.11} parent=1 // pred_check_branch
      %300 = sbr.rel (0) target = $region141
    $region140: #{encoder_processor_decoder.11} parent=1 // pred_region
      %301 = dma.done [#allocation24], 1024
    $region141: #{encoder_processor_decoder.11} parent=1 // pred_fallthru
      _
    // Predicated region
    $region142: #{encoder_processor_decoder.11} parent=1 // pred_check
      _
    $region143: #{encoder_processor_decoder.11} parent=1 // pred_check_branch
      %303 = sbr.rel (0) target = $region145
    $region144: #{encoder_processor_decoder.11} parent=1 // pred_region
      %304 = dma.done [#allocation27], 16
    $region145: #{encoder_processor_decoder.11} parent=1 // pred_fallthru
      _
    // Predicated region
    $region146: #{encoder_processor_decoder.11} parent=1 // pred_check
      _
    $region147: #{encoder_processor_decoder.11} parent=1 // pred_check_branch
      %306 = sbr.rel (0) target = $region149
    $region148: #{encoder_processor_decoder.11} parent=1 // pred_region
      %307 = dma.done [#allocation27], 1024
    $region149: #{encoder_processor_decoder.11} parent=1 // pred_fallthru
      _
    // Predicated region
    $region150: #{encoder_processor_decoder.11} parent=1 // pred_check
      _
    $region151: #{encoder_processor_decoder.11} parent=1 // pred_check_branch
      %309 = sbr.rel (0) target = $region153
    $region152: #{encoder_processor_decoder.11} parent=1 // pred_region
      %310 = dma.done [#allocation30], 16
    $region153: #{encoder_processor_decoder.11} parent=1 // pred_fallthru
      _
    // Predicated region
    $region154: #{encoder_processor_decoder.11} parent=1 // pred_check
      _
    $region155: #{encoder_processor_decoder.11} parent=1 // pred_check_branch
      %312 = sbr.rel (0) target = $region157
    $region156: #{encoder_processor_decoder.11} parent=1 // pred_region
      %313 = dma.done [#allocation30], 16
    $region157: #{encoder_processor_decoder.11} parent=1 // pred_fallthru
      _
    // Predicated region
    $region158: #{encoder_processor_decoder.11} parent=1 // pred_check
      _
    $region159: #{encoder_processor_decoder.11} parent=1 // pred_check_branch
      %315 = sbr.rel (0) target = $region161
    $region160: #{encoder_processor_decoder.11} parent=1 // pred_region
      %316 = dma.done [#allocation33], 16
    $region161: #{encoder_processor_decoder.11} parent=1 // pred_fallthru
      _
    %v318 = vld [vmem:[#allocation2] sm:$0xff]
    %v319 = vld [vmem:[#allocation2 + $0x8] sm:$0xff]
    %v320 = vld [vmem:[#allocation5] sm:$0xff]
    %v321 = vld [vmem:[#allocation5 + $0x8] sm:$0xff]
    %v322 = vld [vmem:[#allocation8] sm:$0xf]
    %v323 = vld [vmem:[#allocation8 + $0x4] sm:$0xf]
    %v324 = vld [vmem:[#allocation8 + $0x8] sm:$0xf]
    %v325 = vld [vmem:[#allocation8 + $0xc] sm:$0xf]
    %v326 = vld [vmem:[#allocation8 + $0x10] sm:$0xf]
    %v327 = vld [vmem:[#allocation8 + $0x14] sm:$0xf]
    %v328 = vld [vmem:[#allocation8 + $0x18] sm:$0xf]
    %v329 = vld [vmem:[#allocation8 + $0x1c] sm:$0xf]
    %v330 = vld [vmem:[#allocation8 + $0x20] sm:$0xf]
    %v331 = vld [vmem:[#allocation8 + $0x24] sm:$0xf]
    %v332 = vld [vmem:[#allocation8 + $0x28] sm:$0xf]
    %v333 = vld [vmem:[#allocation8 + $0x2c] sm:$0xf]
    %v334 = vld [vmem:[#allocation8 + $0x30] sm:$0xf]
    %v335 = vld [vmem:[#allocation8 + $0x34] sm:$0xf]
    %v336 = vld [vmem:[#allocation8 + $0x38] sm:$0xf]
    %v337 = vld [vmem:[#allocation8 + $0x3c] sm:$0xf]
    %v338 = vld [vmem:[#allocation10] sm:$0xf]
    %v339 = vld [vmem:[#allocation10 + $0x4] sm:$0xf]
    %v340 = vld [vmem:[#allocation10 + $0x8] sm:$0xf]
    %v341 = vld [vmem:[#allocation10 + $0xc] sm:$0xf]
    %v342 = vld [vmem:[#allocation10 + $0x10] sm:$0xf]
    %v343 = vld [vmem:[#allocation10 + $0x14] sm:$0xf]
    %v344 = vld [vmem:[#allocation10 + $0x18] sm:$0xf]
    %v345 = vld [vmem:[#allocation10 + $0x1c] sm:$0xf]
    %v346 = vld [vmem:[#allocation10 + $0x20] sm:$0xf]
    %v347 = vld [vmem:[#allocation10 + $0x24] sm:$0xf]
    %v348 = vld [vmem:[#allocation10 + $0x28] sm:$0xf]
    %v349 = vld [vmem:[#allocation10 + $0x2c] sm:$0xf]
    %v350 = vld [vmem:[#allocation10 + $0x30] sm:$0xf]
    %v351 = vld [vmem:[#allocation10 + $0x34] sm:$0xf]
    %v352 = vld [vmem:[#allocation10 + $0x38] sm:$0xf]
    %v353 = vld [vmem:[#allocation10 + $0x3c] sm:$0xf]
    %v354 = vld [vmem:[#allocation11] sm:$0x1]
    %v355 = vld [vmem:[#allocation13] sm:$0xf]
    %v356 = vld [vmem:[#allocation13 + $0x4] sm:$0xf]
    %v357 = vld [vmem:[#allocation13 + $0x8] sm:$0xf]
    %v358 = vld [vmem:[#allocation13 + $0xc] sm:$0xf]
    %v359 = vld [vmem:[#allocation13 + $0x10] sm:$0xf]
    %v360 = vld [vmem:[#allocation13 + $0x14] sm:$0xf]
    %v361 = vld [vmem:[#allocation13 + $0x18] sm:$0xf]
    %v362 = vld [vmem:[#allocation13 + $0x1c] sm:$0xf]
    %v363 = vld [vmem:[#allocation13 + $0x20] sm:$0xf]
    %v364 = vld [vmem:[#allocation13 + $0x24] sm:$0xf]
    %v365 = vld [vmem:[#allocation13 + $0x28] sm:$0xf]
    %v366 = vld [vmem:[#allocation13 + $0x2c] sm:$0xf]
    %v367 = vld [vmem:[#allocation13 + $0x30] sm:$0xf]
    %v368 = vld [vmem:[#allocation13 + $0x34] sm:$0xf]
    %v369 = vld [vmem:[#allocation13 + $0x38] sm:$0xf]
    %v370 = vld [vmem:[#allocation13 + $0x3c] sm:$0xf]
    %v371 = vld [vmem:[#allocation14] sm:$0x1]
    %v372 = vld [vmem:[#allocation16] sm:$0xf]
    %v373 = vld [vmem:[#allocation16 + $0x4] sm:$0xf]
    %v374 = vld [vmem:[#allocation16 + $0x8] sm:$0xf]
    %v375 = vld [vmem:[#allocation16 + $0xc] sm:$0xf]
    %v376 = vld [vmem:[#allocation16 + $0x10] sm:$0xf]
    %v377 = vld [vmem:[#allocation16 + $0x14] sm:$0xf]
    %v378 = vld [vmem:[#allocation16 + $0x18] sm:$0xf]
    %v379 = vld [vmem:[#allocation16 + $0x1c] sm:$0xf]
    %v380 = vld [vmem:[#allocation16 + $0x20] sm:$0xf]
    %v381 = vld [vmem:[#allocation16 + $0x24] sm:$0xf]
    %v382 = vld [vmem:[#allocation16 + $0x28] sm:$0xf]
    %v383 = vld [vmem:[#allocation16 + $0x2c] sm:$0xf]
    %v384 = vld [vmem:[#allocation16 + $0x30] sm:$0xf]
    %v385 = vld [vmem:[#allocation16 + $0x34] sm:$0xf]
    %v386 = vld [vmem:[#allocation16 + $0x38] sm:$0xf]
    %v387 = vld [vmem:[#allocation16 + $0x3c] sm:$0xf]
    %v388 = vld [vmem:[#allocation17] sm:$0x1]
    %v389 = vld [vmem:[#allocation19] sm:$0x1]
    %v390 = vld [vmem:[#allocation20] sm:$0x1]
    %v391 = vld [vmem:[#allocation22] sm:$0xf]
    %v392 = vld [vmem:[#allocation22 + $0x4] sm:$0xf]
    %v393 = vld [vmem:[#allocation22 + $0x8] sm:$0xf]
    %v394 = vld [vmem:[#allocation22 + $0xc] sm:$0xf]
    %v395 = vld [vmem:[#allocation22 + $0x10] sm:$0xf]
    %v396 = vld [vmem:[#allocation22 + $0x14] sm:$0xf]
    %v397 = vld [vmem:[#allocation22 + $0x18] sm:$0xf]
    %v398 = vld [vmem:[#allocation22 + $0x1c] sm:$0xf]
    %v399 = vld [vmem:[#allocation22 + $0x20] sm:$0xf]
    %v400 = vld [vmem:[#allocation22 + $0x24] sm:$0xf]
    %v401 = vld [vmem:[#allocation22 + $0x28] sm:$0xf]
    %v402 = vld [vmem:[#allocation22 + $0x2c] sm:$0xf]
    %v403 = vld [vmem:[#allocation22 + $0x30] sm:$0xf]
    %v404 = vld [vmem:[#allocation22 + $0x34] sm:$0xf]
    %v405 = vld [vmem:[#allocation22 + $0x38] sm:$0xf]
    %v406 = vld [vmem:[#allocation22 + $0x3c] sm:$0xf]
    %v407 = vld [vmem:[#allocation23] sm:$0x1]
    %v408 = vld [vmem:[#allocation25] sm:$0xf]
    %v409 = vld [vmem:[#allocation25 + $0x4] sm:$0xf]
    %v410 = vld [vmem:[#allocation25 + $0x8] sm:$0xf]
    %v411 = vld [vmem:[#allocation25 + $0xc] sm:$0xf]
    %v412 = vld [vmem:[#allocation25 + $0x10] sm:$0xf]
    %v413 = vld [vmem:[#allocation25 + $0x14] sm:$0xf]
    %v414 = vld [vmem:[#allocation25 + $0x18] sm:$0xf]
    %v415 = vld [vmem:[#allocation25 + $0x1c] sm:$0xf]
    %v416 = vld [vmem:[#allocation25 + $0x20] sm:$0xf]
    %v417 = vld [vmem:[#allocation25 + $0x24] sm:$0xf]
    %v418 = vld [vmem:[#allocation25 + $0x28] sm:$0xf]
    %v419 = vld [vmem:[#allocation25 + $0x2c] sm:$0xf]
    %v420 = vld [vmem:[#allocation25 + $0x30] sm:$0xf]
    %v421 = vld [vmem:[#allocation25 + $0x34] sm:$0xf]
    %v422 = vld [vmem:[#allocation25 + $0x38] sm:$0xf]
    %v423 = vld [vmem:[#allocation25 + $0x3c] sm:$0xf]
    %v424 = vld [vmem:[#allocation26] sm:$0x1]
    %v425 = vld [vmem:[#allocation28] sm:$0xf]
    %v426 = vld [vmem:[#allocation28 + $0x4] sm:$0xf]
    %v427 = vld [vmem:[#allocation28 + $0x8] sm:$0xf]
    %v428 = vld [vmem:[#allocation28 + $0xc] sm:$0xf]
    %v429 = vld [vmem:[#allocation28 + $0x10] sm:$0xf]
    %v430 = vld [vmem:[#allocation28 + $0x14] sm:$0xf]
    %v431 = vld [vmem:[#allocation28 + $0x18] sm:$0xf]
    %v432 = vld [vmem:[#allocation28 + $0x1c] sm:$0xf]
    %v433 = vld [vmem:[#allocation28 + $0x20] sm:$0xf]
    %v434 = vld [vmem:[#allocation28 + $0x24] sm:$0xf]
    %v435 = vld [vmem:[#allocation28 + $0x28] sm:$0xf]
    %v436 = vld [vmem:[#allocation28 + $0x2c] sm:$0xf]
    %v437 = vld [vmem:[#allocation28 + $0x30] sm:$0xf]
    %v438 = vld [vmem:[#allocation28 + $0x34] sm:$0xf]
    %v439 = vld [vmem:[#allocation28 + $0x38] sm:$0xf]
    %v440 = vld [vmem:[#allocation28 + $0x3c] sm:$0xf]
    %v441 = vld [vmem:[#allocation29] sm:$0x1]
    %v442 = vld [vmem:[#allocation31] sm:$0x1]
    %v443 = vld [vmem:[#allocation32] sm:$0x1]
    %v444 = vpack.c.bf16 %v319, %v318
    %v445 = vpack.c.bf16 %v321, %v320
    %v462 = vunpack.c.l.b16 %v338
    %v463 = vunpack.c.l.b16 %v339
    %v464 = vunpack.c.l.b16 %v340
    %v465 = vunpack.c.l.b16 %v341
    %v466 = vunpack.c.l.b16 %v342
    %v467 = vunpack.c.l.b16 %v343
    %v468 = vunpack.c.l.b16 %v344
    %v469 = vunpack.c.l.b16 %v345
    %v470 = vunpack.c.l.b16 %v346
    %v471 = vunpack.c.l.b16 %v347
    %v472 = vunpack.c.l.b16 %v348
    %v473 = vunpack.c.l.b16 %v349
    %v474 = vunpack.c.l.b16 %v350
    %v475 = vunpack.c.l.b16 %v351
    %v476 = vunpack.c.l.b16 %v352
    %v477 = vunpack.c.l.b16 %v353
    %v478 = vpack.c.b16 %v463, %v462
    %v479 = vpack.c.b16 %v465, %v464
    %v480 = vpack.c.b16 %v467, %v466
    %v481 = vpack.c.b16 %v469, %v468
    %v482 = vpack.c.b16 %v471, %v470
    %v483 = vpack.c.b16 %v473, %v472
    %v484 = vpack.c.b16 %v475, %v474
    %v485 = vpack.c.b16 %v477, %v476
    %494 = vmatprep.subr.bf16.mxu0 0
    %495 = vmatpush1.bf16.msra.mxu0 %v478
    %496 = vmatprep.subr.bf16.mxu0 0
    %497 = vmatpush1.bf16.msra.mxu0 %v479
    %498 = vmatprep.subr.bf16.mxu0 0
    %499 = vmatpush1.bf16.msra.mxu0 %v480
    %500 = vmatprep.subr.bf16.mxu0 0
    %501 = vmatpush1.bf16.msra.mxu0 %v481
    %502 = vmatprep.subr.bf16.mxu0 0
    %503 = vmatpush1.bf16.msra.mxu0 %v482
    %504 = vmatprep.subr.bf16.mxu0 0
    %505 = vmatpush1.bf16.msra.mxu0 %v483
    %506 = vmatprep.subr.bf16.mxu0 0
    %507 = vmatpush1.bf16.msra.mxu0 %v484
    %508 = vmatprep.subr.bf16.mxu0 0
    %509 = vmatpush1.bf16.msra.mxu0 %v485
    %510 = vmatprep.subr.bf16.mxu0 0
    %511 = vmatpush1.bf16.msra.mxu0 0
    %512 = vmatprep.subr.bf16.mxu0 0
    %513 = vmatpush1.bf16.msra.mxu0 0
    %514 = vmatprep.subr.bf16.mxu0 0
    %515 = vmatpush1.bf16.msra.mxu0 0
    %516 = vmatprep.subr.bf16.mxu0 0
    %517 = vmatpush1.bf16.msra.mxu0 0
    %518 = vmatprep.subr.bf16.mxu0 0
    %519 = vmatpush1.bf16.msra.mxu0 0
    %520 = vmatprep.subr.bf16.mxu0 0
    %521 = vmatpush1.bf16.msra.mxu0 0
    %522 = vmatprep.subr.bf16.mxu0 0
    %523 = vmatpush1.bf16.msra.mxu0 0
    %524 = vmatprep.subr.bf16.mxu0 0
    %525 = vmatpush1.bf16.msra.mxu0 0
    %526 = vmatprep.mubr.bf16.mxu0 0
    %527 = vmatmul.mubr.bf16.gmra.mrb[0].mxu0 %v445
    %v528 = vpop.f32.mrb[0].mxu0
    %v529 = vadd.f32 0.0, %v528
    %v530 = vpop.f32.mrb[0].mxu0
    %v531 = vpop.f32.mrb[0].mxu0
    %v532 = vadd.f32 0.0, %v531
    %v533 = vpop.f32.mrb[0].mxu0
    %534 = vdwg.mxu0
    %v551 = vunpack.c.l.b16 %v322
    %v552 = vunpack.c.l.b16 %v323
    %v553 = vunpack.c.l.b16 %v324
    %v554 = vunpack.c.l.b16 %v325
    %v555 = vunpack.c.l.b16 %v326
    %v556 = vunpack.c.l.b16 %v327
    %v557 = vunpack.c.l.b16 %v328
    %v558 = vunpack.c.l.b16 %v329
    %v559 = vunpack.c.l.b16 %v330
    %v560 = vunpack.c.l.b16 %v331
    %v561 = vunpack.c.l.b16 %v332
    %v562 = vunpack.c.l.b16 %v333
    %v563 = vunpack.c.l.b16 %v334
    %v564 = vunpack.c.l.b16 %v335
    %v565 = vunpack.c.l.b16 %v336
    %v566 = vunpack.c.l.b16 %v337
    %v567 = vpack.c.b16 %v552, %v551
    %v568 = vpack.c.b16 %v554, %v553
    %v569 = vpack.c.b16 %v556, %v555
    %v570 = vpack.c.b16 %v558, %v557
    %v571 = vpack.c.b16 %v560, %v559
    %v572 = vpack.c.b16 %v562, %v561
    %v573 = vpack.c.b16 %v564, %v563
    %v574 = vpack.c.b16 %v566, %v565
    %583 = vmatprep.subr.bf16.mxu0 0
    %584 = vmatpush1.bf16.msra.mxu0 %v567
    %585 = vmatprep.subr.bf16.mxu0 0
    %586 = vmatpush1.bf16.msra.mxu0 %v568
    %587 = vmatprep.subr.bf16.mxu0 0
    %588 = vmatpush1.bf16.msra.mxu0 %v569
    %589 = vmatprep.subr.bf16.mxu0 0
    %590 = vmatpush1.bf16.msra.mxu0 %v570
    %591 = vmatprep.subr.bf16.mxu0 0
    %592 = vmatpush1.bf16.msra.mxu0 %v571
    %593 = vmatprep.subr.bf16.mxu0 0
    %594 = vmatpush1.bf16.msra.mxu0 %v572
    %595 = vmatprep.subr.bf16.mxu0 0
    %596 = vmatpush1.bf16.msra.mxu0 %v573
    %597 = vmatprep.subr.bf16.mxu0 0
    %598 = vmatpush1.bf16.msra.mxu0 %v574
    %599 = vmatprep.subr.bf16.mxu0 0
    %600 = vmatpush1.bf16.msra.mxu0 0
    %601 = vmatprep.subr.bf16.mxu0 0
    %602 = vmatpush1.bf16.msra.mxu0 0
    %603 = vmatprep.subr.bf16.mxu0 0
    %604 = vmatpush1.bf16.msra.mxu0 0
    %605 = vmatprep.subr.bf16.mxu0 0
    %606 = vmatpush1.bf16.msra.mxu0 0
    %607 = vmatprep.subr.bf16.mxu0 0
    %608 = vmatpush1.bf16.msra.mxu0 0
    %609 = vmatprep.subr.bf16.mxu0 0
    %610 = vmatpush1.bf16.msra.mxu0 0
    %611 = vmatprep.subr.bf16.mxu0 0
    %612 = vmatpush1.bf16.msra.mxu0 0
    %613 = vmatprep.subr.bf16.mxu0 0
    %614 = vmatpush1.bf16.msra.mxu0 0
    %615 = vmatprep.mubr.bf16.mxu0 0
    %616 = vmatmul.mubr.bf16.gmra.mrb[0].mxu0 %v444
    %v617 = vpop.f32.mrb[0].mxu0
    %v618 = vadd.f32 %v529, %v617
    %v619 = vpop.f32.mrb[0].mxu0
    %v620 = vpop.f32.mrb[0].mxu0
    %v621 = vadd.f32 %v532, %v620
    %v622 = vpop.f32.mrb[0].mxu0
    %623 = vdwg.mxu0
    %v625 = vlaneseq
    %v626 = vshrl.u32 %v625, 7
    %v627 = vsub.s32 0, %v626
    %v628 = vrot.slane %v354, %v627
    %v630 = vadd.f32 %v618, %v628
    %v631 = vadd.f32 %v621, %v628
    %v632 = vmax.f32 %v630, 0.0
    %v633 = vmax.f32 %v631, 0.0
    %v634 = vpack.c.bf16 %v633, %v632
    %v636 = vlaneseq
    %v637 = vshrl.u32 %v636, 7
    %v638 = vsub.s32 0, %v637
    %v639 = vrot.slane %v371, %v638
    %v657 = vunpack.c.l.b16 %v355
    %v658 = vunpack.c.l.b16 %v356
    %v659 = vunpack.c.l.b16 %v357
    %v660 = vunpack.c.l.b16 %v358
    %v661 = vunpack.c.l.b16 %v359
    %v662 = vunpack.c.l.b16 %v360
    %v663 = vunpack.c.l.b16 %v361
    %v664 = vunpack.c.l.b16 %v362
    %v665 = vunpack.c.l.b16 %v363
    %v666 = vunpack.c.l.b16 %v364
    %v667 = vunpack.c.l.b16 %v365
    %v668 = vunpack.c.l.b16 %v366
    %v669 = vunpack.c.l.b16 %v367
    %v670 = vunpack.c.l.b16 %v368
    %v671 = vunpack.c.l.b16 %v369
    %v672 = vunpack.c.l.b16 %v370
    %v673 = vpack.c.b16 %v658, %v657
    %v674 = vpack.c.b16 %v660, %v659
    %v675 = vpack.c.b16 %v662, %v661
    %v676 = vpack.c.b16 %v664, %v663
    %v677 = vpack.c.b16 %v666, %v665
    %v678 = vpack.c.b16 %v668, %v667
    %v679 = vpack.c.b16 %v670, %v669
    %v680 = vpack.c.b16 %v672, %v671
    %689 = vmatprep.subr.bf16.mxu0 0
    %690 = vmatpush1.bf16.msra.mxu0 %v673
    %691 = vmatprep.subr.bf16.mxu0 0
    %692 = vmatpush1.bf16.msra.mxu0 %v674
    %693 = vmatprep.subr.bf16.mxu0 0
    %694 = vmatpush1.bf16.msra.mxu0 %v675
    %695 = vmatprep.subr.bf16.mxu0 0
    %696 = vmatpush1.bf16.msra.mxu0 %v676
    %697 = vmatprep.subr.bf16.mxu0 0
    %698 = vmatpush1.bf16.msra.mxu0 %v677
    %699 = vmatprep.subr.bf16.mxu0 0
    %700 = vmatpush1.bf16.msra.mxu0 %v678
    %701 = vmatprep.subr.bf16.mxu0 0
    %702 = vmatpush1.bf16.msra.mxu0 %v679
    %703 = vmatprep.subr.bf16.mxu0 0
    %704 = vmatpush1.bf16.msra.mxu0 %v680
    %705 = vmatprep.subr.bf16.mxu0 0
    %706 = vmatpush1.bf16.msra.mxu0 0
    %707 = vmatprep.subr.bf16.mxu0 0
    %708 = vmatpush1.bf16.msra.mxu0 0
    %709 = vmatprep.subr.bf16.mxu0 0
    %710 = vmatpush1.bf16.msra.mxu0 0
    %711 = vmatprep.subr.bf16.mxu0 0
    %712 = vmatpush1.bf16.msra.mxu0 0
    %713 = vmatprep.subr.bf16.mxu0 0
    %714 = vmatpush1.bf16.msra.mxu0 0
    %715 = vmatprep.subr.bf16.mxu0 0
    %716 = vmatpush1.bf16.msra.mxu0 0
    %717 = vmatprep.subr.bf16.mxu0 0
    %718 = vmatpush1.bf16.msra.mxu0 0
    %719 = vmatprep.subr.bf16.mxu0 0
    %720 = vmatpush1.bf16.msra.mxu0 0
    %721 = vmatprep.mubr.bf16.mxu0 0
    %722 = vmatmul.mubr.bf16.gmra.mrb[0].mxu0 %v634
    %v723 = vpop.f32.mrb[0].mxu0
    %v724 = vadd.f32 %v639, %v723
    %v725 = vpop.f32.mrb[0].mxu0
    %v726 = vpop.f32.mrb[0].mxu0
    %v727 = vadd.f32 %v639, %v726
    %v728 = vpop.f32.mrb[0].mxu0
    %729 = vdwg.mxu0
    %v730 = vmax.f32 %v724, 0.0
    %v731 = vmax.f32 %v727, 0.0
    %v732 = vpack.c.bf16 %v731, %v730
    %v734 = vlaneseq
    %v735 = vshrl.u32 %v734, 7
    %v736 = vsub.s32 0, %v735
    %v737 = vrot.slane %v388, %v736
    %v755 = vunpack.c.l.b16 %v372
    %v756 = vunpack.c.l.b16 %v373
    %v757 = vunpack.c.l.b16 %v374
    %v758 = vunpack.c.l.b16 %v375
    %v759 = vunpack.c.l.b16 %v376
    %v760 = vunpack.c.l.b16 %v377
    %v761 = vunpack.c.l.b16 %v378
    %v762 = vunpack.c.l.b16 %v379
    %v763 = vunpack.c.l.b16 %v380
    %v764 = vunpack.c.l.b16 %v381
    %v765 = vunpack.c.l.b16 %v382
    %v766 = vunpack.c.l.b16 %v383
    %v767 = vunpack.c.l.b16 %v384
    %v768 = vunpack.c.l.b16 %v385
    %v769 = vunpack.c.l.b16 %v386
    %v770 = vunpack.c.l.b16 %v387
    %v771 = vpack.c.b16 %v756, %v755
    %v772 = vpack.c.b16 %v758, %v757
    %v773 = vpack.c.b16 %v760, %v759
    %v774 = vpack.c.b16 %v762, %v761
    %v775 = vpack.c.b16 %v764, %v763
    %v776 = vpack.c.b16 %v766, %v765
    %v777 = vpack.c.b16 %v768, %v767
    %v778 = vpack.c.b16 %v770, %v769
    %787 = vmatprep.subr.bf16.mxu0 0
    %788 = vmatpush1.bf16.msra.mxu0 %v771
    %789 = vmatprep.subr.bf16.mxu0 0
    %790 = vmatpush1.bf16.msra.mxu0 %v772
    %791 = vmatprep.subr.bf16.mxu0 0
    %792 = vmatpush1.bf16.msra.mxu0 %v773
    %793 = vmatprep.subr.bf16.mxu0 0
    %794 = vmatpush1.bf16.msra.mxu0 %v774
    %795 = vmatprep.subr.bf16.mxu0 0
    %796 = vmatpush1.bf16.msra.mxu0 %v775
    %797 = vmatprep.subr.bf16.mxu0 0
    %798 = vmatpush1.bf16.msra.mxu0 %v776
    %799 = vmatprep.subr.bf16.mxu0 0
    %800 = vmatpush1.bf16.msra.mxu0 %v777
    %801 = vmatprep.subr.bf16.mxu0 0
    %802 = vmatpush1.bf16.msra.mxu0 %v778
    %803 = vmatprep.subr.bf16.mxu0 0
    %804 = vmatpush1.bf16.msra.mxu0 0
    %805 = vmatprep.subr.bf16.mxu0 0
    %806 = vmatpush1.bf16.msra.mxu0 0
    %807 = vmatprep.subr.bf16.mxu0 0
    %808 = vmatpush1.bf16.msra.mxu0 0
    %809 = vmatprep.subr.bf16.mxu0 0
    %810 = vmatpush1.bf16.msra.mxu0 0
    %811 = vmatprep.subr.bf16.mxu0 0
    %812 = vmatpush1.bf16.msra.mxu0 0
    %813 = vmatprep.subr.bf16.mxu0 0
    %814 = vmatpush1.bf16.msra.mxu0 0
    %815 = vmatprep.subr.bf16.mxu0 0
    %816 = vmatpush1.bf16.msra.mxu0 0
    %817 = vmatprep.subr.bf16.mxu0 0
    %818 = vmatpush1.bf16.msra.mxu0 0
    %819 = vmatprep.mubr.bf16.mxu0 0
    %820 = vmatmul.mubr.bf16.gmra.mrb[0].mxu0 %v732
    %v821 = vpop.f32.mrb[0].mxu0
    %v822 = vadd.f32 %v737, %v821
    %v823 = vpop.f32.mrb[0].mxu0
    %v824 = vpop.f32.mrb[0].mxu0
    %v825 = vadd.f32 %v737, %v824
    %v826 = vpop.f32.mrb[0].mxu0
    %827 = vdwg.mxu0
    %828 = vadd.xlane.f32.xlu0 %v822
    %v829 = vpop.xlane.xlu0 %828
    %830 = vadd.xlane.f32.xlu0 %v825
    %v831 = vpop.xlane.xlu0 %830
    %v832 = vrcp.pop 128.0
    %v833 = vmul.f32 %v829, %v832
    %v834 = vmul.f32 %v831, %v832
    %v835 = vsub.f32 %v822, %v833
    %v836 = vsub.f32 %v825, %v834
    %v837 = vmul.f32 %v835, %v835
    %v838 = vmul.f32 %v836, %v836
    %839 = vadd.xlane.f32.xlu0 %v837
    %v840 = vpop.xlane.xlu0 %839
    %841 = vadd.xlane.f32.xlu0 %v838
    %v842 = vpop.xlane.xlu0 %841
    %v843 = vmul.f32 %v840, %v832
    %v844 = vmul.f32 %v842, %v832
    %v845 = vadd.f32 %v843, 1e-05
    %v846 = vadd.f32 %v844, 1e-05
    %v847 = vrsqrt.pop %v845
    %v848 = vrsqrt.pop %v846
    %v849 = vmul.f32 %v835, %v847
    %v850 = vmul.f32 %v836, %v848
    %v852 = vlaneseq
    %v853 = vshrl.u32 %v852, 7
    %v854 = vsub.s32 0, %v853
    %v855 = vrot.slane %v389, %v854
    %v857 = vmul.f32 %v849, %v855
    %v858 = vmul.f32 %v850, %v855
    %v860 = vlaneseq
    %v861 = vshrl.u32 %v860, 7
    %v862 = vsub.s32 0, %v861
    %v863 = vrot.slane %v390, %v862
    %v865 = vadd.f32 %v857, %v863
    %v866 = vadd.f32 %v858, %v863
    %v867 = vpack.c.bf16 %v866, %v865
    %v869 = vlaneseq
    %v870 = vshrl.u32 %v869, 7
    %v871 = vsub.s32 0, %v870
    %v872 = vrot.slane %v407, %v871
    %v890 = vunpack.c.l.b16 %v391
    %v891 = vunpack.c.l.b16 %v392
    %v892 = vunpack.c.l.b16 %v393
    %v893 = vunpack.c.l.b16 %v394
    %v894 = vunpack.c.l.b16 %v395
    %v895 = vunpack.c.l.b16 %v396
    %v896 = vunpack.c.l.b16 %v397
    %v897 = vunpack.c.l.b16 %v398
    %v898 = vunpack.c.l.b16 %v399
    %v899 = vunpack.c.l.b16 %v400
    %v900 = vunpack.c.l.b16 %v401
    %v901 = vunpack.c.l.b16 %v402
    %v902 = vunpack.c.l.b16 %v403
    %v903 = vunpack.c.l.b16 %v404
    %v904 = vunpack.c.l.b16 %v405
    %v905 = vunpack.c.l.b16 %v406
    %v906 = vpack.c.b16 %v891, %v890
    %v907 = vpack.c.b16 %v893, %v892
    %v908 = vpack.c.b16 %v895, %v894
    %v909 = vpack.c.b16 %v897, %v896
    %v910 = vpack.c.b16 %v899, %v898
    %v911 = vpack.c.b16 %v901, %v900
    %v912 = vpack.c.b16 %v903, %v902
    %v913 = vpack.c.b16 %v905, %v904
    %922 = vmatprep.subr.bf16.mxu0 0
    %923 = vmatpush1.bf16.msra.mxu0 %v906
    %924 = vmatprep.subr.bf16.mxu0 0
    %925 = vmatpush1.bf16.msra.mxu0 %v907
    %926 = vmatprep.subr.bf16.mxu0 0
    %927 = vmatpush1.bf16.msra.mxu0 %v908
    %928 = vmatprep.subr.bf16.mxu0 0
    %929 = vmatpush1.bf16.msra.mxu0 %v909
    %930 = vmatprep.subr.bf16.mxu0 0
    %931 = vmatpush1.bf16.msra.mxu0 %v910
    %932 = vmatprep.subr.bf16.mxu0 0
    %933 = vmatpush1.bf16.msra.mxu0 %v911
    %934 = vmatprep.subr.bf16.mxu0 0
    %935 = vmatpush1.bf16.msra.mxu0 %v912
    %936 = vmatprep.subr.bf16.mxu0 0
    %937 = vmatpush1.bf16.msra.mxu0 %v913
    %938 = vmatprep.subr.bf16.mxu0 0
    %939 = vmatpush1.bf16.msra.mxu0 0
    %940 = vmatprep.subr.bf16.mxu0 0
    %941 = vmatpush1.bf16.msra.mxu0 0
    %942 = vmatprep.subr.bf16.mxu0 0
    %943 = vmatpush1.bf16.msra.mxu0 0
    %944 = vmatprep.subr.bf16.mxu0 0
    %945 = vmatpush1.bf16.msra.mxu0 0
    %946 = vmatprep.subr.bf16.mxu0 0
    %947 = vmatpush1.bf16.msra.mxu0 0
    %948 = vmatprep.subr.bf16.mxu0 0
    %949 = vmatpush1.bf16.msra.mxu0 0
    %950 = vmatprep.subr.bf16.mxu0 0
    %951 = vmatpush1.bf16.msra.mxu0 0
    %952 = vmatprep.subr.bf16.mxu0 0
    %953 = vmatpush1.bf16.msra.mxu0 0
    %954 = vmatprep.mubr.bf16.mxu0 0
    %955 = vmatmul.mubr.bf16.gmra.mrb[0].mxu0 %v867
    %v956 = vpop.f32.mrb[0].mxu0
    %v957 = vadd.f32 %v872, %v956
    %v958 = vpop.f32.mrb[0].mxu0
    %v959 = vpop.f32.mrb[0].mxu0
    %v960 = vadd.f32 %v872, %v959
    %v961 = vpop.f32.mrb[0].mxu0
    %962 = vdwg.mxu0
    %v963 = vmax.f32 %v957, 0.0
    %v964 = vmax.f32 %v960, 0.0
    %v965 = vpack.c.bf16 %v964, %v963
    %v967 = vlaneseq
    %v968 = vshrl.u32 %v967, 7
    %v969 = vsub.s32 0, %v968
    %v970 = vrot.slane %v424, %v969
    %v988 = vunpack.c.l.b16 %v408
    %v989 = vunpack.c.l.b16 %v409
    %v990 = vunpack.c.l.b16 %v410
    %v991 = vunpack.c.l.b16 %v411
    %v992 = vunpack.c.l.b16 %v412
    %v993 = vunpack.c.l.b16 %v413
    %v994 = vunpack.c.l.b16 %v414
    %v995 = vunpack.c.l.b16 %v415
    %v996 = vunpack.c.l.b16 %v416
    %v997 = vunpack.c.l.b16 %v417
    %v998 = vunpack.c.l.b16 %v418
    %v999 = vunpack.c.l.b16 %v419
    %v1000 = vunpack.c.l.b16 %v420
    %v1001 = vunpack.c.l.b16 %v421
    %v1002 = vunpack.c.l.b16 %v422
    %v1003 = vunpack.c.l.b16 %v423
    %v1004 = vpack.c.b16 %v989, %v988
    %v1005 = vpack.c.b16 %v991, %v990
    %v1006 = vpack.c.b16 %v993, %v992
    %v1007 = vpack.c.b16 %v995, %v994
    %v1008 = vpack.c.b16 %v997, %v996
    %v1009 = vpack.c.b16 %v999, %v998
    %v1010 = vpack.c.b16 %v1001, %v1000
    %v1011 = vpack.c.b16 %v1003, %v1002
    %1020 = vmatprep.subr.bf16.mxu0 0
    %1021 = vmatpush1.bf16.msra.mxu0 %v1004
    %1022 = vmatprep.subr.bf16.mxu0 0
    %1023 = vmatpush1.bf16.msra.mxu0 %v1005
    %1024 = vmatprep.subr.bf16.mxu0 0
    %1025 = vmatpush1.bf16.msra.mxu0 %v1006
    %1026 = vmatprep.subr.bf16.mxu0 0
    %1027 = vmatpush1.bf16.msra.mxu0 %v1007
    %1028 = vmatprep.subr.bf16.mxu0 0
    %1029 = vmatpush1.bf16.msra.mxu0 %v1008
    %1030 = vmatprep.subr.bf16.mxu0 0
    %1031 = vmatpush1.bf16.msra.mxu0 %v1009
    %1032 = vmatprep.subr.bf16.mxu0 0
    %1033 = vmatpush1.bf16.msra.mxu0 %v1010
    %1034 = vmatprep.subr.bf16.mxu0 0
    %1035 = vmatpush1.bf16.msra.mxu0 %v1011
    %1036 = vmatprep.subr.bf16.mxu0 0
    %1037 = vmatpush1.bf16.msra.mxu0 0
    %1038 = vmatprep.subr.bf16.mxu0 0
    %1039 = vmatpush1.bf16.msra.mxu0 0
    %1040 = vmatprep.subr.bf16.mxu0 0
    %1041 = vmatpush1.bf16.msra.mxu0 0
    %1042 = vmatprep.subr.bf16.mxu0 0
    %1043 = vmatpush1.bf16.msra.mxu0 0
    %1044 = vmatprep.subr.bf16.mxu0 0
    %1045 = vmatpush1.bf16.msra.mxu0 0
    %1046 = vmatprep.subr.bf16.mxu0 0
    %1047 = vmatpush1.bf16.msra.mxu0 0
    %1048 = vmatprep.subr.bf16.mxu0 0
    %1049 = vmatpush1.bf16.msra.mxu0 0
    %1050 = vmatprep.subr.bf16.mxu0 0
    %1051 = vmatpush1.bf16.msra.mxu0 0
    %1052 = vmatprep.mubr.bf16.mxu0 0
    %1053 = vmatmul.mubr.bf16.gmra.mrb[0].mxu0 %v965
    %v1054 = vpop.f32.mrb[0].mxu0
    %v1055 = vadd.f32 %v970, %v1054
    %v1056 = vpop.f32.mrb[0].mxu0
    %v1057 = vpop.f32.mrb[0].mxu0
    %v1058 = vadd.f32 %v970, %v1057
    %v1059 = vpop.f32.mrb[0].mxu0
    %1060 = vdwg.mxu0
    %v1061 = vmax.f32 %v1055, 0.0
    %v1062 = vmax.f32 %v1058, 0.0
    %v1063 = vpack.c.bf16 %v1062, %v1061
    %v1065 = vlaneseq
    %v1066 = vshrl.u32 %v1065, 7
    %v1067 = vsub.s32 0, %v1066
    %v1068 = vrot.slane %v441, %v1067
    %v1086 = vunpack.c.l.b16 %v425
    %v1087 = vunpack.c.l.b16 %v426
    %v1088 = vunpack.c.l.b16 %v427
    %v1089 = vunpack.c.l.b16 %v428
    %v1090 = vunpack.c.l.b16 %v429
    %v1091 = vunpack.c.l.b16 %v430
    %v1092 = vunpack.c.l.b16 %v431
    %v1093 = vunpack.c.l.b16 %v432
    %v1094 = vunpack.c.l.b16 %v433
    %v1095 = vunpack.c.l.b16 %v434
    %v1096 = vunpack.c.l.b16 %v435
    %v1097 = vunpack.c.l.b16 %v436
    %v1098 = vunpack.c.l.b16 %v437
    %v1099 = vunpack.c.l.b16 %v438
    %v1100 = vunpack.c.l.b16 %v439
    %v1101 = vunpack.c.l.b16 %v440
    %v1102 = vpack.c.b16 %v1087, %v1086
    %v1103 = vpack.c.b16 %v1089, %v1088
    %v1104 = vpack.c.b16 %v1091, %v1090
    %v1105 = vpack.c.b16 %v1093, %v1092
    %v1106 = vpack.c.b16 %v1095, %v1094
    %v1107 = vpack.c.b16 %v1097, %v1096
    %v1108 = vpack.c.b16 %v1099, %v1098
    %v1109 = vpack.c.b16 %v1101, %v1100
    %1118 = vmatprep.subr.bf16.mxu0 0
    %1119 = vmatpush1.bf16.msra.mxu0 %v1102
    %1120 = vmatprep.subr.bf16.mxu0 0
    %1121 = vmatpush1.bf16.msra.mxu0 %v1103
    %1122 = vmatprep.subr.bf16.mxu0 0
    %1123 = vmatpush1.bf16.msra.mxu0 %v1104
    %1124 = vmatprep.subr.bf16.mxu0 0
    %1125 = vmatpush1.bf16.msra.mxu0 %v1105
    %1126 = vmatprep.subr.bf16.mxu0 0
    %1127 = vmatpush1.bf16.msra.mxu0 %v1106
    %1128 = vmatprep.subr.bf16.mxu0 0
    %1129 = vmatpush1.bf16.msra.mxu0 %v1107
    %1130 = vmatprep.subr.bf16.mxu0 0
    %1131 = vmatpush1.bf16.msra.mxu0 %v1108
    %1132 = vmatprep.subr.bf16.mxu0 0
    %1133 = vmatpush1.bf16.msra.mxu0 %v1109
    %1134 = vmatprep.subr.bf16.mxu0 0
    %1135 = vmatpush1.bf16.msra.mxu0 0
    %1136 = vmatprep.subr.bf16.mxu0 0
    %1137 = vmatpush1.bf16.msra.mxu0 0
    %1138 = vmatprep.subr.bf16.mxu0 0
    %1139 = vmatpush1.bf16.msra.mxu0 0
    %1140 = vmatprep.subr.bf16.mxu0 0
    %1141 = vmatpush1.bf16.msra.mxu0 0
    %1142 = vmatprep.subr.bf16.mxu0 0
    %1143 = vmatpush1.bf16.msra.mxu0 0
    %1144 = vmatprep.subr.bf16.mxu0 0
    %1145 = vmatpush1.bf16.msra.mxu0 0
    %1146 = vmatprep.subr.bf16.mxu0 0
    %1147 = vmatpush1.bf16.msra.mxu0 0
    %1148 = vmatprep.subr.bf16.mxu0 0
    %1149 = vmatpush1.bf16.msra.mxu0 0
    %1150 = vmatprep.mubr.bf16.mxu0 0
    %1151 = vmatmul.mubr.bf16.gmra.mrb[0].mxu0 %v1063
    %v1152 = vpop.f32.mrb[0].mxu0
    %v1153 = vadd.f32 %v1068, %v1152
    %v1154 = vpop.f32.mrb[0].mxu0
    %v1155 = vpop.f32.mrb[0].mxu0
    %v1156 = vadd.f32 %v1068, %v1155
    %v1157 = vpop.f32.mrb[0].mxu0
    %1158 = vdwg.mxu0
    %1159 = vadd.xlane.f32.xlu0 %v1153
    %v1160 = vpop.xlane.xlu0 %1159
    %1161 = vadd.xlane.f32.xlu0 %v1156
    %v1162 = vpop.xlane.xlu0 %1161
    %v1163 = vmul.f32 %v1160, %v832
    %v1164 = vmul.f32 %v1162, %v832
    %v1165 = vsub.f32 %v1153, %v1163
    %v1166 = vsub.f32 %v1156, %v1164
    %v1167 = vmul.f32 %v1165, %v1165
    %v1168 = vmul.f32 %v1166, %v1166
    %1169 = vadd.xlane.f32.xlu0 %v1167
    %v1170 = vpop.xlane.xlu0 %1169
    %1171 = vadd.xlane.f32.xlu0 %v1168
    %v1172 = vpop.xlane.xlu0 %1171
    %v1173 = vmul.f32 %v1170, %v832
    %v1174 = vmul.f32 %v1172, %v832
    %v1175 = vadd.f32 %v1173, 1e-05
    %v1176 = vadd.f32 %v1174, 1e-05
    %v1177 = vrsqrt.pop %v1175
    %v1178 = vrsqrt.pop %v1176
    %v1179 = vmul.f32 %v1165, %v1177
    %v1180 = vmul.f32 %v1166, %v1178
    %v1182 = vlaneseq
    %v1183 = vshrl.u32 %v1182, 7
    %v1184 = vsub.s32 0, %v1183
    %v1185 = vrot.slane %v442, %v1184
    %v1187 = vmul.f32 %v1179, %v1185
    %v1188 = vmul.f32 %v1180, %v1185
    %v1190 = vlaneseq
    %v1191 = vshrl.u32 %v1190, 7
    %v1192 = vsub.s32 0, %v1191
    %v1193 = vrot.slane %v443, %v1192
    %v1195 = vadd.f32 %v1187, %v1193
    %v1196 = vadd.f32 %v1188, %v1193
    %v1197 = vld [vmem:[#allocation7] sm:$0xff]
    %v1198 = vld [vmem:[#allocation7 + $0x8] sm:$0xff]
    %v1199 = vadd.f32 %v1195, %v1197
    %v1200 = vadd.f32 %v1196, %v1198
    %1201 = vst [vmem:[#allocation34] sm:$0xff] %v1199
    %1202 = vst [vmem:[#allocation34 + $0x8] sm:$0xff] %v1200
    // Predicated region
    $region162: #{encoder_processor_decoder.11} parent=1 // pred_check
      _
    $region163: #{encoder_processor_decoder.11} parent=1 // pred_check_branch
      %1204 = sbr.rel (0) target = $region165
    $region164: #{encoder_processor_decoder.11} parent=1 // pred_region
      %s1206 = ssub.s32 256, 256
      %1207 = vsyncadd [#allocation4], %s1206
      %s1208 = sshll.u32 [#allocation34], 4
      %s1209 = int_to_ptr.vmem [resolvable:$true] %s1208
      %1214 = dma.vmem_to_hbm [thread:$0]  %s1209, 256, %s20, [#allocation4], 128, 128, 8
    $region165: #{encoder_processor_decoder.11} parent=1 // pred_fallthru
      _
    // Predicated region
    $region166: #{encoder_processor_decoder.11} parent=1 // pred_check
      _
    $region167: #{encoder_processor_decoder.11} parent=1 // pred_check_branch
      %1216 = sbr.rel (0) target = $region169
    $region168: #{encoder_processor_decoder.11} parent=1 // pred_region
      %1217 = dma.done [#allocation4], 256
    $region169: #{encoder_processor_decoder.11} parent=1 // pred_fallthru
      _
    %1218 = vsyncpa [#allocation3], 1
    %1219 = vsyncpa [#allocation6], 1
    %1220 = vsyncpa [#allocation9], 1
    %1221 = vsyncpa [#allocation12], 1
    %1222 = vsyncpa [#allocation15], 1
    %1223 = vsyncpa [#allocation18], 1
    %1224 = vsyncpa [#allocation21], 1
    %1225 = vsyncpa [#allocation24], 1
    %1226 = vsyncpa [#allocation27], 1
    %1227 = vsyncpa [#allocation30], 1
    %1228 = vsyncpa [#allocation33], 1
    %1229 = vsyncpa [#allocation4], 1

// kernel: encoder_processor_decoder.10
$region0: #{encoder_processor_decoder.10}
  #allocation0 [shape = 'u32[]', space=smem, size = 0x4, offset = 0x4, fixed_abs, tag = 'smem constant byte address 0x4 - core index']
  #allocation1 [shape = 'u32[144,128]{1,0:T(1,128)}', space=vmem, size = 0x12000, scoped, tag = 'internal scratch']
  %s0 = inlined_call_operand.hbm [shape: s32[1,32], index: 0, kind: input, shape index: {}]
  %s1 = inlined_call_operand.hbm [shape: s32[32,1], index: 1, kind: input, shape index: {}]
  %s2 = inlined_call_operand.hbm [shape: s32[32,1], index: 2, kind: input, shape index: {}]
  %s3 = inlined_call_operand.hbm [shape: bf16[16,128], index: 3, kind: input, shape index: {}]
  %s4 = inlined_call_operand.hbm [shape: f32[32,128], index: 4, kind: input, shape index: {}]
  %s5 = inlined_call_operand.hbm [shape: bf16[128,128], index: 5, kind: input, shape index: {}]
  %s6 = inlined_call_operand.hbm [shape: bf16[128,128], index: 6, kind: input, shape index: {}]
  %s7 = inlined_call_operand.hbm [shape: bf16[128,128], index: 7, kind: input, shape index: {}]
  %s8 = inlined_call_operand.hbm [shape: f32[1,128], index: 8, kind: input, shape index: {}]
  %s9 = inlined_call_operand.hbm [shape: bf16[128,128], index: 9, kind: input, shape index: {}]
  %s10 = inlined_call_operand.hbm [shape: f32[1,128], index: 10, kind: input, shape index: {}]
  %s11 = inlined_call_operand.hbm [shape: bf16[128,128], index: 11, kind: input, shape index: {}]
  %s12 = inlined_call_operand.hbm [shape: f32[1,128], index: 12, kind: input, shape index: {}]
  %s13 = inlined_call_operand.hbm [shape: f32[1,128], index: 13, kind: input, shape index: {}]
  %s14 = inlined_call_operand.hbm [shape: f32[1,128], index: 14, kind: input, shape index: {}]
  %s15 = inlined_call_operand.hbm [shape: f32[16,128], index: 15, kind: output, shape index: {}]
  %s16 = sld [smem:[#allocation0]]
  $region134: #{encoder_processor_decoder.10} parent=0
    _
  %s18 = ssub.s32 1, %s16
  %s19 = scalar_select 0, %s18, %s16
  $region1: #{encoder_processor_decoder.10} parent=0
    #allocation2 [shape = 'u8[512]{0}', space=vmem, size = 0x400, scoped, tag = 'input window, operand 0, single buffered']
    #allocation3 [shape = 's32[1]{0}', space=sflag, size = 0x4, scoped, tag = 'scoped memory for encoder_processor_decoder.10']
    #allocation4 [shape = 's32[1]{0}', space=sflag, size = 0x4, scoped, tag = 'scoped memory for encoder_processor_decoder.10']
    #allocation5 [shape = 'u8[16384]{0}', space=vmem, size = 0x4000, scoped, tag = 'input window, operand 1, single buffered']
    #allocation6 [shape = 's32[1]{0}', space=sflag, size = 0x4, scoped, tag = 'scoped memory for encoder_processor_decoder.10']
    #allocation7 [shape = 'u8[16384]{0}', space=vmem, size = 0x4000, scoped, tag = 'input window, operand 2, single buffered']
    #allocation8 [shape = 'u8[4096]{0}', space=vmem, size = 0x1000, scoped, tag = 'input window, operand 3, single buffered']
    #allocation9 [shape = 's32[1]{0}', space=sflag, size = 0x4, scoped, tag = 'scoped memory for encoder_processor_decoder.10']
    #allocation10 [shape = 'u8[16384]{0}', space=vmem, size = 0x4000, scoped, tag = 'input window, operand 4, single buffered']
    #allocation11 [shape = 'u8[32768]{0}', space=vmem, size = 0x8000, scoped, tag = 'input window, operand 5, single buffered']
    #allocation12 [shape = 's32[1]{0}', space=sflag, size = 0x4, scoped, tag = 'scoped memory for encoder_processor_decoder.10']
    #allocation13 [shape = 'u8[32768]{0}', space=vmem, size = 0x8000, scoped, tag = 'input window, operand 6, single buffered']
    #allocation14 [shape = 'u8[32768]{0}', space=vmem, size = 0x8000, scoped, tag = 'input window, operand 7, single buffered']
    #allocation15 [shape = 's32[1]{0}', space=sflag, size = 0x4, scoped, tag = 'scoped memory for encoder_processor_decoder.10']
    #allocation16 [shape = 'u8[512]{0}', space=vmem, size = 0x400, scoped, tag = 'input window, operand 8, single buffered']
    #allocation17 [shape = 'u8[32768]{0}', space=vmem, size = 0x8000, scoped, tag = 'input window, operand 9, single buffered']
    #allocation18 [shape = 's32[1]{0}', space=sflag, size = 0x4, scoped, tag = 'scoped memory for encoder_processor_decoder.10']
    #allocation19 [shape = 'u8[512]{0}', space=vmem, size = 0x400, scoped, tag = 'input window, operand 10, single buffered']
    #allocation20 [shape = 'u8[32768]{0}', space=vmem, size = 0x8000, scoped, tag = 'input window, operand 11, single buffered']
    #allocation21 [shape = 's32[1]{0}', space=sflag, size = 0x4, scoped, tag = 'scoped memory for encoder_processor_decoder.10']
    #allocation22 [shape = 'u8[512]{0}', space=vmem, size = 0x400, scoped, tag = 'input window, operand 12, single buffered']
    #allocation23 [shape = 'u8[512]{0}', space=vmem, size = 0x400, scoped, tag = 'input window, operand 13, single buffered']
    #allocation24 [shape = 's32[1]{0}', space=sflag, size = 0x4, scoped, tag = 'scoped memory for encoder_processor_decoder.10']
    #allocation25 [shape = 'u8[512]{0}', space=vmem, size = 0x400, scoped, tag = 'input window, operand 14, single buffered']
    #allocation26 [shape = 'u8[8192]{0}', space=vmem, size = 0x2000, scoped, tag = 'output window, operand 0, single buffered']
    %20 = vsyncpa [#allocation3], 0
    %21 = vsyncpa [#allocation6], 0
    %22 = vsyncpa [#allocation9], 0
    %23 = vsyncpa [#allocation12], 0
    %24 = vsyncpa [#allocation15], 0
    %25 = vsyncpa [#allocation18], 0
    %26 = vsyncpa [#allocation21], 0
    %27 = vsyncpa [#allocation24], 0
    %28 = vsyncpa [#allocation4], 0
    // Predicated region
    $region2: #{encoder_processor_decoder.10} parent=1 // pred_check
      _
    $region3: #{encoder_processor_decoder.10} parent=1 // pred_check_branch
      %30 = sbr.rel (0) target = $region5
    $region4: #{encoder_processor_decoder.10} parent=1 // pred_region
      %s32 = ssub.s32 16, 16
      %33 = vsyncadd [#allocation3], %s32
      %s35 = sshll.u32 [#allocation2], 4
      %s36 = int_to_ptr.vmem [resolvable:$true] %s35
      %38 = dma.hbm_to_vmem [thread:$0]  %s0, 16, %s36, [#allocation3]
    $region5: #{encoder_processor_decoder.10} parent=1 // pred_fallthru
      _
    // Predicated region
    $region6: #{encoder_processor_decoder.10} parent=1 // pred_check
      _
    $region7: #{encoder_processor_decoder.10} parent=1 // pred_check_branch
      %40 = sbr.rel (0) target = $region9
    $region8: #{encoder_processor_decoder.10} parent=1 // pred_region
      %s42 = ssub.s32 512, 512
      %43 = vsyncadd [#allocation6], %s42
      %s44 = sshll.u32 [#allocation5], 4
      %s45 = int_to_ptr.vmem [resolvable:$true] %s44
      %50 = dma.hbm_to_vmem [thread:$0]  %s1, 512, %s45, [#allocation6], 128, 128, 8
    $region9: #{encoder_processor_decoder.10} parent=1 // pred_fallthru
      _
    // Predicated region
    $region10: #{encoder_processor_decoder.10} parent=1 // pred_check
      _
    $region11: #{encoder_processor_decoder.10} parent=1 // pred_check_branch
      %52 = sbr.rel (0) target = $region13
    $region12: #{encoder_processor_decoder.10} parent=1 // pred_region
      %s54 = ssub.s32 512, 512
      %55 = vsyncadd [#allocation6], %s54
      %s56 = sshll.u32 [#allocation7], 4
      %s57 = int_to_ptr.vmem [resolvable:$true] %s56
      %62 = dma.hbm_to_vmem [thread:$0]  %s2, 512, %s57, [#allocation6], 128, 128, 8
    $region13: #{encoder_processor_decoder.10} parent=1 // pred_fallthru
      _
    // Predicated region
    $region14: #{encoder_processor_decoder.10} parent=1 // pred_check
      _
    $region15: #{encoder_processor_decoder.10} parent=1 // pred_check_branch
      %64 = sbr.rel (0) target = $region17
    $region16: #{encoder_processor_decoder.10} parent=1 // pred_region
      %s66 = ssub.s32 128, 128
      %67 = vsyncadd [#allocation9], %s66
      %s68 = sshll.u32 [#allocation8], 4
      %s69 = int_to_ptr.vmem [resolvable:$true] %s68
      %74 = dma.hbm_to_vmem [thread:$0]  %s3, 128, %s69, [#allocation9], 64, 64, 4
    $region17: #{encoder_processor_decoder.10} parent=1 // pred_fallthru
      _
    // Predicated region
    $region18: #{encoder_processor_decoder.10} parent=1 // pred_check
      _
    $region19: #{encoder_processor_decoder.10} parent=1 // pred_check_branch
      %76 = sbr.rel (0) target = $region21
    $region20: #{encoder_processor_decoder.10} parent=1 // pred_region
      %s78 = ssub.s32 512, 512
      %79 = vsyncadd [#allocation9], %s78
      %s80 = sshll.u32 [#allocation10], 4
      %s81 = int_to_ptr.vmem [resolvable:$true] %s80
      %86 = dma.hbm_to_vmem [thread:$0]  %s4, 512, %s81, [#allocation9], 128, 128, 8
    $region21: #{encoder_processor_decoder.10} parent=1 // pred_fallthru
      _
    // Predicated region
    $region22: #{encoder_processor_decoder.10} parent=1 // pred_check
      _
    $region23: #{encoder_processor_decoder.10} parent=1 // pred_check_branch
      %88 = sbr.rel (0) target = $region25
    $region24: #{encoder_processor_decoder.10} parent=1 // pred_region
      %s90 = ssub.s32 1024, 1024
      %91 = vsyncadd [#allocation12], %s90
      %s92 = sshll.u32 [#allocation11], 4
      %s93 = int_to_ptr.vmem [resolvable:$true] %s92
      %98 = dma.hbm_to_vmem [thread:$0]  %s5, 1024, %s93, [#allocation12], 64, 64, 4
    $region25: #{encoder_processor_decoder.10} parent=1 // pred_fallthru
      _
    // Predicated region
    $region26: #{encoder_processor_decoder.10} parent=1 // pred_check
      _
    $region27: #{encoder_processor_decoder.10} parent=1 // pred_check_branch
      %100 = sbr.rel (0) target = $region29
    $region28: #{encoder_processor_decoder.10} parent=1 // pred_region
      %s102 = ssub.s32 1024, 1024
      %103 = vsyncadd [#allocation12], %s102
      %s104 = sshll.u32 [#allocation13], 4
      %s105 = int_to_ptr.vmem [resolvable:$true] %s104
      %110 = dma.hbm_to_vmem [thread:$0]  %s6, 1024, %s105, [#allocation12], 64, 64, 4
    $region29: #{encoder_processor_decoder.10} parent=1 // pred_fallthru
      _
    // Predicated region
    $region30: #{encoder_processor_decoder.10} parent=1 // pred_check
      _
    $region31: #{encoder_processor_decoder.10} parent=1 // pred_check_branch
      %112 = sbr.rel (0) target = $region33
    $region32: #{encoder_processor_decoder.10} parent=1 // pred_region
      %s114 = ssub.s32 1024, 1024
      %115 = vsyncadd [#allocation15], %s114
      %s116 = sshll.u32 [#allocation14], 4
      %s117 = int_to_ptr.vmem [resolvable:$true] %s116
      %122 = dma.hbm_to_vmem [thread:$0]  %s7, 1024, %s117, [#allocation15], 64, 64, 4
    $region33: #{encoder_processor_decoder.10} parent=1 // pred_fallthru
      _
    // Predicated region
    $region34: #{encoder_processor_decoder.10} parent=1 // pred_check
      _
    $region35: #{encoder_processor_decoder.10} parent=1 // pred_check_branch
      %124 = sbr.rel (0) target = $region37
    $region36: #{encoder_processor_decoder.10} parent=1 // pred_region
      %s126 = ssub.s32 16, 16
      %127 = vsyncadd [#allocation15], %s126
      %s129 = sshll.u32 [#allocation16], 4
      %s130 = int_to_ptr.vmem [resolvable:$true] %s129
      %132 = dma.hbm_to_vmem [thread:$0]  %s8, 16, %s130, [#allocation15]
    $region37: #{encoder_processor_decoder.10} parent=1 // pred_fallthru
      _
    // Predicated region
    $region38: #{encoder_processor_decoder.10} parent=1 // pred_check
      _
    $region39: #{encoder_processor_decoder.10} parent=1 // pred_check_branch
      %134 = sbr.rel (0) target = $region41
    $region40: #{encoder_processor_decoder.10} parent=1 // pred_region
      %s136 = ssub.s32 1024, 1024
      %137 = vsyncadd [#allocation18], %s136
      %s138 = sshll.u32 [#allocation17], 4
      %s139 = int_to_ptr.vmem [resolvable:$true] %s138
      %144 = dma.hbm_to_vmem [thread:$0]  %s9, 1024, %s139, [#allocation18], 64, 64, 4
    $region41: #{encoder_processor_decoder.10} parent=1 // pred_fallthru
      _
    // Predicated region
    $region42: #{encoder_processor_decoder.10} parent=1 // pred_check
      _
    $region43: #{encoder_processor_decoder.10} parent=1 // pred_check_branch
      %146 = sbr.rel (0) target = $region45
    $region44: #{encoder_processor_decoder.10} parent=1 // pred_region
      %s148 = ssub.s32 16, 16
      %149 = vsyncadd [#allocation18], %s148
      %s151 = sshll.u32 [#allocation19], 4
      %s152 = int_to_ptr.vmem [resolvable:$true] %s151
      %154 = dma.hbm_to_vmem [thread:$0]  %s10, 16, %s152, [#allocation18]
    $region45: #{encoder_processor_decoder.10} parent=1 // pred_fallthru
      _
    // Predicated region
    $region46: #{encoder_processor_decoder.10} parent=1 // pred_check
      _
    $region47: #{encoder_processor_decoder.10} parent=1 // pred_check_branch
      %156 = sbr.rel (0) target = $region49
    $region48: #{encoder_processor_decoder.10} parent=1 // pred_region
      %s158 = ssub.s32 1024, 1024
      %159 = vsyncadd [#allocation21], %s158
      %s160 = sshll.u32 [#allocation20], 4
      %s161 = int_to_ptr.vmem [resolvable:$true] %s160
      %166 = dma.hbm_to_vmem [thread:$0]  %s11, 1024, %s161, [#allocation21], 64, 64, 4
    $region49: #{encoder_processor_decoder.10} parent=1 // pred_fallthru
      _
    // Predicated region
    $region50: #{encoder_processor_decoder.10} parent=1 // pred_check
      _
    $region51: #{encoder_processor_decoder.10} parent=1 // pred_check_branch
      %168 = sbr.rel (0) target = $region53
    $region52: #{encoder_processor_decoder.10} parent=1 // pred_region
      %s170 = ssub.s32 16, 16
      %171 = vsyncadd [#allocation21], %s170
      %s173 = sshll.u32 [#allocation22], 4
      %s174 = int_to_ptr.vmem [resolvable:$true] %s173
      %176 = dma.hbm_to_vmem [thread:$0]  %s12, 16, %s174, [#allocation21]
    $region53: #{encoder_processor_decoder.10} parent=1 // pred_fallthru
      _
    // Predicated region
    $region54: #{encoder_processor_decoder.10} parent=1 // pred_check
      _
    $region55: #{encoder_processor_decoder.10} parent=1 // pred_check_branch
      %178 = sbr.rel (0) target = $region57
    $region56: #{encoder_processor_decoder.10} parent=1 // pred_region
      %s180 = ssub.s32 16, 16
      %181 = vsyncadd [#allocation24], %s180
      %s183 = sshll.u32 [#allocation23], 4
      %s184 = int_to_ptr.vmem [resolvable:$true] %s183
      %186 = dma.hbm_to_vmem [thread:$0]  %s13, 16, %s184, [#allocation24]
    $region57: #{encoder_processor_decoder.10} parent=1 // pred_fallthru
      _
    // Predicated region
    $region58: #{encoder_processor_decoder.10} parent=1 // pred_check
      _
    $region59: #{encoder_processor_decoder.10} parent=1 // pred_check_branch
      %188 = sbr.rel (0) target = $region61
    $region60: #{encoder_processor_decoder.10} parent=1 // pred_region
      %s190 = ssub.s32 16, 16
      %191 = vsyncadd [#allocation24], %s190
      %s193 = sshll.u32 [#allocation25], 4
      %s194 = int_to_ptr.vmem [resolvable:$true] %s193
      %196 = dma.hbm_to_vmem [thread:$0]  %s14, 16, %s194, [#allocation24]
    $region61: #{encoder_processor_decoder.10} parent=1 // pred_fallthru
      _
    // Predicated region
    $region62: #{encoder_processor_decoder.10} parent=1 // pred_check
      _
    $region63: #{encoder_processor_decoder.10} parent=1 // pred_check_branch
      %198 = sbr.rel (0) target = $region65
    $region64: #{encoder_processor_decoder.10} parent=1 // pred_region
      %199 = dma.done [#allocation3], 16
    $region65: #{encoder_processor_decoder.10} parent=1 // pred_fallthru
      _
    // Predicated region
    $region66: #{encoder_processor_decoder.10} parent=1 // pred_check
      _
    $region67: #{encoder_processor_decoder.10} parent=1 // pred_check_branch
      %201 = sbr.rel (0) target = $region69
    $region68: #{encoder_processor_decoder.10} parent=1 // pred_region
      %202 = dma.done [#allocation6], 512
    $region69: #{encoder_processor_decoder.10} parent=1 // pred_fallthru
      _
    // Predicated region
    $region70: #{encoder_processor_decoder.10} parent=1 // pred_check
      _
    $region71: #{encoder_processor_decoder.10} parent=1 // pred_check_branch
      %204 = sbr.rel (0) target = $region73
    $region72: #{encoder_processor_decoder.10} parent=1 // pred_region
      %205 = dma.done [#allocation6], 512
    $region73: #{encoder_processor_decoder.10} parent=1 // pred_fallthru
      _
    // Predicated region
    $region74: #{encoder_processor_decoder.10} parent=1 // pred_check
      _
    $region75: #{encoder_processor_decoder.10} parent=1 // pred_check_branch
      %207 = sbr.rel (0) target = $region77
    $region76: #{encoder_processor_decoder.10} parent=1 // pred_region
      %208 = dma.done [#allocation9], 128
    $region77: #{encoder_processor_decoder.10} parent=1 // pred_fallthru
      _
    // Predicated region
    $region78: #{encoder_processor_decoder.10} parent=1 // pred_check
      _
    $region79: #{encoder_processor_decoder.10} parent=1 // pred_check_branch
      %210 = sbr.rel (0) target = $region81
    $region80: #{encoder_processor_decoder.10} parent=1 // pred_region
      %211 = dma.done [#allocation9], 512
    $region81: #{encoder_processor_decoder.10} parent=1 // pred_fallthru
      _
    // Predicated region
    $region82: #{encoder_processor_decoder.10} parent=1 // pred_check
      _
    $region83: #{encoder_processor_decoder.10} parent=1 // pred_check_branch
      %213 = sbr.rel (0) target = $region85
    $region84: #{encoder_processor_decoder.10} parent=1 // pred_region
      %214 = dma.done [#allocation12], 1024
    $region85: #{encoder_processor_decoder.10} parent=1 // pred_fallthru
      _
    // Predicated region
    $region86: #{encoder_processor_decoder.10} parent=1 // pred_check
      _
    $region87: #{encoder_processor_decoder.10} parent=1 // pred_check_branch
      %216 = sbr.rel (0) target = $region89
    $region88: #{encoder_processor_decoder.10} parent=1 // pred_region
      %217 = dma.done [#allocation12], 1024
    $region89: #{encoder_processor_decoder.10} parent=1 // pred_fallthru
      _
    // Predicated region
    $region90: #{encoder_processor_decoder.10} parent=1 // pred_check
      _
    $region91: #{encoder_processor_decoder.10} parent=1 // pred_check_branch
      %219 = sbr.rel (0) target = $region93
    $region92: #{encoder_processor_decoder.10} parent=1 // pred_region
      %220 = dma.done [#allocation15], 1024
    $region93: #{encoder_processor_decoder.10} parent=1 // pred_fallthru
      _
    // Predicated region
    $region94: #{encoder_processor_decoder.10} parent=1 // pred_check
      _
    $region95: #{encoder_processor_decoder.10} parent=1 // pred_check_branch
      %222 = sbr.rel (0) target = $region97
    $region96: #{encoder_processor_decoder.10} parent=1 // pred_region
      %223 = dma.done [#allocation15], 16
    $region97: #{encoder_processor_decoder.10} parent=1 // pred_fallthru
      _
    // Predicated region
    $region98: #{encoder_processor_decoder.10} parent=1 // pred_check
      _
    $region99: #{encoder_processor_decoder.10} parent=1 // pred_check_branch
      %225 = sbr.rel (0) target = $region101
    $region100: #{encoder_processor_decoder.10} parent=1 // pred_region
      %226 = dma.done [#allocation18], 1024
    $region101: #{encoder_processor_decoder.10} parent=1 // pred_fallthru
      _
    // Predicated region
    $region102: #{encoder_processor_decoder.10} parent=1 // pred_check
      _
    $region103: #{encoder_processor_decoder.10} parent=1 // pred_check_branch
      %228 = sbr.rel (0) target = $region105
    $region104: #{encoder_processor_decoder.10} parent=1 // pred_region
      %229 = dma.done [#allocation18], 16
    $region105: #{encoder_processor_decoder.10} parent=1 // pred_fallthru
      _
    // Predicated region
    $region106: #{encoder_processor_decoder.10} parent=1 // pred_check
      _
    $region107: #{encoder_processor_decoder.10} parent=1 // pred_check_branch
      %231 = sbr.rel (0) target = $region109
    $region108: #{encoder_processor_decoder.10} parent=1 // pred_region
      %232 = dma.done [#allocation21], 1024
    $region109: #{encoder_processor_decoder.10} parent=1 // pred_fallthru
      _
    // Predicated region
    $region110: #{encoder_processor_decoder.10} parent=1 // pred_check
      _
    $region111: #{encoder_processor_decoder.10} parent=1 // pred_check_branch
      %234 = sbr.rel (0) target = $region113
    $region112: #{encoder_processor_decoder.10} parent=1 // pred_region
      %235 = dma.done [#allocation21], 16
    $region113: #{encoder_processor_decoder.10} parent=1 // pred_fallthru
      _
    // Predicated region
    $region114: #{encoder_processor_decoder.10} parent=1 // pred_check
      _
    $region115: #{encoder_processor_decoder.10} parent=1 // pred_check_branch
      %237 = sbr.rel (0) target = $region117
    $region116: #{encoder_processor_decoder.10} parent=1 // pred_region
      %238 = dma.done [#allocation24], 16
    $region117: #{encoder_processor_decoder.10} parent=1 // pred_fallthru
      _
    // Predicated region
    $region118: #{encoder_processor_decoder.10} parent=1 // pred_check
      _
    $region119: #{encoder_processor_decoder.10} parent=1 // pred_check_branch
      %240 = sbr.rel (0) target = $region121
    $region120: #{encoder_processor_decoder.10} parent=1 // pred_region
      %241 = dma.done [#allocation24], 16
    $region121: #{encoder_processor_decoder.10} parent=1 // pred_fallthru
      _
    %v243 = vld [vmem:[#allocation11] sm:$0xf]
    %v244 = vld [vmem:[#allocation11 + $0x4] sm:$0xf]
    %v245 = vld [vmem:[#allocation11 + $0x8] sm:$0xf]
    %v246 = vld [vmem:[#allocation11 + $0xc] sm:$0xf]
    %v247 = vld [vmem:[#allocation11 + $0x10] sm:$0xf]
    %v248 = vld [vmem:[#allocation11 + $0x14] sm:$0xf]
    %v249 = vld [vmem:[#allocation11 + $0x18] sm:$0xf]
    %v250 = vld [vmem:[#allocation11 + $0x1c] sm:$0xf]
    %v251 = vld [vmem:[#allocation11 + $0x20] sm:$0xf]
    %v252 = vld [vmem:[#allocation11 + $0x24] sm:$0xf]
    %v253 = vld [vmem:[#allocation11 + $0x28] sm:$0xf]
    %v254 = vld [vmem:[#allocation11 + $0x2c] sm:$0xf]
    %v255 = vld [vmem:[#allocation11 + $0x30] sm:$0xf]
    %v256 = vld [vmem:[#allocation11 + $0x34] sm:$0xf]
    %v257 = vld [vmem:[#allocation11 + $0x38] sm:$0xf]
    %v258 = vld [vmem:[#allocation11 + $0x3c] sm:$0xf]
    %v259 = vld [vmem:[#allocation13] sm:$0xf]
    %v260 = vld [vmem:[#allocation13 + $0x4] sm:$0xf]
    %v261 = vld [vmem:[#allocation13 + $0x8] sm:$0xf]
    %v262 = vld [vmem:[#allocation13 + $0xc] sm:$0xf]
    %v263 = vld [vmem:[#allocation13 + $0x10] sm:$0xf]
    %v264 = vld [vmem:[#allocation13 + $0x14] sm:$0xf]
    %v265 = vld [vmem:[#allocation13 + $0x18] sm:$0xf]
    %v266 = vld [vmem:[#allocation13 + $0x1c] sm:$0xf]
    %v267 = vld [vmem:[#allocation13 + $0x20] sm:$0xf]
    %v268 = vld [vmem:[#allocation13 + $0x24] sm:$0xf]
    %v269 = vld [vmem:[#allocation13 + $0x28] sm:$0xf]
    %v270 = vld [vmem:[#allocation13 + $0x2c] sm:$0xf]
    %v271 = vld [vmem:[#allocation13 + $0x30] sm:$0xf]
    %v272 = vld [vmem:[#allocation13 + $0x34] sm:$0xf]
    %v273 = vld [vmem:[#allocation13 + $0x38] sm:$0xf]
    %v274 = vld [vmem:[#allocation13 + $0x3c] sm:$0xf]
    %v275 = vld [vmem:[#allocation14] sm:$0xf]
    %v276 = vld [vmem:[#allocation14 + $0x4] sm:$0xf]
    %v277 = vld [vmem:[#allocation14 + $0x8] sm:$0xf]
    %v278 = vld [vmem:[#allocation14 + $0xc] sm:$0xf]
    %v279 = vld [vmem:[#allocation14 + $0x10] sm:$0xf]
    %v280 = vld [vmem:[#allocation14 + $0x14] sm:$0xf]
    %v281 = vld [vmem:[#allocation14 + $0x18] sm:$0xf]
    %v282 = vld [vmem:[#allocation14 + $0x1c] sm:$0xf]
    %v283 = vld [vmem:[#allocation14 + $0x20] sm:$0xf]
    %v284 = vld [vmem:[#allocation14 + $0x24] sm:$0xf]
    %v285 = vld [vmem:[#allocation14 + $0x28] sm:$0xf]
    %v286 = vld [vmem:[#allocation14 + $0x2c] sm:$0xf]
    %v287 = vld [vmem:[#allocation14 + $0x30] sm:$0xf]
    %v288 = vld [vmem:[#allocation14 + $0x34] sm:$0xf]
    %v289 = vld [vmem:[#allocation14 + $0x38] sm:$0xf]
    %v290 = vld [vmem:[#allocation14 + $0x3c] sm:$0xf]
    %v291 = vld [vmem:[#allocation16] sm:$0x1]
    %v292 = vld [vmem:[#allocation17] sm:$0xf]
    %v293 = vld [vmem:[#allocation17 + $0x4] sm:$0xf]
    %v294 = vld [vmem:[#allocation17 + $0x8] sm:$0xf]
    %v295 = vld [vmem:[#allocation17 + $0xc] sm:$0xf]
    %v296 = vld [vmem:[#allocation17 + $0x10] sm:$0xf]
    %v297 = vld [vmem:[#allocation17 + $0x14] sm:$0xf]
    %v298 = vld [vmem:[#allocation17 + $0x18] sm:$0xf]
    %v299 = vld [vmem:[#allocation17 + $0x1c] sm:$0xf]
    %v300 = vld [vmem:[#allocation17 + $0x20] sm:$0xf]
    %v301 = vld [vmem:[#allocation17 + $0x24] sm:$0xf]
    %v302 = vld [vmem:[#allocation17 + $0x28] sm:$0xf]
    %v303 = vld [vmem:[#allocation17 + $0x2c] sm:$0xf]
    %v304 = vld [vmem:[#allocation17 + $0x30] sm:$0xf]
    %v305 = vld [vmem:[#allocation17 + $0x34] sm:$0xf]
    %v306 = vld [vmem:[#allocation17 + $0x38] sm:$0xf]
    %v307 = vld [vmem:[#allocation17 + $0x3c] sm:$0xf]
    %v308 = vld [vmem:[#allocation19] sm:$0x1]
    %v309 = vld [vmem:[#allocation20] sm:$0xf]
    %v310 = vld [vmem:[#allocation20 + $0x4] sm:$0xf]
    %v311 = vld [vmem:[#allocation20 + $0x8] sm:$0xf]
    %v312 = vld [vmem:[#allocation20 + $0xc] sm:$0xf]
    %v313 = vld [vmem:[#allocation20 + $0x10] sm:$0xf]
    %v314 = vld [vmem:[#allocation20 + $0x14] sm:$0xf]
    %v315 = vld [vmem:[#allocation20 + $0x18] sm:$0xf]
    %v316 = vld [vmem:[#allocation20 + $0x1c] sm:$0xf]
    %v317 = vld [vmem:[#allocation20 + $0x20] sm:$0xf]
    %v318 = vld [vmem:[#allocation20 + $0x24] sm:$0xf]
    %v319 = vld [vmem:[#allocation20 + $0x28] sm:$0xf]
    %v320 = vld [vmem:[#allocation20 + $0x2c] sm:$0xf]
    %v321 = vld [vmem:[#allocation20 + $0x30] sm:$0xf]
    %v322 = vld [vmem:[#allocation20 + $0x34] sm:$0xf]
    %v323 = vld [vmem:[#allocation20 + $0x38] sm:$0xf]
    %v324 = vld [vmem:[#allocation20 + $0x3c] sm:$0xf]
    %v325 = vld [vmem:[#allocation22] sm:$0x1]
    %v326 = vld [vmem:[#allocation23] sm:$0x1]
    %v327 = vld [vmem:[#allocation25] sm:$0x1]
    %v328 = vld [vmem:[#allocation8] sm:$0xf]
    %v329 = vld [vmem:[#allocation8 + $0x4] sm:$0xf]
    %v330 = vlaneseq
    %v331 = vand.u32 %v330, 127
    %v332 = vld [vmem:[#allocation5] sm:$0xff]
    %v333 = vld [vmem:[#allocation5 + $0x8] sm:$0xff]
    %v334 = vld [vmem:[#allocation5 + $0x10] sm:$0xff]
    %v335 = vld [vmem:[#allocation5 + $0x18] sm:$0xff]
    %336 = vset.pattern.permute.xlu0 0
    %337 = vperm.xlu0 %336, %v332
    %v338 = vpop.permute.xlu0 %337
    %339 = vset.pattern.permute.xlu0 0
    %340 = vperm.xlu0 %339, %v333
    %v341 = vpop.permute.xlu0 %340
    %342 = vset.pattern.permute.xlu0 0
    %343 = vperm.xlu0 %342, %v334
    %v344 = vpop.permute.xlu0 %343
    %345 = vset.pattern.permute.xlu0 0
    %346 = vperm.xlu0 %345, %v335
    %v347 = vpop.permute.xlu0 %346
    %vm348 = vcmp.eq.s32.totalorder %v338, %v331
    %vm349 = vcmp.eq.s32.totalorder %v341, %v331
    %vm350 = vcmp.eq.s32.totalorder %v344, %v331
    %vm351 = vcmp.eq.s32.totalorder %v347, %v331
    %v352 = vsel %vm348, 1, 0
    %v353 = vsel %vm349, 1, 0
    %v354 = vsel %vm350, 1, 0
    %v355 = vsel %vm351, 1, 0
    %v356 = vcvt.s32.f32 %v352
    %v357 = vcvt.s32.f32 %v353
    %v358 = vcvt.s32.f32 %v354
    %v359 = vcvt.s32.f32 %v355
    %v360 = vpack.c.bf16 %v357, %v356
    %v361 = vpack.c.bf16 %v359, %v358
    %v362 = vld [vmem:[#allocation7] sm:$0xff]
    %v363 = vld [vmem:[#allocation7 + $0x8] sm:$0xff]
    %v364 = vld [vmem:[#allocation7 + $0x10] sm:$0xff]
    %v365 = vld [vmem:[#allocation7 + $0x18] sm:$0xff]
    %366 = vset.pattern.permute.xlu0 0
    %367 = vperm.xlu0 %366, %v362
    %v368 = vpop.permute.xlu0 %367
    %369 = vset.pattern.permute.xlu0 0
    %370 = vperm.xlu0 %369, %v363
    %v371 = vpop.permute.xlu0 %370
    %372 = vset.pattern.permute.xlu0 0
    %373 = vperm.xlu0 %372, %v364
    %v374 = vpop.permute.xlu0 %373
    %375 = vset.pattern.permute.xlu0 0
    %376 = vperm.xlu0 %375, %v365
    %v377 = vpop.permute.xlu0 %376
    %vm378 = vcmp.eq.s32.totalorder %v368, %v331
    %vm379 = vcmp.eq.s32.totalorder %v371, %v331
    %vm380 = vcmp.eq.s32.totalorder %v374, %v331
    %vm381 = vcmp.eq.s32.totalorder %v377, %v331
    %v382 = vsel %vm378, 1, 0
    %v383 = vsel %vm379, 1, 0
    %v384 = vsel %vm380, 1, 0
    %v385 = vsel %vm381, 1, 0
    %v386 = vcvt.s32.f32 %v382
    %v387 = vcvt.s32.f32 %v383
    %v388 = vcvt.s32.f32 %v384
    %v389 = vcvt.s32.f32 %v385
    %v390 = vpack.c.bf16 %v387, %v386
    %v391 = vpack.c.bf16 %v389, %v388
    %v394 = vunpack.c.l.b16 %v328
    %v395 = vunpack.c.l.b16 %v329
    %v396 = vpack.c.b16 %v395, %v394
    %vm398 = vcmask 130048
    %v400 = vsel %vm398, %v360, 0
    %v403 = vsel %vm398, %v361, 0
    %405 = vmatprep.subr.bf16.mxu0 0
    %406 = vmatpush1.bf16.msra.mxu0 %v396
    %407 = vmatprep.subr.bf16.mxu0 0
    %408 = vmatpush1.bf16.msra.mxu0 0
    %409 = vmatprep.subr.bf16.mxu0 0
    %410 = vmatpush1.bf16.msra.mxu0 0
    %411 = vmatprep.subr.bf16.mxu0 0
    %412 = vmatpush1.bf16.msra.mxu0 0
    %413 = vmatprep.subr.bf16.mxu0 0
    %414 = vmatpush1.bf16.msra.mxu0 0
    %415 = vmatprep.subr.bf16.mxu0 0
    %416 = vmatpush1.bf16.msra.mxu0 0
    %417 = vmatprep.subr.bf16.mxu0 0
    %418 = vmatpush1.bf16.msra.mxu0 0
    %419 = vmatprep.subr.bf16.mxu0 0
    %420 = vmatpush1.bf16.msra.mxu0 0
    %421 = vmatprep.subr.bf16.mxu0 0
    %422 = vmatpush1.bf16.msra.mxu0 0
    %423 = vmatprep.subr.bf16.mxu0 0
    %424 = vmatpush1.bf16.msra.mxu0 0
    %425 = vmatprep.subr.bf16.mxu0 0
    %426 = vmatpush1.bf16.msra.mxu0 0
    %427 = vmatprep.subr.bf16.mxu0 0
    %428 = vmatpush1.bf16.msra.mxu0 0
    %429 = vmatprep.subr.bf16.mxu0 0
    %430 = vmatpush1.bf16.msra.mxu0 0
    %431 = vmatprep.subr.bf16.mxu0 0
    %432 = vmatpush1.bf16.msra.mxu0 0
    %433 = vmatprep.subr.bf16.mxu0 0
    %434 = vmatpush1.bf16.msra.mxu0 0
    %435 = vmatprep.subr.bf16.mxu0 0
    %436 = vmatpush1.bf16.msra.mxu0 0
    %437 = vmatprep.mubr.bf16.mxu0 0
    %438 = vmatmul.mubr.bf16.gmra.mrb[0].mxu0 %v400
    %v439 = vpop.f32.mrb[0].mxu0
    %v440 = vadd.f32 0.0, %v439
    %v441 = vpop.f32.mrb[0].mxu0
    %v442 = vpop.f32.mrb[0].mxu0
    %v443 = vadd.f32 0.0, %v442
    %v444 = vpop.f32.mrb[0].mxu0
    %445 = vmatprep.mubr.bf16.mxu0 0
    %446 = vmatmul.mubr.bf16.gmra.mrb[0].mxu0 %v403
    %v447 = vpop.f32.mrb[0].mxu0
    %v448 = vadd.f32 0.0, %v447
    %v449 = vpop.f32.mrb[0].mxu0
    %v450 = vpop.f32.mrb[0].mxu0
    %v451 = vadd.f32 0.0, %v450
    %v452 = vpop.f32.mrb[0].mxu0
    %453 = vdwg.mxu0
    %v455 = vsel %vm398, %v390, 0
    %v458 = vsel %vm398, %v391, 0
    %460 = vmatprep.subr.bf16.mxu0 0
    %461 = vmatpush1.bf16.msra.mxu0 %v396
    %462 = vmatprep.subr.bf16.mxu0 0
    %463 = vmatpush1.bf16.msra.mxu0 0
    %464 = vmatprep.subr.bf16.mxu0 0
    %465 = vmatpush1.bf16.msra.mxu0 0
    %466 = vmatprep.subr.bf16.mxu0 0
    %467 = vmatpush1.bf16.msra.mxu0 0
    %468 = vmatprep.subr.bf16.mxu0 0
    %469 = vmatpush1.bf16.msra.mxu0 0
    %470 = vmatprep.subr.bf16.mxu0 0
    %471 = vmatpush1.bf16.msra.mxu0 0
    %472 = vmatprep.subr.bf16.mxu0 0
    %473 = vmatpush1.bf16.msra.mxu0 0
    %474 = vmatprep.subr.bf16.mxu0 0
    %475 = vmatpush1.bf16.msra.mxu0 0
    %476 = vmatprep.subr.bf16.mxu0 0
    %477 = vmatpush1.bf16.msra.mxu0 0
    %478 = vmatprep.subr.bf16.mxu0 0
    %479 = vmatpush1.bf16.msra.mxu0 0
    %480 = vmatprep.subr.bf16.mxu0 0
    %481 = vmatpush1.bf16.msra.mxu0 0
    %482 = vmatprep.subr.bf16.mxu0 0
    %483 = vmatpush1.bf16.msra.mxu0 0
    %484 = vmatprep.subr.bf16.mxu0 0
    %485 = vmatpush1.bf16.msra.mxu0 0
    %486 = vmatprep.subr.bf16.mxu0 0
    %487 = vmatpush1.bf16.msra.mxu0 0
    %488 = vmatprep.subr.bf16.mxu0 0
    %489 = vmatpush1.bf16.msra.mxu0 0
    %490 = vmatprep.subr.bf16.mxu0 0
    %491 = vmatpush1.bf16.msra.mxu0 0
    %492 = vmatprep.mubr.bf16.mxu0 0
    %493 = vmatmul.mubr.bf16.gmra.mrb[0].mxu0 %v455
    %v494 = vpop.f32.mrb[0].mxu0
    %v495 = vadd.f32 0.0, %v494
    %v496 = vpop.f32.mrb[0].mxu0
    %v497 = vpop.f32.mrb[0].mxu0
    %v498 = vadd.f32 0.0, %v497
    %v499 = vpop.f32.mrb[0].mxu0
    %500 = vmatprep.mubr.bf16.mxu0 0
    %501 = vmatmul.mubr.bf16.gmra.mrb[0].mxu0 %v458
    %v502 = vpop.f32.mrb[0].mxu0
    %v503 = vadd.f32 0.0, %v502
    %v504 = vpop.f32.mrb[0].mxu0
    %v505 = vpop.f32.mrb[0].mxu0
    %v506 = vadd.f32 0.0, %v505
    %v507 = vpop.f32.mrb[0].mxu0
    %508 = vdwg.mxu0
    %v509 = vld [vmem:[#allocation10] sm:$0xff]
    %v510 = vld [vmem:[#allocation10 + $0x8] sm:$0xff]
    %v511 = vld [vmem:[#allocation10 + $0x10] sm:$0xff]
    %v512 = vld [vmem:[#allocation10 + $0x18] sm:$0xff]
    %v513 = vpack.c.bf16 %v443, %v440
    %v514 = vpack.c.bf16 %v451, %v448
    %v515 = vpack.c.bf16 %v498, %v495
    %v516 = vpack.c.bf16 %v506, %v503
    %v533 = vunpack.c.l.b16 %v259
    %v534 = vunpack.c.l.b16 %v260
    %v535 = vunpack.c.l.b16 %v261
    %v536 = vunpack.c.l.b16 %v262
    %v537 = vunpack.c.l.b16 %v263
    %v538 = vunpack.c.l.b16 %v264
    %v539 = vunpack.c.l.b16 %v265
    %v540 = vunpack.c.l.b16 %v266
    %v541 = vunpack.c.l.b16 %v267
    %v542 = vunpack.c.l.b16 %v268
    %v543 = vunpack.c.l.b16 %v269
    %v544 = vunpack.c.l.b16 %v270
    %v545 = vunpack.c.l.b16 %v271
    %v546 = vunpack.c.l.b16 %v272
    %v547 = vunpack.c.l.b16 %v273
    %v548 = vunpack.c.l.b16 %v274
    %v549 = vpack.c.b16 %v534, %v533
    %v550 = vpack.c.b16 %v536, %v535
    %v551 = vpack.c.b16 %v538, %v537
    %v552 = vpack.c.b16 %v540, %v539
    %v553 = vpack.c.b16 %v542, %v541
    %v554 = vpack.c.b16 %v544, %v543
    %v555 = vpack.c.b16 %v546, %v545
    %v556 = vpack.c.b16 %v548, %v547
    %565 = vmatprep.subr.bf16.mxu0 0
    %566 = vmatpush1.bf16.msra.mxu0 %v549
    %567 = vmatprep.subr.bf16.mxu0 0
    %568 = vmatpush1.bf16.msra.mxu0 %v550
    %569 = vmatprep.subr.bf16.mxu0 0
    %570 = vmatpush1.bf16.msra.mxu0 %v551
    %571 = vmatprep.subr.bf16.mxu0 0
    %572 = vmatpush1.bf16.msra.mxu0 %v552
    %573 = vmatprep.subr.bf16.mxu0 0
    %574 = vmatpush1.bf16.msra.mxu0 %v553
    %575 = vmatprep.subr.bf16.mxu0 0
    %576 = vmatpush1.bf16.msra.mxu0 %v554
    %577 = vmatprep.subr.bf16.mxu0 0
    %578 = vmatpush1.bf16.msra.mxu0 %v555
    %579 = vmatprep.subr.bf16.mxu0 0
    %580 = vmatpush1.bf16.msra.mxu0 %v556
    %581 = vmatprep.subr.bf16.mxu0 0
    %582 = vmatpush1.bf16.msra.mxu0 0
    %583 = vmatprep.subr.bf16.mxu0 0
    %584 = vmatpush1.bf16.msra.mxu0 0
    %585 = vmatprep.subr.bf16.mxu0 0
    %586 = vmatpush1.bf16.msra.mxu0 0
    %587 = vmatprep.subr.bf16.mxu0 0
    %588 = vmatpush1.bf16.msra.mxu0 0
    %589 = vmatprep.subr.bf16.mxu0 0
    %590 = vmatpush1.bf16.msra.mxu0 0
    %591 = vmatprep.subr.bf16.mxu0 0
    %592 = vmatpush1.bf16.msra.mxu0 0
    %593 = vmatprep.subr.bf16.mxu0 0
    %594 = vmatpush1.bf16.msra.mxu0 0
    %595 = vmatprep.subr.bf16.mxu0 0
    %596 = vmatpush1.bf16.msra.mxu0 0
    %597 = vmatprep.mubr.bf16.mxu0 0
    %598 = vmatmul.mubr.bf16.gmra.mrb[0].mxu0 %v515
    %v599 = vpop.f32.mrb[0].mxu0
    %v600 = vadd.f32 0.0, %v599
    %v601 = vpop.f32.mrb[0].mxu0
    %v602 = vpop.f32.mrb[0].mxu0
    %v603 = vadd.f32 0.0, %v602
    %v604 = vpop.f32.mrb[0].mxu0
    %605 = vmatprep.mubr.bf16.mxu0 0
    %606 = vmatmul.mubr.bf16.gmra.mrb[0].mxu0 %v516
    %v607 = vpop.f32.mrb[0].mxu0
    %v608 = vadd.f32 0.0, %v607
    %v609 = vpop.f32.mrb[0].mxu0
    %v610 = vpop.f32.mrb[0].mxu0
    %v611 = vadd.f32 0.0, %v610
    %v612 = vpop.f32.mrb[0].mxu0
    %613 = vdwg.mxu0
    %v630 = vunpack.c.l.b16 %v243
    %v631 = vunpack.c.l.b16 %v244
    %v632 = vunpack.c.l.b16 %v245
    %v633 = vunpack.c.l.b16 %v246
    %v634 = vunpack.c.l.b16 %v247
    %v635 = vunpack.c.l.b16 %v248
    %v636 = vunpack.c.l.b16 %v249
    %v637 = vunpack.c.l.b16 %v250
    %v638 = vunpack.c.l.b16 %v251
    %v639 = vunpack.c.l.b16 %v252
    %v640 = vunpack.c.l.b16 %v253
    %v641 = vunpack.c.l.b16 %v254
    %v642 = vunpack.c.l.b16 %v255
    %v643 = vunpack.c.l.b16 %v256
    %v644 = vunpack.c.l.b16 %v257
    %v645 = vunpack.c.l.b16 %v258
    %v646 = vpack.c.b16 %v631, %v630
    %v647 = vpack.c.b16 %v633, %v632
    %v648 = vpack.c.b16 %v635, %v634
    %v649 = vpack.c.b16 %v637, %v636
    %v650 = vpack.c.b16 %v639, %v638
    %v651 = vpack.c.b16 %v641, %v640
    %v652 = vpack.c.b16 %v643, %v642
    %v653 = vpack.c.b16 %v645, %v644
    %662 = vmatprep.subr.bf16.mxu0 0
    %663 = vmatpush1.bf16.msra.mxu0 %v646
    %664 = vmatprep.subr.bf16.mxu0 0
    %665 = vmatpush1.bf16.msra.mxu0 %v647
    %666 = vmatprep.subr.bf16.mxu0 0
    %667 = vmatpush1.bf16.msra.mxu0 %v648
    %668 = vmatprep.subr.bf16.mxu0 0
    %669 = vmatpush1.bf16.msra.mxu0 %v649
    %670 = vmatprep.subr.bf16.mxu0 0
    %671 = vmatpush1.bf16.msra.mxu0 %v650
    %672 = vmatprep.subr.bf16.mxu0 0
    %673 = vmatpush1.bf16.msra.mxu0 %v651
    %674 = vmatprep.subr.bf16.mxu0 0
    %675 = vmatpush1.bf16.msra.mxu0 %v652
    %676 = vmatprep.subr.bf16.mxu0 0
    %677 = vmatpush1.bf16.msra.mxu0 %v653
    %678 = vmatprep.subr.bf16.mxu0 0
    %679 = vmatpush1.bf16.msra.mxu0 0
    %680 = vmatprep.subr.bf16.mxu0 0
    %681 = vmatpush1.bf16.msra.mxu0 0
    %682 = vmatprep.subr.bf16.mxu0 0
    %683 = vmatpush1.bf16.msra.mxu0 0
    %684 = vmatprep.subr.bf16.mxu0 0
    %685 = vmatpush1.bf16.msra.mxu0 0
    %686 = vmatprep.subr.bf16.mxu0 0
    %687 = vmatpush1.bf16.msra.mxu0 0
    %688 = vmatprep.subr.bf16.mxu0 0
    %689 = vmatpush1.bf16.msra.mxu0 0
    %690 = vmatprep.subr.bf16.mxu0 0
    %691 = vmatpush1.bf16.msra.mxu0 0
    %692 = vmatprep.subr.bf16.mxu0 0
    %693 = vmatpush1.bf16.msra.mxu0 0
    %694 = vmatprep.mubr.bf16.mxu0 0
    %695 = vmatmul.mubr.bf16.gmra.mrb[0].mxu0 %v513
    %v696 = vpop.f32.mrb[0].mxu0
    %v697 = vadd.f32 %v600, %v696
    %v698 = vpop.f32.mrb[0].mxu0
    %v699 = vpop.f32.mrb[0].mxu0
    %v700 = vadd.f32 %v603, %v699
    %v701 = vpop.f32.mrb[0].mxu0
    %702 = vmatprep.mubr.bf16.mxu0 0
    %703 = vmatmul.mubr.bf16.gmra.mrb[0].mxu0 %v514
    %v704 = vpop.f32.mrb[0].mxu0
    %v705 = vadd.f32 %v608, %v704
    %v706 = vpop.f32.mrb[0].mxu0
    %v707 = vpop.f32.mrb[0].mxu0
    %v708 = vadd.f32 %v611, %v707
    %v709 = vpop.f32.mrb[0].mxu0
    %710 = vdwg.mxu0
    %v711 = vpack.c.bf16 %v510, %v509
    %v712 = vpack.c.bf16 %v512, %v511
    %v729 = vunpack.c.l.b16 %v275
    %v730 = vunpack.c.l.b16 %v276
    %v731 = vunpack.c.l.b16 %v277
    %v732 = vunpack.c.l.b16 %v278
    %v733 = vunpack.c.l.b16 %v279
    %v734 = vunpack.c.l.b16 %v280
    %v735 = vunpack.c.l.b16 %v281
    %v736 = vunpack.c.l.b16 %v282
    %v737 = vunpack.c.l.b16 %v283
    %v738 = vunpack.c.l.b16 %v284
    %v739 = vunpack.c.l.b16 %v285
    %v740 = vunpack.c.l.b16 %v286
    %v741 = vunpack.c.l.b16 %v287
    %v742 = vunpack.c.l.b16 %v288
    %v743 = vunpack.c.l.b16 %v289
    %v744 = vunpack.c.l.b16 %v290
    %v745 = vpack.c.b16 %v730, %v729
    %v746 = vpack.c.b16 %v732, %v731
    %v747 = vpack.c.b16 %v734, %v733
    %v748 = vpack.c.b16 %v736, %v735
    %v749 = vpack.c.b16 %v738, %v737
    %v750 = vpack.c.b16 %v740, %v739
    %v751 = vpack.c.b16 %v742, %v741
    %v752 = vpack.c.b16 %v744, %v743
    %761 = vmatprep.subr.bf16.mxu0 0
    %762 = vmatpush1.bf16.msra.mxu0 %v745
    %763 = vmatprep.subr.bf16.mxu0 0
    %764 = vmatpush1.bf16.msra.mxu0 %v746
    %765 = vmatprep.subr.bf16.mxu0 0
    %766 = vmatpush1.bf16.msra.mxu0 %v747
    %767 = vmatprep.subr.bf16.mxu0 0
    %768 = vmatpush1.bf16.msra.mxu0 %v748
    %769 = vmatprep.subr.bf16.mxu0 0
    %770 = vmatpush1.bf16.msra.mxu0 %v749
    %771 = vmatprep.subr.bf16.mxu0 0
    %772 = vmatpush1.bf16.msra.mxu0 %v750
    %773 = vmatprep.subr.bf16.mxu0 0
    %774 = vmatpush1.bf16.msra.mxu0 %v751
    %775 = vmatprep.subr.bf16.mxu0 0
    %776 = vmatpush1.bf16.msra.mxu0 %v752
    %777 = vmatprep.subr.bf16.mxu0 0
    %778 = vmatpush1.bf16.msra.mxu0 0
    %779 = vmatprep.subr.bf16.mxu0 0
    %780 = vmatpush1.bf16.msra.mxu0 0
    %781 = vmatprep.subr.bf16.mxu0 0
    %782 = vmatpush1.bf16.msra.mxu0 0
    %783 = vmatprep.subr.bf16.mxu0 0
    %784 = vmatpush1.bf16.msra.mxu0 0
    %785 = vmatprep.subr.bf16.mxu0 0
    %786 = vmatpush1.bf16.msra.mxu0 0
    %787 = vmatprep.subr.bf16.mxu0 0
    %788 = vmatpush1.bf16.msra.mxu0 0
    %789 = vmatprep.subr.bf16.mxu0 0
    %790 = vmatpush1.bf16.msra.mxu0 0
    %791 = vmatprep.subr.bf16.mxu0 0
    %792 = vmatpush1.bf16.msra.mxu0 0
    %793 = vmatprep.mubr.bf16.mxu0 0
    %794 = vmatmul.mubr.bf16.gmra.mrb[0].mxu0 %v711
    %v795 = vpop.f32.mrb[0].mxu0
    %v796 = vadd.f32 0.0, %v795
    %v797 = vpop.f32.mrb[0].mxu0
    %v798 = vpop.f32.mrb[0].mxu0
    %v799 = vadd.f32 0.0, %v798
    %v800 = vpop.f32.mrb[0].mxu0
    %801 = vmatprep.mubr.bf16.mxu0 0
    %802 = vmatmul.mubr.bf16.gmra.mrb[0].mxu0 %v712
    %v803 = vpop.f32.mrb[0].mxu0
    %v804 = vadd.f32 0.0, %v803
    %v805 = vpop.f32.mrb[0].mxu0
    %v806 = vpop.f32.mrb[0].mxu0
    %v807 = vadd.f32 0.0, %v806
    %v808 = vpop.f32.mrb[0].mxu0
    %809 = vdwg.mxu0
    %v810 = vadd.f32 %v697, %v796
    %v811 = vadd.f32 %v700, %v799
    %v812 = vadd.f32 %v705, %v804
    %v813 = vadd.f32 %v708, %v807
    %v815 = vlaneseq
    %v816 = vshrl.u32 %v815, 7
    %v817 = vsub.s32 0, %v816
    %v818 = vrot.slane %v291, %v817
    %v820 = vadd.f32 %v810, %v818
    %v821 = vadd.f32 %v811, %v818
    %v822 = vadd.f32 %v812, %v818
    %v823 = vadd.f32 %v813, %v818
    %v824 = vmax.f32 %v820, 0.0
    %v825 = vmax.f32 %v821, 0.0
    %v826 = vmax.f32 %v822, 0.0
    %v827 = vmax.f32 %v823, 0.0
    %v828 = vpack.c.bf16 %v825, %v824
    %v829 = vpack.c.bf16 %v827, %v826
    %v831 = vlaneseq
    %v832 = vshrl.u32 %v831, 7
    %v833 = vsub.s32 0, %v832
    %v834 = vrot.slane %v308, %v833
    %v852 = vunpack.c.l.b16 %v292
    %v853 = vunpack.c.l.b16 %v293
    %v854 = vunpack.c.l.b16 %v294
    %v855 = vunpack.c.l.b16 %v295
    %v856 = vunpack.c.l.b16 %v296
    %v857 = vunpack.c.l.b16 %v297
    %v858 = vunpack.c.l.b16 %v298
    %v859 = vunpack.c.l.b16 %v299
    %v860 = vunpack.c.l.b16 %v300
    %v861 = vunpack.c.l.b16 %v301
    %v862 = vunpack.c.l.b16 %v302
    %v863 = vunpack.c.l.b16 %v303
    %v864 = vunpack.c.l.b16 %v304
    %v865 = vunpack.c.l.b16 %v305
    %v866 = vunpack.c.l.b16 %v306
    %v867 = vunpack.c.l.b16 %v307
    %v868 = vpack.c.b16 %v853, %v852
    %v869 = vpack.c.b16 %v855, %v854
    %v870 = vpack.c.b16 %v857, %v856
    %v871 = vpack.c.b16 %v859, %v858
    %v872 = vpack.c.b16 %v861, %v860
    %v873 = vpack.c.b16 %v863, %v862
    %v874 = vpack.c.b16 %v865, %v864
    %v875 = vpack.c.b16 %v867, %v866
    %884 = vmatprep.subr.bf16.mxu0 0
    %885 = vmatpush1.bf16.msra.mxu0 %v868
    %886 = vmatprep.subr.bf16.mxu0 0
    %887 = vmatpush1.bf16.msra.mxu0 %v869
    %888 = vmatprep.subr.bf16.mxu0 0
    %889 = vmatpush1.bf16.msra.mxu0 %v870
    %890 = vmatprep.subr.bf16.mxu0 0
    %891 = vmatpush1.bf16.msra.mxu0 %v871
    %892 = vmatprep.subr.bf16.mxu0 0
    %893 = vmatpush1.bf16.msra.mxu0 %v872
    %894 = vmatprep.subr.bf16.mxu0 0
    %895 = vmatpush1.bf16.msra.mxu0 %v873
    %896 = vmatprep.subr.bf16.mxu0 0
    %897 = vmatpush1.bf16.msra.mxu0 %v874
    %898 = vmatprep.subr.bf16.mxu0 0
    %899 = vmatpush1.bf16.msra.mxu0 %v875
    %900 = vmatprep.subr.bf16.mxu0 0
    %901 = vmatpush1.bf16.msra.mxu0 0
    %902 = vmatprep.subr.bf16.mxu0 0
    %903 = vmatpush1.bf16.msra.mxu0 0
    %904 = vmatprep.subr.bf16.mxu0 0
    %905 = vmatpush1.bf16.msra.mxu0 0
    %906 = vmatprep.subr.bf16.mxu0 0
    %907 = vmatpush1.bf16.msra.mxu0 0
    %908 = vmatprep.subr.bf16.mxu0 0
    %909 = vmatpush1.bf16.msra.mxu0 0
    %910 = vmatprep.subr.bf16.mxu0 0
    %911 = vmatpush1.bf16.msra.mxu0 0
    %912 = vmatprep.subr.bf16.mxu0 0
    %913 = vmatpush1.bf16.msra.mxu0 0
    %914 = vmatprep.subr.bf16.mxu0 0
    %915 = vmatpush1.bf16.msra.mxu0 0
    %916 = vmatprep.mubr.bf16.mxu0 0
    %917 = vmatmul.mubr.bf16.gmra.mrb[0].mxu0 %v828
    %v918 = vpop.f32.mrb[0].mxu0
    %v919 = vadd.f32 %v834, %v918
    %v920 = vpop.f32.mrb[0].mxu0
    %v921 = vpop.f32.mrb[0].mxu0
    %v922 = vadd.f32 %v834, %v921
    %v923 = vpop.f32.mrb[0].mxu0
    %924 = vmatprep.mubr.bf16.mxu0 0
    %925 = vmatmul.mubr.bf16.gmra.mrb[0].mxu0 %v829
    %v926 = vpop.f32.mrb[0].mxu0
    %v927 = vadd.f32 %v834, %v926
    %v928 = vpop.f32.mrb[0].mxu0
    %v929 = vpop.f32.mrb[0].mxu0
    %v930 = vadd.f32 %v834, %v929
    %v931 = vpop.f32.mrb[0].mxu0
    %932 = vdwg.mxu0
    %v933 = vmax.f32 %v919, 0.0
    %v934 = vmax.f32 %v922, 0.0
    %v935 = vmax.f32 %v927, 0.0
    %v936 = vmax.f32 %v930, 0.0
    %v937 = vpack.c.bf16 %v934, %v933
    %v938 = vpack.c.bf16 %v936, %v935
    %v940 = vlaneseq
    %v941 = vshrl.u32 %v940, 7
    %v942 = vsub.s32 0, %v941
    %v943 = vrot.slane %v325, %v942
    %v961 = vunpack.c.l.b16 %v309
    %v962 = vunpack.c.l.b16 %v310
    %v963 = vunpack.c.l.b16 %v311
    %v964 = vunpack.c.l.b16 %v312
    %v965 = vunpack.c.l.b16 %v313
    %v966 = vunpack.c.l.b16 %v314
    %v967 = vunpack.c.l.b16 %v315
    %v968 = vunpack.c.l.b16 %v316
    %v969 = vunpack.c.l.b16 %v317
    %v970 = vunpack.c.l.b16 %v318
    %v971 = vunpack.c.l.b16 %v319
    %v972 = vunpack.c.l.b16 %v320
    %v973 = vunpack.c.l.b16 %v321
    %v974 = vunpack.c.l.b16 %v322
    %v975 = vunpack.c.l.b16 %v323
    %v976 = vunpack.c.l.b16 %v324
    %v977 = vpack.c.b16 %v962, %v961
    %v978 = vpack.c.b16 %v964, %v963
    %v979 = vpack.c.b16 %v966, %v965
    %v980 = vpack.c.b16 %v968, %v967
    %v981 = vpack.c.b16 %v970, %v969
    %v982 = vpack.c.b16 %v972, %v971
    %v983 = vpack.c.b16 %v974, %v973
    %v984 = vpack.c.b16 %v976, %v975
    %993 = vmatprep.subr.bf16.mxu0 0
    %994 = vmatpush1.bf16.msra.mxu0 %v977
    %995 = vmatprep.subr.bf16.mxu0 0
    %996 = vmatpush1.bf16.msra.mxu0 %v978
    %997 = vmatprep.subr.bf16.mxu0 0
    %998 = vmatpush1.bf16.msra.mxu0 %v979
    %999 = vmatprep.subr.bf16.mxu0 0
    %1000 = vmatpush1.bf16.msra.mxu0 %v980
    %1001 = vmatprep.subr.bf16.mxu0 0
    %1002 = vmatpush1.bf16.msra.mxu0 %v981
    %1003 = vmatprep.subr.bf16.mxu0 0
    %1004 = vmatpush1.bf16.msra.mxu0 %v982
    %1005 = vmatprep.subr.bf16.mxu0 0
    %1006 = vmatpush1.bf16.msra.mxu0 %v983
    %1007 = vmatprep.subr.bf16.mxu0 0
    %1008 = vmatpush1.bf16.msra.mxu0 %v984
    %1009 = vmatprep.subr.bf16.mxu0 0
    %1010 = vmatpush1.bf16.msra.mxu0 0
    %1011 = vmatprep.subr.bf16.mxu0 0
    %1012 = vmatpush1.bf16.msra.mxu0 0
    %1013 = vmatprep.subr.bf16.mxu0 0
    %1014 = vmatpush1.bf16.msra.mxu0 0
    %1015 = vmatprep.subr.bf16.mxu0 0
    %1016 = vmatpush1.bf16.msra.mxu0 0
    %1017 = vmatprep.subr.bf16.mxu0 0
    %1018 = vmatpush1.bf16.msra.mxu0 0
    %1019 = vmatprep.subr.bf16.mxu0 0
    %1020 = vmatpush1.bf16.msra.mxu0 0
    %1021 = vmatprep.subr.bf16.mxu0 0
    %1022 = vmatpush1.bf16.msra.mxu0 0
    %1023 = vmatprep.subr.bf16.mxu0 0
    %1024 = vmatpush1.bf16.msra.mxu0 0
    %1025 = vmatprep.mubr.bf16.mxu0 0
    %1026 = vmatmul.mubr.bf16.gmra.mrb[0].mxu0 %v937
    %v1027 = vpop.f32.mrb[0].mxu0
    %v1028 = vadd.f32 %v943, %v1027
    %v1029 = vpop.f32.mrb[0].mxu0
    %v1030 = vpop.f32.mrb[0].mxu0
    %v1031 = vadd.f32 %v943, %v1030
    %v1032 = vpop.f32.mrb[0].mxu0
    %1033 = vmatprep.mubr.bf16.mxu0 0
    %1034 = vmatmul.mubr.bf16.gmra.mrb[0].mxu0 %v938
    %v1035 = vpop.f32.mrb[0].mxu0
    %v1036 = vadd.f32 %v943, %v1035
    %v1037 = vpop.f32.mrb[0].mxu0
    %v1038 = vpop.f32.mrb[0].mxu0
    %v1039 = vadd.f32 %v943, %v1038
    %v1040 = vpop.f32.mrb[0].mxu0
    %1041 = vdwg.mxu0
    %1042 = vadd.xlane.f32.xlu0 %v1028
    %v1043 = vpop.xlane.xlu0 %1042
    %1044 = vadd.xlane.f32.xlu0 %v1031
    %v1045 = vpop.xlane.xlu0 %1044
    %1046 = vadd.xlane.f32.xlu0 %v1036
    %v1047 = vpop.xlane.xlu0 %1046
    %1048 = vadd.xlane.f32.xlu0 %v1039
    %v1049 = vpop.xlane.xlu0 %1048
    %v1050 = vrcp.pop 128.0
    %v1051 = vmul.f32 %v1043, %v1050
    %v1052 = vmul.f32 %v1045, %v1050
    %v1053 = vmul.f32 %v1047, %v1050
    %v1054 = vmul.f32 %v1049, %v1050
    %v1055 = vsub.f32 %v1028, %v1051
    %v1056 = vsub.f32 %v1031, %v1052
    %v1057 = vsub.f32 %v1036, %v1053
    %v1058 = vsub.f32 %v1039, %v1054
    %v1059 = vmul.f32 %v1055, %v1055
    %v1060 = vmul.f32 %v1056, %v1056
    %v1061 = vmul.f32 %v1057, %v1057
    %v1062 = vmul.f32 %v1058, %v1058
    %1063 = vadd.xlane.f32.xlu0 %v1059
    %v1064 = vpop.xlane.xlu0 %1063
    %1065 = vadd.xlane.f32.xlu0 %v1060
    %v1066 = vpop.xlane.xlu0 %1065
    %1067 = vadd.xlane.f32.xlu0 %v1061
    %v1068 = vpop.xlane.xlu0 %1067
    %1069 = vadd.xlane.f32.xlu0 %v1062
    %v1070 = vpop.xlane.xlu0 %1069
    %v1071 = vmul.f32 %v1064, %v1050
    %v1072 = vmul.f32 %v1066, %v1050
    %v1073 = vmul.f32 %v1068, %v1050
    %v1074 = vmul.f32 %v1070, %v1050
    %v1075 = vadd.f32 %v1071, 1e-05
    %v1076 = vadd.f32 %v1072, 1e-05
    %v1077 = vadd.f32 %v1073, 1e-05
    %v1078 = vadd.f32 %v1074, 1e-05
    %v1079 = vrsqrt.pop %v1075
    %v1080 = vrsqrt.pop %v1076
    %v1081 = vrsqrt.pop %v1077
    %v1082 = vrsqrt.pop %v1078
    %v1083 = vmul.f32 %v1055, %v1079
    %v1084 = vmul.f32 %v1056, %v1080
    %v1085 = vmul.f32 %v1057, %v1081
    %v1086 = vmul.f32 %v1058, %v1082
    %v1088 = vlaneseq
    %v1089 = vshrl.u32 %v1088, 7
    %v1090 = vsub.s32 0, %v1089
    %v1091 = vrot.slane %v326, %v1090
    %v1093 = vmul.f32 %v1083, %v1091
    %v1094 = vmul.f32 %v1084, %v1091
    %v1095 = vmul.f32 %v1085, %v1091
    %v1096 = vmul.f32 %v1086, %v1091
    %v1098 = vlaneseq
    %v1099 = vshrl.u32 %v1098, 7
    %v1100 = vsub.s32 0, %v1099
    %v1101 = vrot.slane %v327, %v1100
    %v1103 = vadd.f32 %v1093, %v1101
    %v1104 = vadd.f32 %v1094, %v1101
    %v1105 = vadd.f32 %v1095, %v1101
    %v1106 = vadd.f32 %v1096, %v1101
    %v1107 = vlaneseq
    %v1108 = vshrl.u32 %v1107, 7
    %v1109 = vadd.s32 %v1108, 8
    %s1110 = smul.u32 0, 16
    %v1111 = vstv %s1110
    %v1112 = vadd.s32 %v1108, %v1111
    %v1113 = vadd.s32 %v1109, %v1111
    %v1114 = vld [vmem:[#allocation2] sm:$0x1]
    %v1115 = vlaneseq
    %v1116 = vshrl.u32 %v1115, 7
    %v1117 = vsub.s32 0, %v1116
    %v1118 = vrot.slane %v1114, %v1117
    %vm1119 = vcmp.eq.s32.totalorder %v1112, %v1118
    %vm1120 = vcmp.eq.s32.totalorder %v1113, %v1118
    %v1121 = vsel %vm1119, 1, 0
    %v1122 = vsel %vm1120, 1, 0
    %v1123 = vcvt.s32.f32 %v1121
    %v1124 = vcvt.s32.f32 %v1122
    %v1125 = vpack.c.bf16 %v1124, %v1123
    %v1126 = vpack.c.bf16 %v1104, %v1103
    %v1127 = vpack.c.bf16 %v1106, %v1105
    %vm1128 = vcmask 261120
    %v1130 = vsel %vm1128, %v1125, 0
    %1132 = vmatprep.subr.bf16.mxu0 0
    %1133 = vmatpush1.bf16.msra.mxu0 %v1126
    %1134 = vmatprep.subr.bf16.mxu0 0
    %1135 = vmatpush1.bf16.msra.mxu0 %v1127
    %1136 = vmatprep.subr.bf16.mxu0 0
    %1137 = vmatpush1.bf16.msra.mxu0 0
    %1138 = vmatprep.subr.bf16.mxu0 0
    %1139 = vmatpush1.bf16.msra.mxu0 0
    %1140 = vmatprep.subr.bf16.mxu0 0
    %1141 = vmatpush1.bf16.msra.mxu0 0
    %1142 = vmatprep.subr.bf16.mxu0 0
    %1143 = vmatpush1.bf16.msra.mxu0 0
    %1144 = vmatprep.subr.bf16.mxu0 0
    %1145 = vmatpush1.bf16.msra.mxu0 0
    %1146 = vmatprep.subr.bf16.mxu0 0
    %1147 = vmatpush1.bf16.msra.mxu0 0
    %1148 = vmatprep.subr.bf16.mxu0 0
    %1149 = vmatpush1.bf16.msra.mxu0 0
    %1150 = vmatprep.subr.bf16.mxu0 0
    %1151 = vmatpush1.bf16.msra.mxu0 0
    %1152 = vmatprep.subr.bf16.mxu0 0
    %1153 = vmatpush1.bf16.msra.mxu0 0
    %1154 = vmatprep.subr.bf16.mxu0 0
    %1155 = vmatpush1.bf16.msra.mxu0 0
    %1156 = vmatprep.subr.bf16.mxu0 0
    %1157 = vmatpush1.bf16.msra.mxu0 0
    %1158 = vmatprep.subr.bf16.mxu0 0
    %1159 = vmatpush1.bf16.msra.mxu0 0
    %1160 = vmatprep.subr.bf16.mxu0 0
    %1161 = vmatpush1.bf16.msra.mxu0 0
    %1162 = vmatprep.subr.bf16.mxu0 0
    %1163 = vmatpush1.bf16.msra.mxu0 0
    %1164 = vmatprep.mubr.bf16.mxu0 0
    %1165 = vmatmul.mubr.bf16.gmra.mrb[0].mxu0 %v1130
    %v1166 = vpop.f32.mrb[0].mxu0
    %v1167 = vadd.f32 0.0, %v1166
    %v1168 = vpop.f32.mrb[0].mxu0
    %v1169 = vpop.f32.mrb[0].mxu0
    %v1170 = vadd.f32 0.0, %v1169
    %v1171 = vpop.f32.mrb[0].mxu0
    %1172 = vdwg.mxu0
    %p1173 = scmp.eq.s32.totalorder 0, 0
    // Predicated region
    $region122: #{encoder_processor_decoder.10} parent=1 // pred_check
      %p1174 = pneg %p1173
    $region123: #{encoder_processor_decoder.10} parent=1 // pred_check_branch
      %1176 = sbr.rel (%p1174) target = $region125
    $region124: #{encoder_processor_decoder.10} parent=1 // pred_region
      %1177 = vst [vmem:[#allocation26] sm:$0xff] 0.0
      %1178 = vst [vmem:[#allocation26 + $0x8] sm:$0xff] 0.0
    $region125: #{encoder_processor_decoder.10} parent=1 // pred_fallthru
      _
    %v1179 = vld [vmem:[#allocation26] sm:$0xff]
    %v1180 = vld [vmem:[#allocation26 + $0x8] sm:$0xff]
    %v1181 = vadd.f32 %v1179, %v1167
    %v1182 = vadd.f32 %v1180, %v1170
    %1183 = vst [vmem:[#allocation26] sm:$0xff] %v1181
    %1184 = vst [vmem:[#allocation26 + $0x8] sm:$0xff] %v1182
    // Predicated region
    $region126: #{encoder_processor_decoder.10} parent=1 // pred_check
      _
    $region127: #{encoder_processor_decoder.10} parent=1 // pred_check_branch
      %1186 = sbr.rel (0) target = $region129
    $region128: #{encoder_processor_decoder.10} parent=1 // pred_region
      %s1188 = ssub.s32 256, 256
      %1189 = vsyncadd [#allocation4], %s1188
      %s1190 = sshll.u32 [#allocation26], 4
      %s1191 = int_to_ptr.vmem [resolvable:$true] %s1190
      %1196 = dma.vmem_to_hbm [thread:$0]  %s1191, 256, %s15, [#allocation4], 128, 128, 8
    $region129: #{encoder_processor_decoder.10} parent=1 // pred_fallthru
      _
    // Predicated region
    $region130: #{encoder_processor_decoder.10} parent=1 // pred_check
      _
    $region131: #{encoder_processor_decoder.10} parent=1 // pred_check_branch
      %1198 = sbr.rel (0) target = $region133
    $region132: #{encoder_processor_decoder.10} parent=1 // pred_region
      %1199 = dma.done [#allocation4], 256
    $region133: #{encoder_processor_decoder.10} parent=1 // pred_fallthru
      _
    %1200 = vsyncpa [#allocation3], 1
    %1201 = vsyncpa [#allocation6], 1
    %1202 = vsyncpa [#allocation9], 1
    %1203 = vsyncpa [#allocation12], 1
    %1204 = vsyncpa [#allocation15], 1
    %1205 = vsyncpa [#allocation18], 1
    %1206 = vsyncpa [#allocation21], 1
    %1207 = vsyncpa [#allocation24], 1
    %1208 = vsyncpa [#allocation4], 1

// kernel: encoder_processor_decoder.15
$region0: #{encoder_processor_decoder.15}
  #allocation0 [shape = 'u32[]', space=smem, size = 0x4, offset = 0x4, fixed_abs, tag = 'smem constant byte address 0x4 - core index']
  #allocation1 [shape = 'u32[144,128]{1,0:T(1,128)}', space=vmem, size = 0x12000, scoped, tag = 'internal scratch']
  %s0 = inlined_call_operand.hbm [shape: f32[16,128], index: 0, kind: input, shape index: {}]
  %s1 = inlined_call_operand.hbm [shape: bf16[128,128], index: 1, kind: input, shape index: {}]
  %s2 = inlined_call_operand.hbm [shape: f32[1,128], index: 2, kind: input, shape index: {}]
  %s3 = inlined_call_operand.hbm [shape: bf16[128,128], index: 3, kind: input, shape index: {}]
  %s4 = inlined_call_operand.hbm [shape: f32[1,128], index: 4, kind: input, shape index: {}]
  %s5 = inlined_call_operand.hbm [shape: bf16[128,3], index: 5, kind: input, shape index: {}]
  %s6 = inlined_call_operand.hbm [shape: f32[1,3], index: 6, kind: input, shape index: {}]
  %s7 = inlined_call_operand.hbm [shape: f32[16,3], index: 7, kind: output, shape index: {}]
  %s8 = sld [smem:[#allocation0]]
  $region66: #{encoder_processor_decoder.15} parent=0
    _
  %s10 = ssub.s32 1, %s8
  %s11 = scalar_select 0, %s10, %s8
  $region1: #{encoder_processor_decoder.15} parent=0
    #allocation2 [shape = 'u8[8192]{0}', space=vmem, size = 0x2000, scoped, tag = 'input window, operand 0, single buffered']
    #allocation3 [shape = 's32[1]{0}', space=sflag, size = 0x4, scoped, tag = 'scoped memory for encoder_processor_decoder.15']
    #allocation4 [shape = 's32[1]{0}', space=sflag, size = 0x4, scoped, tag = 'scoped memory for encoder_processor_decoder.15']
    #allocation5 [shape = 'u8[32768]{0}', space=vmem, size = 0x8000, scoped, tag = 'input window, operand 1, single buffered']
    #allocation6 [shape = 's32[1]{0}', space=sflag, size = 0x4, scoped, tag = 'scoped memory for encoder_processor_decoder.15']
    #allocation7 [shape = 'u8[512]{0}', space=vmem, size = 0x400, scoped, tag = 'input window, operand 2, single buffered']
    #allocation8 [shape = 'u8[32768]{0}', space=vmem, size = 0x8000, scoped, tag = 'input window, operand 3, single buffered']
    #allocation9 [shape = 's32[1]{0}', space=sflag, size = 0x4, scoped, tag = 'scoped memory for encoder_processor_decoder.15']
    #allocation10 [shape = 'u8[512]{0}', space=vmem, size = 0x400, scoped, tag = 'input window, operand 4, single buffered']
    #allocation11 [shape = 'u8[32768]{0}', space=vmem, size = 0x8000, scoped, tag = 'input window, operand 5, single buffered']
    #allocation12 [shape = 's32[1]{0}', space=sflag, size = 0x4, scoped, tag = 'scoped memory for encoder_processor_decoder.15']
    #allocation13 [shape = 'u8[512]{0}', space=vmem, size = 0x400, scoped, tag = 'input window, operand 6, single buffered']
    #allocation14 [shape = 'u8[8192]{0}', space=vmem, size = 0x2000, scoped, tag = 'output window, operand 0, single buffered']
    %12 = vsyncpa [#allocation3], 0
    %13 = vsyncpa [#allocation6], 0
    %14 = vsyncpa [#allocation9], 0
    %15 = vsyncpa [#allocation12], 0
    %16 = vsyncpa [#allocation4], 0
    // Predicated region
    $region2: #{encoder_processor_decoder.15} parent=1 // pred_check
      _
    $region3: #{encoder_processor_decoder.15} parent=1 // pred_check_branch
      %18 = sbr.rel (0) target = $region5
    $region4: #{encoder_processor_decoder.15} parent=1 // pred_region
      %s20 = ssub.s32 256, 256
      %21 = vsyncadd [#allocation3], %s20
      %s22 = sshll.u32 [#allocation2], 4
      %s23 = int_to_ptr.vmem [resolvable:$true] %s22
      %28 = dma.hbm_to_vmem [thread:$0]  %s0, 256, %s23, [#allocation3], 128, 128, 8
    $region5: #{encoder_processor_decoder.15} parent=1 // pred_fallthru
      _
    // Predicated region
    $region6: #{encoder_processor_decoder.15} parent=1 // pred_check
      _
    $region7: #{encoder_processor_decoder.15} parent=1 // pred_check_branch
      %30 = sbr.rel (0) target = $region9
    $region8: #{encoder_processor_decoder.15} parent=1 // pred_region
      %s32 = ssub.s32 1024, 1024
      %33 = vsyncadd [#allocation6], %s32
      %s34 = sshll.u32 [#allocation5], 4
      %s35 = int_to_ptr.vmem [resolvable:$true] %s34
      %40 = dma.hbm_to_vmem [thread:$0]  %s1, 1024, %s35, [#allocation6], 64, 64, 4
    $region9: #{encoder_processor_decoder.15} parent=1 // pred_fallthru
      _
    // Predicated region
    $region10: #{encoder_processor_decoder.15} parent=1 // pred_check
      _
    $region11: #{encoder_processor_decoder.15} parent=1 // pred_check_branch
      %42 = sbr.rel (0) target = $region13
    $region12: #{encoder_processor_decoder.15} parent=1 // pred_region
      %s44 = ssub.s32 16, 16
      %45 = vsyncadd [#allocation6], %s44
      %s47 = sshll.u32 [#allocation7], 4
      %s48 = int_to_ptr.vmem [resolvable:$true] %s47
      %50 = dma.hbm_to_vmem [thread:$0]  %s2, 16, %s48, [#allocation6]
    $region13: #{encoder_processor_decoder.15} parent=1 // pred_fallthru
      _
    // Predicated region
    $region14: #{encoder_processor_decoder.15} parent=1 // pred_check
      _
    $region15: #{encoder_processor_decoder.15} parent=1 // pred_check_branch
      %52 = sbr.rel (0) target = $region17
    $region16: #{encoder_processor_decoder.15} parent=1 // pred_region
      %s54 = ssub.s32 1024, 1024
      %55 = vsyncadd [#allocation9], %s54
      %s56 = sshll.u32 [#allocation8], 4
      %s57 = int_to_ptr.vmem [resolvable:$true] %s56
      %62 = dma.hbm_to_vmem [thread:$0]  %s3, 1024, %s57, [#allocation9], 64, 64, 4
    $region17: #{encoder_processor_decoder.15} parent=1 // pred_fallthru
      _
    // Predicated region
    $region18: #{encoder_processor_decoder.15} parent=1 // pred_check
      _
    $region19: #{encoder_processor_decoder.15} parent=1 // pred_check_branch
      %64 = sbr.rel (0) target = $region21
    $region20: #{encoder_processor_decoder.15} parent=1 // pred_region
      %s66 = ssub.s32 16, 16
      %67 = vsyncadd [#allocation9], %s66
      %s69 = sshll.u32 [#allocation10], 4
      %s70 = int_to_ptr.vmem [resolvable:$true] %s69
      %72 = dma.hbm_to_vmem [thread:$0]  %s4, 16, %s70, [#allocation9]
    $region21: #{encoder_processor_decoder.15} parent=1 // pred_fallthru
      _
    // Predicated region
    $region22: #{encoder_processor_decoder.15} parent=1 // pred_check
      _
    $region23: #{encoder_processor_decoder.15} parent=1 // pred_check_branch
      %74 = sbr.rel (0) target = $region25
    $region24: #{encoder_processor_decoder.15} parent=1 // pred_region
      %s76 = ssub.s32 1024, 1024
      %77 = vsyncadd [#allocation12], %s76
      %s78 = sshll.u32 [#allocation11], 4
      %s79 = int_to_ptr.vmem [resolvable:$true] %s78
      %84 = dma.hbm_to_vmem [thread:$0]  %s5, 1024, %s79, [#allocation12], 64, 64, 4
    $region25: #{encoder_processor_decoder.15} parent=1 // pred_fallthru
      _
    // Predicated region
    $region26: #{encoder_processor_decoder.15} parent=1 // pred_check
      _
    $region27: #{encoder_processor_decoder.15} parent=1 // pred_check_branch
      %86 = sbr.rel (0) target = $region29
    $region28: #{encoder_processor_decoder.15} parent=1 // pred_region
      %s88 = ssub.s32 16, 16
      %89 = vsyncadd [#allocation12], %s88
      %s91 = sshll.u32 [#allocation13], 4
      %s92 = int_to_ptr.vmem [resolvable:$true] %s91
      %94 = dma.hbm_to_vmem [thread:$0]  %s6, 16, %s92, [#allocation12]
    $region29: #{encoder_processor_decoder.15} parent=1 // pred_fallthru
      _
    // Predicated region
    $region30: #{encoder_processor_decoder.15} parent=1 // pred_check
      _
    $region31: #{encoder_processor_decoder.15} parent=1 // pred_check_branch
      %96 = sbr.rel (0) target = $region33
    $region32: #{encoder_processor_decoder.15} parent=1 // pred_region
      %97 = dma.done [#allocation3], 256
    $region33: #{encoder_processor_decoder.15} parent=1 // pred_fallthru
      _
    // Predicated region
    $region34: #{encoder_processor_decoder.15} parent=1 // pred_check
      _
    $region35: #{encoder_processor_decoder.15} parent=1 // pred_check_branch
      %99 = sbr.rel (0) target = $region37
    $region36: #{encoder_processor_decoder.15} parent=1 // pred_region
      %100 = dma.done [#allocation6], 1024
    $region37: #{encoder_processor_decoder.15} parent=1 // pred_fallthru
      _
    // Predicated region
    $region38: #{encoder_processor_decoder.15} parent=1 // pred_check
      _
    $region39: #{encoder_processor_decoder.15} parent=1 // pred_check_branch
      %102 = sbr.rel (0) target = $region41
    $region40: #{encoder_processor_decoder.15} parent=1 // pred_region
      %103 = dma.done [#allocation6], 16
    $region41: #{encoder_processor_decoder.15} parent=1 // pred_fallthru
      _
    // Predicated region
    $region42: #{encoder_processor_decoder.15} parent=1 // pred_check
      _
    $region43: #{encoder_processor_decoder.15} parent=1 // pred_check_branch
      %105 = sbr.rel (0) target = $region45
    $region44: #{encoder_processor_decoder.15} parent=1 // pred_region
      %106 = dma.done [#allocation9], 1024
    $region45: #{encoder_processor_decoder.15} parent=1 // pred_fallthru
      _
    // Predicated region
    $region46: #{encoder_processor_decoder.15} parent=1 // pred_check
      _
    $region47: #{encoder_processor_decoder.15} parent=1 // pred_check_branch
      %108 = sbr.rel (0) target = $region49
    $region48: #{encoder_processor_decoder.15} parent=1 // pred_region
      %109 = dma.done [#allocation9], 16
    $region49: #{encoder_processor_decoder.15} parent=1 // pred_fallthru
      _
    // Predicated region
    $region50: #{encoder_processor_decoder.15} parent=1 // pred_check
      _
    $region51: #{encoder_processor_decoder.15} parent=1 // pred_check_branch
      %111 = sbr.rel (0) target = $region53
    $region52: #{encoder_processor_decoder.15} parent=1 // pred_region
      %112 = dma.done [#allocation12], 1024
    $region53: #{encoder_processor_decoder.15} parent=1 // pred_fallthru
      _
    // Predicated region
    $region54: #{encoder_processor_decoder.15} parent=1 // pred_check
      _
    $region55: #{encoder_processor_decoder.15} parent=1 // pred_check_branch
      %114 = sbr.rel (0) target = $region57
    $region56: #{encoder_processor_decoder.15} parent=1 // pred_region
      %115 = dma.done [#allocation12], 16
    $region57: #{encoder_processor_decoder.15} parent=1 // pred_fallthru
      _
    %v117 = vld [vmem:[#allocation2] sm:$0xff]
    %v118 = vld [vmem:[#allocation2 + $0x8] sm:$0xff]
    %v119 = vld [vmem:[#allocation5] sm:$0xf]
    %v120 = vld [vmem:[#allocation5 + $0x4] sm:$0xf]
    %v121 = vld [vmem:[#allocation5 + $0x8] sm:$0xf]
    %v122 = vld [vmem:[#allocation5 + $0xc] sm:$0xf]
    %v123 = vld [vmem:[#allocation5 + $0x10] sm:$0xf]
    %v124 = vld [vmem:[#allocation5 + $0x14] sm:$0xf]
    %v125 = vld [vmem:[#allocation5 + $0x18] sm:$0xf]
    %v126 = vld [vmem:[#allocation5 + $0x1c] sm:$0xf]
    %v127 = vld [vmem:[#allocation5 + $0x20] sm:$0xf]
    %v128 = vld [vmem:[#allocation5 + $0x24] sm:$0xf]
    %v129 = vld [vmem:[#allocation5 + $0x28] sm:$0xf]
    %v130 = vld [vmem:[#allocation5 + $0x2c] sm:$0xf]
    %v131 = vld [vmem:[#allocation5 + $0x30] sm:$0xf]
    %v132 = vld [vmem:[#allocation5 + $0x34] sm:$0xf]
    %v133 = vld [vmem:[#allocation5 + $0x38] sm:$0xf]
    %v134 = vld [vmem:[#allocation5 + $0x3c] sm:$0xf]
    %v135 = vld [vmem:[#allocation7] sm:$0x1]
    %v136 = vld [vmem:[#allocation8] sm:$0xf]
    %v137 = vld [vmem:[#allocation8 + $0x4] sm:$0xf]
    %v138 = vld [vmem:[#allocation8 + $0x8] sm:$0xf]
    %v139 = vld [vmem:[#allocation8 + $0xc] sm:$0xf]
    %v140 = vld [vmem:[#allocation8 + $0x10] sm:$0xf]
    %v141 = vld [vmem:[#allocation8 + $0x14] sm:$0xf]
    %v142 = vld [vmem:[#allocation8 + $0x18] sm:$0xf]
    %v143 = vld [vmem:[#allocation8 + $0x1c] sm:$0xf]
    %v144 = vld [vmem:[#allocation8 + $0x20] sm:$0xf]
    %v145 = vld [vmem:[#allocation8 + $0x24] sm:$0xf]
    %v146 = vld [vmem:[#allocation8 + $0x28] sm:$0xf]
    %v147 = vld [vmem:[#allocation8 + $0x2c] sm:$0xf]
    %v148 = vld [vmem:[#allocation8 + $0x30] sm:$0xf]
    %v149 = vld [vmem:[#allocation8 + $0x34] sm:$0xf]
    %v150 = vld [vmem:[#allocation8 + $0x38] sm:$0xf]
    %v151 = vld [vmem:[#allocation8 + $0x3c] sm:$0xf]
    %v152 = vld [vmem:[#allocation10] sm:$0x1]
    %v153 = vld [vmem:[#allocation11] sm:$0xf]
    %v154 = vld [vmem:[#allocation11 + $0x4] sm:$0xf]
    %v155 = vld [vmem:[#allocation11 + $0x8] sm:$0xf]
    %v156 = vld [vmem:[#allocation11 + $0xc] sm:$0xf]
    %v157 = vld [vmem:[#allocation11 + $0x10] sm:$0xf]
    %v158 = vld [vmem:[#allocation11 + $0x14] sm:$0xf]
    %v159 = vld [vmem:[#allocation11 + $0x18] sm:$0xf]
    %v160 = vld [vmem:[#allocation11 + $0x1c] sm:$0xf]
    %v161 = vld [vmem:[#allocation11 + $0x20] sm:$0xf]
    %v162 = vld [vmem:[#allocation11 + $0x24] sm:$0xf]
    %v163 = vld [vmem:[#allocation11 + $0x28] sm:$0xf]
    %v164 = vld [vmem:[#allocation11 + $0x2c] sm:$0xf]
    %v165 = vld [vmem:[#allocation11 + $0x30] sm:$0xf]
    %v166 = vld [vmem:[#allocation11 + $0x34] sm:$0xf]
    %v167 = vld [vmem:[#allocation11 + $0x38] sm:$0xf]
    %v168 = vld [vmem:[#allocation11 + $0x3c] sm:$0xf]
    %v169 = vld [vmem:[#allocation13] sm:$0x1]
    %v170 = vpack.c.bf16 %v118, %v117
    %v172 = vlaneseq
    %v173 = vshrl.u32 %v172, 7
    %v174 = vsub.s32 0, %v173
    %v175 = vrot.slane %v135, %v174
    %v193 = vunpack.c.l.b16 %v119
    %v194 = vunpack.c.l.b16 %v120
    %v195 = vunpack.c.l.b16 %v121
    %v196 = vunpack.c.l.b16 %v122
    %v197 = vunpack.c.l.b16 %v123
    %v198 = vunpack.c.l.b16 %v124
    %v199 = vunpack.c.l.b16 %v125
    %v200 = vunpack.c.l.b16 %v126
    %v201 = vunpack.c.l.b16 %v127
    %v202 = vunpack.c.l.b16 %v128
    %v203 = vunpack.c.l.b16 %v129
    %v204 = vunpack.c.l.b16 %v130
    %v205 = vunpack.c.l.b16 %v131
    %v206 = vunpack.c.l.b16 %v132
    %v207 = vunpack.c.l.b16 %v133
    %v208 = vunpack.c.l.b16 %v134
    %v209 = vpack.c.b16 %v194, %v193
    %v210 = vpack.c.b16 %v196, %v195
    %v211 = vpack.c.b16 %v198, %v197
    %v212 = vpack.c.b16 %v200, %v199
    %v213 = vpack.c.b16 %v202, %v201
    %v214 = vpack.c.b16 %v204, %v203
    %v215 = vpack.c.b16 %v206, %v205
    %v216 = vpack.c.b16 %v208, %v207
    %225 = vmatprep.subr.bf16.mxu0 0
    %226 = vmatpush1.bf16.msra.mxu0 %v209
    %227 = vmatprep.subr.bf16.mxu0 0
    %228 = vmatpush1.bf16.msra.mxu0 %v210
    %229 = vmatprep.subr.bf16.mxu0 0
    %230 = vmatpush1.bf16.msra.mxu0 %v211
    %231 = vmatprep.subr.bf16.mxu0 0
    %232 = vmatpush1.bf16.msra.mxu0 %v212
    %233 = vmatprep.subr.bf16.mxu0 0
    %234 = vmatpush1.bf16.msra.mxu0 %v213
    %235 = vmatprep.subr.bf16.mxu0 0
    %236 = vmatpush1.bf16.msra.mxu0 %v214
    %237 = vmatprep.subr.bf16.mxu0 0
    %238 = vmatpush1.bf16.msra.mxu0 %v215
    %239 = vmatprep.subr.bf16.mxu0 0
    %240 = vmatpush1.bf16.msra.mxu0 %v216
    %241 = vmatprep.subr.bf16.mxu0 0
    %242 = vmatpush1.bf16.msra.mxu0 0
    %243 = vmatprep.subr.bf16.mxu0 0
    %244 = vmatpush1.bf16.msra.mxu0 0
    %245 = vmatprep.subr.bf16.mxu0 0
    %246 = vmatpush1.bf16.msra.mxu0 0
    %247 = vmatprep.subr.bf16.mxu0 0
    %248 = vmatpush1.bf16.msra.mxu0 0
    %249 = vmatprep.subr.bf16.mxu0 0
    %250 = vmatpush1.bf16.msra.mxu0 0
    %251 = vmatprep.subr.bf16.mxu0 0
    %252 = vmatpush1.bf16.msra.mxu0 0
    %253 = vmatprep.subr.bf16.mxu0 0
    %254 = vmatpush1.bf16.msra.mxu0 0
    %255 = vmatprep.subr.bf16.mxu0 0
    %256 = vmatpush1.bf16.msra.mxu0 0
    %257 = vmatprep.mubr.bf16.mxu0 0
    %258 = vmatmul.mubr.bf16.gmra.mrb[0].mxu0 %v170
    %v259 = vpop.f32.mrb[0].mxu0
    %v260 = vadd.f32 %v175, %v259
    %v261 = vpop.f32.mrb[0].mxu0
    %v262 = vpop.f32.mrb[0].mxu0
    %v263 = vadd.f32 %v175, %v262
    %v264 = vpop.f32.mrb[0].mxu0
    %265 = vdwg.mxu0
    %v266 = vmax.f32 %v260, 0.0
    %v267 = vmax.f32 %v263, 0.0
    %v268 = vpack.c.bf16 %v267, %v266
    %v270 = vlaneseq
    %v271 = vshrl.u32 %v270, 7
    %v272 = vsub.s32 0, %v271
    %v273 = vrot.slane %v152, %v272
    %v291 = vunpack.c.l.b16 %v136
    %v292 = vunpack.c.l.b16 %v137
    %v293 = vunpack.c.l.b16 %v138
    %v294 = vunpack.c.l.b16 %v139
    %v295 = vunpack.c.l.b16 %v140
    %v296 = vunpack.c.l.b16 %v141
    %v297 = vunpack.c.l.b16 %v142
    %v298 = vunpack.c.l.b16 %v143
    %v299 = vunpack.c.l.b16 %v144
    %v300 = vunpack.c.l.b16 %v145
    %v301 = vunpack.c.l.b16 %v146
    %v302 = vunpack.c.l.b16 %v147
    %v303 = vunpack.c.l.b16 %v148
    %v304 = vunpack.c.l.b16 %v149
    %v305 = vunpack.c.l.b16 %v150
    %v306 = vunpack.c.l.b16 %v151
    %v307 = vpack.c.b16 %v292, %v291
    %v308 = vpack.c.b16 %v294, %v293
    %v309 = vpack.c.b16 %v296, %v295
    %v310 = vpack.c.b16 %v298, %v297
    %v311 = vpack.c.b16 %v300, %v299
    %v312 = vpack.c.b16 %v302, %v301
    %v313 = vpack.c.b16 %v304, %v303
    %v314 = vpack.c.b16 %v306, %v305
    %323 = vmatprep.subr.bf16.mxu0 0
    %324 = vmatpush1.bf16.msra.mxu0 %v307
    %325 = vmatprep.subr.bf16.mxu0 0
    %326 = vmatpush1.bf16.msra.mxu0 %v308
    %327 = vmatprep.subr.bf16.mxu0 0
    %328 = vmatpush1.bf16.msra.mxu0 %v309
    %329 = vmatprep.subr.bf16.mxu0 0
    %330 = vmatpush1.bf16.msra.mxu0 %v310
    %331 = vmatprep.subr.bf16.mxu0 0
    %332 = vmatpush1.bf16.msra.mxu0 %v311
    %333 = vmatprep.subr.bf16.mxu0 0
    %334 = vmatpush1.bf16.msra.mxu0 %v312
    %335 = vmatprep.subr.bf16.mxu0 0
    %336 = vmatpush1.bf16.msra.mxu0 %v313
    %337 = vmatprep.subr.bf16.mxu0 0
    %338 = vmatpush1.bf16.msra.mxu0 %v314
    %339 = vmatprep.subr.bf16.mxu0 0
    %340 = vmatpush1.bf16.msra.mxu0 0
    %341 = vmatprep.subr.bf16.mxu0 0
    %342 = vmatpush1.bf16.msra.mxu0 0
    %343 = vmatprep.subr.bf16.mxu0 0
    %344 = vmatpush1.bf16.msra.mxu0 0
    %345 = vmatprep.subr.bf16.mxu0 0
    %346 = vmatpush1.bf16.msra.mxu0 0
    %347 = vmatprep.subr.bf16.mxu0 0
    %348 = vmatpush1.bf16.msra.mxu0 0
    %349 = vmatprep.subr.bf16.mxu0 0
    %350 = vmatpush1.bf16.msra.mxu0 0
    %351 = vmatprep.subr.bf16.mxu0 0
    %352 = vmatpush1.bf16.msra.mxu0 0
    %353 = vmatprep.subr.bf16.mxu0 0
    %354 = vmatpush1.bf16.msra.mxu0 0
    %355 = vmatprep.mubr.bf16.mxu0 0
    %356 = vmatmul.mubr.bf16.gmra.mrb[0].mxu0 %v268
    %v357 = vpop.f32.mrb[0].mxu0
    %v358 = vadd.f32 %v273, %v357
    %v359 = vpop.f32.mrb[0].mxu0
    %v360 = vpop.f32.mrb[0].mxu0
    %v361 = vadd.f32 %v273, %v360
    %v362 = vpop.f32.mrb[0].mxu0
    %363 = vdwg.mxu0
    %v364 = vmax.f32 %v358, 0.0
    %v365 = vmax.f32 %v361, 0.0
    %v366 = vpack.c.bf16 %v365, %v364
    %v368 = vlaneseq
    %v369 = vshrl.u32 %v368, 7
    %v370 = vsub.s32 0, %v369
    %v371 = vrot.slane %v169, %v370
    %v389 = vunpack.c.l.b16 %v153
    %v390 = vunpack.c.l.b16 %v154
    %v391 = vunpack.c.l.b16 %v155
    %v392 = vunpack.c.l.b16 %v156
    %v393 = vunpack.c.l.b16 %v157
    %v394 = vunpack.c.l.b16 %v158
    %v395 = vunpack.c.l.b16 %v159
    %v396 = vunpack.c.l.b16 %v160
    %v397 = vunpack.c.l.b16 %v161
    %v398 = vunpack.c.l.b16 %v162
    %v399 = vunpack.c.l.b16 %v163
    %v400 = vunpack.c.l.b16 %v164
    %v401 = vunpack.c.l.b16 %v165
    %v402 = vunpack.c.l.b16 %v166
    %v403 = vunpack.c.l.b16 %v167
    %v404 = vunpack.c.l.b16 %v168
    %v405 = vpack.c.b16 %v390, %v389
    %v406 = vpack.c.b16 %v392, %v391
    %v407 = vpack.c.b16 %v394, %v393
    %v408 = vpack.c.b16 %v396, %v395
    %v409 = vpack.c.b16 %v398, %v397
    %v410 = vpack.c.b16 %v400, %v399
    %v411 = vpack.c.b16 %v402, %v401
    %v412 = vpack.c.b16 %v404, %v403
    %421 = vmatprep.subr.bf16.mxu0 0
    %422 = vmatpush1.bf16.msra.mxu0 %v405
    %423 = vmatprep.subr.bf16.mxu0 0
    %424 = vmatpush1.bf16.msra.mxu0 %v406
    %425 = vmatprep.subr.bf16.mxu0 0
    %426 = vmatpush1.bf16.msra.mxu0 %v407
    %427 = vmatprep.subr.bf16.mxu0 0
    %428 = vmatpush1.bf16.msra.mxu0 %v408
    %429 = vmatprep.subr.bf16.mxu0 0
    %430 = vmatpush1.bf16.msra.mxu0 %v409
    %431 = vmatprep.subr.bf16.mxu0 0
    %432 = vmatpush1.bf16.msra.mxu0 %v410
    %433 = vmatprep.subr.bf16.mxu0 0
    %434 = vmatpush1.bf16.msra.mxu0 %v411
    %435 = vmatprep.subr.bf16.mxu0 0
    %436 = vmatpush1.bf16.msra.mxu0 %v412
    %437 = vmatprep.subr.bf16.mxu0 0
    %438 = vmatpush1.bf16.msra.mxu0 0
    %439 = vmatprep.subr.bf16.mxu0 0
    %440 = vmatpush1.bf16.msra.mxu0 0
    %441 = vmatprep.subr.bf16.mxu0 0
    %442 = vmatpush1.bf16.msra.mxu0 0
    %443 = vmatprep.subr.bf16.mxu0 0
    %444 = vmatpush1.bf16.msra.mxu0 0
    %445 = vmatprep.subr.bf16.mxu0 0
    %446 = vmatpush1.bf16.msra.mxu0 0
    %447 = vmatprep.subr.bf16.mxu0 0
    %448 = vmatpush1.bf16.msra.mxu0 0
    %449 = vmatprep.subr.bf16.mxu0 0
    %450 = vmatpush1.bf16.msra.mxu0 0
    %451 = vmatprep.subr.bf16.mxu0 0
    %452 = vmatpush1.bf16.msra.mxu0 0
    %453 = vmatprep.mubr.bf16.mxu0 0
    %454 = vmatmul.mubr.bf16.gmra.mrb[0].mxu0 %v366
    %v455 = vpop.f32.mrb[0].mxu0
    %v456 = vadd.f32 %v371, %v455
    %v457 = vpop.f32.mrb[0].mxu0
    %v458 = vpop.f32.mrb[0].mxu0
    %v459 = vadd.f32 %v371, %v458
    %v460 = vpop.f32.mrb[0].mxu0
    %461 = vdwg.mxu0
    %vm462 = vcmask 23552
    %463 = vst.msk [vmem:[#allocation14] sm:$0xff] %vm462, %v456
    %464 = vst.msk [vmem:[#allocation14 + $0x8] sm:$0xff] %vm462, %v459
    // Predicated region
    $region58: #{encoder_processor_decoder.15} parent=1 // pred_check
      _
    $region59: #{encoder_processor_decoder.15} parent=1 // pred_check_branch
      %466 = sbr.rel (0) target = $region61
    $region60: #{encoder_processor_decoder.15} parent=1 // pred_region
      %s468 = ssub.s32 256, 256
      %469 = vsyncadd [#allocation4], %s468
      %s470 = sshll.u32 [#allocation14], 4
      %s471 = int_to_ptr.vmem [resolvable:$true] %s470
      %476 = dma.vmem_to_hbm [thread:$0]  %s471, 256, %s7, [#allocation4], 128, 128, 8
    $region61: #{encoder_processor_decoder.15} parent=1 // pred_fallthru
      _
    // Predicated region
    $region62: #{encoder_processor_decoder.15} parent=1 // pred_check
      _
    $region63: #{encoder_processor_decoder.15} parent=1 // pred_check_branch
      %478 = sbr.rel (0) target = $region65
    $region64: #{encoder_processor_decoder.15} parent=1 // pred_region
      %479 = dma.done [#allocation4], 256
    $region65: #{encoder_processor_decoder.15} parent=1 // pred_fallthru
      _
    %480 = vsyncpa [#allocation3], 1
    %481 = vsyncpa [#allocation6], 1
    %482 = vsyncpa [#allocation9], 1
    %483 = vsyncpa [#allocation12], 1
    %484 = vsyncpa [#allocation4], 1

// kernel: encoder_processor_decoder.12
$region0: #{encoder_processor_decoder.12}
  #allocation0 [shape = 'u32[]', space=smem, size = 0x4, offset = 0x4, fixed_abs, tag = 'smem constant byte address 0x4 - core index']
  #allocation1 [shape = 'u32[144,128]{1,0:T(1,128)}', space=vmem, size = 0x12000, scoped, tag = 'internal scratch']
  %s0 = inlined_call_operand.hbm [shape: f32[32,128], index: 0, kind: input, shape index: {}, may-alias: {0,1}]
  %s1 = inlined_call_operand.hbm [shape: f32[32,128], index: 1, kind: input, shape index: {}, may-alias: {0,1}]
  %s2 = inlined_call_operand.hbm [shape: bf16[128,128], index: 2, kind: input, shape index: {}]
  %s3 = inlined_call_operand.hbm [shape: f32[1,128], index: 3, kind: input, shape index: {}]
  %s4 = inlined_call_operand.hbm [shape: bf16[128,128], index: 4, kind: input, shape index: {}]
  %s5 = inlined_call_operand.hbm [shape: f32[1,128], index: 5, kind: input, shape index: {}]
  %s6 = inlined_call_operand.hbm [shape: bf16[128,128], index: 6, kind: input, shape index: {}]
  %s7 = inlined_call_operand.hbm [shape: f32[1,128], index: 7, kind: input, shape index: {}]
  %s8 = inlined_call_operand.hbm [shape: f32[1,128], index: 8, kind: input, shape index: {}]
  %s9 = inlined_call_operand.hbm [shape: f32[1,128], index: 9, kind: input, shape index: {}]
  %s10 = inlined_call_operand.hbm [shape: f32[32,128], index: 10, kind: output, shape index: {}]
  %s11 = sld [smem:[#allocation0]]
  $region90: #{encoder_processor_decoder.12} parent=0
    _
  %s13 = ssub.s32 1, %s11
  %s14 = scalar_select 0, %s13, %s11
  $region1: #{encoder_processor_decoder.12} parent=0
    #allocation2 [shape = 'u8[16384]{0}', space=vmem, size = 0x4000, scoped, tag = 'input window, operand 0, single buffered']
    #allocation3 [shape = 's32[1]{0}', space=sflag, size = 0x4, scoped, tag = 'scoped memory for encoder_processor_decoder.12']
    #allocation4 [shape = 's32[1]{0}', space=sflag, size = 0x4, scoped, tag = 'scoped memory for encoder_processor_decoder.12']
    #allocation5 [shape = 'u8[16384]{0}', space=vmem, size = 0x4000, scoped, tag = 'input window, operand 1, single buffered']
    #allocation6 [shape = 's32[1]{0}', space=sflag, size = 0x4, scoped, tag = 'scoped memory for encoder_processor_decoder.12']
    #allocation7 [shape = 'u8[32768]{0}', space=vmem, size = 0x8000, scoped, tag = 'input window, operand 2, single buffered']
    #allocation8 [shape = 'u8[512]{0}', space=vmem, size = 0x400, scoped, tag = 'input window, operand 3, single buffered']
    #allocation9 [shape = 's32[1]{0}', space=sflag, size = 0x4, scoped, tag = 'scoped memory for encoder_processor_decoder.12']
    #allocation10 [shape = 'u8[32768]{0}', space=vmem, size = 0x8000, scoped, tag = 'input window, operand 4, single buffered']
    #allocation11 [shape = 'u8[512]{0}', space=vmem, size = 0x400, scoped, tag = 'input window, operand 5, single buffered']
    #allocation12 [shape = 's32[1]{0}', space=sflag, size = 0x4, scoped, tag = 'scoped memory for encoder_processor_decoder.12']
    #allocation13 [shape = 'u8[32768]{0}', space=vmem, size = 0x8000, scoped, tag = 'input window, operand 6, single buffered']
    #allocation14 [shape = 'u8[512]{0}', space=vmem, size = 0x400, scoped, tag = 'input window, operand 7, single buffered']
    #allocation15 [shape = 's32[1]{0}', space=sflag, size = 0x4, scoped, tag = 'scoped memory for encoder_processor_decoder.12']
    #allocation16 [shape = 'u8[512]{0}', space=vmem, size = 0x400, scoped, tag = 'input window, operand 8, single buffered']
    #allocation17 [shape = 'u8[512]{0}', space=vmem, size = 0x400, scoped, tag = 'input window, operand 9, single buffered']
    #allocation18 [shape = 's32[1]{0}', space=sflag, size = 0x4, scoped, tag = 'scoped memory for encoder_processor_decoder.12']
    #allocation19 [shape = 'u8[16384]{0}', space=vmem, size = 0x4000, scoped, tag = 'output window, operand 0, single buffered']
    %15 = vsyncpa [#allocation3], 0
    %16 = vsyncpa [#allocation6], 0
    %17 = vsyncpa [#allocation9], 0
    %18 = vsyncpa [#allocation12], 0
    %19 = vsyncpa [#allocation15], 0
    %20 = vsyncpa [#allocation18], 0
    %21 = vsyncpa [#allocation4], 0
    // Predicated region
    $region2: #{encoder_processor_decoder.12} parent=1 // pred_check
      _
    $region3: #{encoder_processor_decoder.12} parent=1 // pred_check_branch
      %23 = sbr.rel (0) target = $region5
    $region4: #{encoder_processor_decoder.12} parent=1 // pred_region
      %s25 = ssub.s32 512, 512
      %26 = vsyncadd [#allocation3], %s25
      %s27 = sshll.u32 [#allocation2], 4
      %s28 = int_to_ptr.vmem [resolvable:$true] %s27
      %33 = dma.hbm_to_vmem [thread:$0]  %s0, 512, %s28, [#allocation3], 128, 128, 8
    $region5: #{encoder_processor_decoder.12} parent=1 // pred_fallthru
      _
    // Predicated region
    $region6: #{encoder_processor_decoder.12} parent=1 // pred_check
      _
    $region7: #{encoder_processor_decoder.12} parent=1 // pred_check_branch
      %35 = sbr.rel (0) target = $region9
    $region8: #{encoder_processor_decoder.12} parent=1 // pred_region
      %s37 = ssub.s32 512, 512
      %38 = vsyncadd [#allocation6], %s37
      %s39 = sshll.u32 [#allocation5], 4
      %s40 = int_to_ptr.vmem [resolvable:$true] %s39
      %45 = dma.hbm_to_vmem [thread:$0]  %s1, 512, %s40, [#allocation6], 128, 128, 8
    $region9: #{encoder_processor_decoder.12} parent=1 // pred_fallthru
      _
    // Predicated region
    $region10: #{encoder_processor_decoder.12} parent=1 // pred_check
      _
    $region11: #{encoder_processor_decoder.12} parent=1 // pred_check_branch
      %47 = sbr.rel (0) target = $region13
    $region12: #{encoder_processor_decoder.12} parent=1 // pred_region
      %s49 = ssub.s32 1024, 1024
      %50 = vsyncadd [#allocation6], %s49
      %s51 = sshll.u32 [#allocation7], 4
      %s52 = int_to_ptr.vmem [resolvable:$true] %s51
      %57 = dma.hbm_to_vmem [thread:$0]  %s2, 1024, %s52, [#allocation6], 64, 64, 4
    $region13: #{encoder_processor_decoder.12} parent=1 // pred_fallthru
      _
    // Predicated region
    $region14: #{encoder_processor_decoder.12} parent=1 // pred_check
      _
    $region15: #{encoder_processor_decoder.12} parent=1 // pred_check_branch
      %59 = sbr.rel (0) target = $region17
    $region16: #{encoder_processor_decoder.12} parent=1 // pred_region
      %s61 = ssub.s32 16, 16
      %62 = vsyncadd [#allocation9], %s61
      %s64 = sshll.u32 [#allocation8], 4
      %s65 = int_to_ptr.vmem [resolvable:$true] %s64
      %67 = dma.hbm_to_vmem [thread:$0]  %s3, 16, %s65, [#allocation9]
    $region17: #{encoder_processor_decoder.12} parent=1 // pred_fallthru
      _
    // Predicated region
    $region18: #{encoder_processor_decoder.12} parent=1 // pred_check
      _
    $region19: #{encoder_processor_decoder.12} parent=1 // pred_check_branch
      %69 = sbr.rel (0) target = $region21
    $region20: #{encoder_processor_decoder.12} parent=1 // pred_region
      %s71 = ssub.s32 1024, 1024
      %72 = vsyncadd [#allocation9], %s71
      %s73 = sshll.u32 [#allocation10], 4
      %s74 = int_to_ptr.vmem [resolvable:$true] %s73
      %79 = dma.hbm_to_vmem [thread:$0]  %s4, 1024, %s74, [#allocation9], 64, 64, 4
    $region21: #{encoder_processor_decoder.12} parent=1 // pred_fallthru
      _
    // Predicated region
    $region22: #{encoder_processor_decoder.12} parent=1 // pred_check
      _
    $region23: #{encoder_processor_decoder.12} parent=1 // pred_check_branch
      %81 = sbr.rel (0) target = $region25
    $region24: #{encoder_processor_decoder.12} parent=1 // pred_region
      %s83 = ssub.s32 16, 16
      %84 = vsyncadd [#allocation12], %s83
      %s86 = sshll.u32 [#allocation11], 4
      %s87 = int_to_ptr.vmem [resolvable:$true] %s86
      %89 = dma.hbm_to_vmem [thread:$0]  %s5, 16, %s87, [#allocation12]
    $region25: #{encoder_processor_decoder.12} parent=1 // pred_fallthru
      _
    // Predicated region
    $region26: #{encoder_processor_decoder.12} parent=1 // pred_check
      _
    $region27: #{encoder_processor_decoder.12} parent=1 // pred_check_branch
      %91 = sbr.rel (0) target = $region29
    $region28: #{encoder_processor_decoder.12} parent=1 // pred_region
      %s93 = ssub.s32 1024, 1024
      %94 = vsyncadd [#allocation12], %s93
      %s95 = sshll.u32 [#allocation13], 4
      %s96 = int_to_ptr.vmem [resolvable:$true] %s95
      %101 = dma.hbm_to_vmem [thread:$0]  %s6, 1024, %s96, [#allocation12], 64, 64, 4
    $region29: #{encoder_processor_decoder.12} parent=1 // pred_fallthru
      _
    // Predicated region
    $region30: #{encoder_processor_decoder.12} parent=1 // pred_check
      _
    $region31: #{encoder_processor_decoder.12} parent=1 // pred_check_branch
      %103 = sbr.rel (0) target = $region33
    $region32: #{encoder_processor_decoder.12} parent=1 // pred_region
      %s105 = ssub.s32 16, 16
      %106 = vsyncadd [#allocation15], %s105
      %s108 = sshll.u32 [#allocation14], 4
      %s109 = int_to_ptr.vmem [resolvable:$true] %s108
      %111 = dma.hbm_to_vmem [thread:$0]  %s7, 16, %s109, [#allocation15]
    $region33: #{encoder_processor_decoder.12} parent=1 // pred_fallthru
      _
    // Predicated region
    $region34: #{encoder_processor_decoder.12} parent=1 // pred_check
      _
    $region35: #{encoder_processor_decoder.12} parent=1 // pred_check_branch
      %113 = sbr.rel (0) target = $region37
    $region36: #{encoder_processor_decoder.12} parent=1 // pred_region
      %s115 = ssub.s32 16, 16
      %116 = vsyncadd [#allocation15], %s115
      %s118 = sshll.u32 [#allocation16], 4
      %s119 = int_to_ptr.vmem [resolvable:$true] %s118
      %121 = dma.hbm_to_vmem [thread:$0]  %s8, 16, %s119, [#allocation15]
    $region37: #{encoder_processor_decoder.12} parent=1 // pred_fallthru
      _
    // Predicated region
    $region38: #{encoder_processor_decoder.12} parent=1 // pred_check
      _
    $region39: #{encoder_processor_decoder.12} parent=1 // pred_check_branch
      %123 = sbr.rel (0) target = $region41
    $region40: #{encoder_processor_decoder.12} parent=1 // pred_region
      %s125 = ssub.s32 16, 16
      %126 = vsyncadd [#allocation18], %s125
      %s128 = sshll.u32 [#allocation17], 4
      %s129 = int_to_ptr.vmem [resolvable:$true] %s128
      %131 = dma.hbm_to_vmem [thread:$0]  %s9, 16, %s129, [#allocation18]
    $region41: #{encoder_processor_decoder.12} parent=1 // pred_fallthru
      _
    // Predicated region
    $region42: #{encoder_processor_decoder.12} parent=1 // pred_check
      _
    $region43: #{encoder_processor_decoder.12} parent=1 // pred_check_branch
      %133 = sbr.rel (0) target = $region45
    $region44: #{encoder_processor_decoder.12} parent=1 // pred_region
      %134 = dma.done [#allocation3], 512
    $region45: #{encoder_processor_decoder.12} parent=1 // pred_fallthru
      _
    // Predicated region
    $region46: #{encoder_processor_decoder.12} parent=1 // pred_check
      _
    $region47: #{encoder_processor_decoder.12} parent=1 // pred_check_branch
      %136 = sbr.rel (0) target = $region49
    $region48: #{encoder_processor_decoder.12} parent=1 // pred_region
      %137 = dma.done [#allocation6], 512
    $region49: #{encoder_processor_decoder.12} parent=1 // pred_fallthru
      _
    // Predicated region
    $region50: #{encoder_processor_decoder.12} parent=1 // pred_check
      _
    $region51: #{encoder_processor_decoder.12} parent=1 // pred_check_branch
      %139 = sbr.rel (0) target = $region53
    $region52: #{encoder_processor_decoder.12} parent=1 // pred_region
      %140 = dma.done [#allocation6], 1024
    $region53: #{encoder_processor_decoder.12} parent=1 // pred_fallthru
      _
    // Predicated region
    $region54: #{encoder_processor_decoder.12} parent=1 // pred_check
      _
    $region55: #{encoder_processor_decoder.12} parent=1 // pred_check_branch
      %142 = sbr.rel (0) target = $region57
    $region56: #{encoder_processor_decoder.12} parent=1 // pred_region
      %143 = dma.done [#allocation9], 16
    $region57: #{encoder_processor_decoder.12} parent=1 // pred_fallthru
      _
    // Predicated region
    $region58: #{encoder_processor_decoder.12} parent=1 // pred_check
      _
    $region59: #{encoder_processor_decoder.12} parent=1 // pred_check_branch
      %145 = sbr.rel (0) target = $region61
    $region60: #{encoder_processor_decoder.12} parent=1 // pred_region
      %146 = dma.done [#allocation9], 1024
    $region61: #{encoder_processor_decoder.12} parent=1 // pred_fallthru
      _
    // Predicated region
    $region62: #{encoder_processor_decoder.12} parent=1 // pred_check
      _
    $region63: #{encoder_processor_decoder.12} parent=1 // pred_check_branch
      %148 = sbr.rel (0) target = $region65
    $region64: #{encoder_processor_decoder.12} parent=1 // pred_region
      %149 = dma.done [#allocation12], 16
    $region65: #{encoder_processor_decoder.12} parent=1 // pred_fallthru
      _
    // Predicated region
    $region66: #{encoder_processor_decoder.12} parent=1 // pred_check
      _
    $region67: #{encoder_processor_decoder.12} parent=1 // pred_check_branch
      %151 = sbr.rel (0) target = $region69
    $region68: #{encoder_processor_decoder.12} parent=1 // pred_region
      %152 = dma.done [#allocation12], 1024
    $region69: #{encoder_processor_decoder.12} parent=1 // pred_fallthru
      _
    // Predicated region
    $region70: #{encoder_processor_decoder.12} parent=1 // pred_check
      _
    $region71: #{encoder_processor_decoder.12} parent=1 // pred_check_branch
      %154 = sbr.rel (0) target = $region73
    $region72: #{encoder_processor_decoder.12} parent=1 // pred_region
      %155 = dma.done [#allocation15], 16
    $region73: #{encoder_processor_decoder.12} parent=1 // pred_fallthru
      _
    // Predicated region
    $region74: #{encoder_processor_decoder.12} parent=1 // pred_check
      _
    $region75: #{encoder_processor_decoder.12} parent=1 // pred_check_branch
      %157 = sbr.rel (0) target = $region77
    $region76: #{encoder_processor_decoder.12} parent=1 // pred_region
      %158 = dma.done [#allocation15], 16
    $region77: #{encoder_processor_decoder.12} parent=1 // pred_fallthru
      _
    // Predicated region
    $region78: #{encoder_processor_decoder.12} parent=1 // pred_check
      _
    $region79: #{encoder_processor_decoder.12} parent=1 // pred_check_branch
      %160 = sbr.rel (0) target = $region81
    $region80: #{encoder_processor_decoder.12} parent=1 // pred_region
      %161 = dma.done [#allocation18], 16
    $region81: #{encoder_processor_decoder.12} parent=1 // pred_fallthru
      _
    %v163 = vld [vmem:[#allocation2] sm:$0xff]
    %v164 = vld [vmem:[#allocation2 + $0x8] sm:$0xff]
    %v165 = vld [vmem:[#allocation2 + $0x10] sm:$0xff]
    %v166 = vld [vmem:[#allocation2 + $0x18] sm:$0xff]
    %v167 = vld [vmem:[#allocation7] sm:$0xf]
    %v168 = vld [vmem:[#allocation7 + $0x4] sm:$0xf]
    %v169 = vld [vmem:[#allocation7 + $0x8] sm:$0xf]
    %v170 = vld [vmem:[#allocation7 + $0xc] sm:$0xf]
    %v171 = vld [vmem:[#allocation7 + $0x10] sm:$0xf]
    %v172 = vld [vmem:[#allocation7 + $0x14] sm:$0xf]
    %v173 = vld [vmem:[#allocation7 + $0x18] sm:$0xf]
    %v174 = vld [vmem:[#allocation7 + $0x1c] sm:$0xf]
    %v175 = vld [vmem:[#allocation7 + $0x20] sm:$0xf]
    %v176 = vld [vmem:[#allocation7 + $0x24] sm:$0xf]
    %v177 = vld [vmem:[#allocation7 + $0x28] sm:$0xf]
    %v178 = vld [vmem:[#allocation7 + $0x2c] sm:$0xf]
    %v179 = vld [vmem:[#allocation7 + $0x30] sm:$0xf]
    %v180 = vld [vmem:[#allocation7 + $0x34] sm:$0xf]
    %v181 = vld [vmem:[#allocation7 + $0x38] sm:$0xf]
    %v182 = vld [vmem:[#allocation7 + $0x3c] sm:$0xf]
    %v183 = vld [vmem:[#allocation8] sm:$0x1]
    %v184 = vld [vmem:[#allocation10] sm:$0xf]
    %v185 = vld [vmem:[#allocation10 + $0x4] sm:$0xf]
    %v186 = vld [vmem:[#allocation10 + $0x8] sm:$0xf]
    %v187 = vld [vmem:[#allocation10 + $0xc] sm:$0xf]
    %v188 = vld [vmem:[#allocation10 + $0x10] sm:$0xf]
    %v189 = vld [vmem:[#allocation10 + $0x14] sm:$0xf]
    %v190 = vld [vmem:[#allocation10 + $0x18] sm:$0xf]
    %v191 = vld [vmem:[#allocation10 + $0x1c] sm:$0xf]
    %v192 = vld [vmem:[#allocation10 + $0x20] sm:$0xf]
    %v193 = vld [vmem:[#allocation10 + $0x24] sm:$0xf]
    %v194 = vld [vmem:[#allocation10 + $0x28] sm:$0xf]
    %v195 = vld [vmem:[#allocation10 + $0x2c] sm:$0xf]
    %v196 = vld [vmem:[#allocation10 + $0x30] sm:$0xf]
    %v197 = vld [vmem:[#allocation10 + $0x34] sm:$0xf]
    %v198 = vld [vmem:[#allocation10 + $0x38] sm:$0xf]
    %v199 = vld [vmem:[#allocation10 + $0x3c] sm:$0xf]
    %v200 = vld [vmem:[#allocation11] sm:$0x1]
    %v201 = vld [vmem:[#allocation13] sm:$0xf]
    %v202 = vld [vmem:[#allocation13 + $0x4] sm:$0xf]
    %v203 = vld [vmem:[#allocation13 + $0x8] sm:$0xf]
    %v204 = vld [vmem:[#allocation13 + $0xc] sm:$0xf]
    %v205 = vld [vmem:[#allocation13 + $0x10] sm:$0xf]
    %v206 = vld [vmem:[#allocation13 + $0x14] sm:$0xf]
    %v207 = vld [vmem:[#allocation13 + $0x18] sm:$0xf]
    %v208 = vld [vmem:[#allocation13 + $0x1c] sm:$0xf]
    %v209 = vld [vmem:[#allocation13 + $0x20] sm:$0xf]
    %v210 = vld [vmem:[#allocation13 + $0x24] sm:$0xf]
    %v211 = vld [vmem:[#allocation13 + $0x28] sm:$0xf]
    %v212 = vld [vmem:[#allocation13 + $0x2c] sm:$0xf]
    %v213 = vld [vmem:[#allocation13 + $0x30] sm:$0xf]
    %v214 = vld [vmem:[#allocation13 + $0x34] sm:$0xf]
    %v215 = vld [vmem:[#allocation13 + $0x38] sm:$0xf]
    %v216 = vld [vmem:[#allocation13 + $0x3c] sm:$0xf]
    %v217 = vld [vmem:[#allocation14] sm:$0x1]
    %v218 = vld [vmem:[#allocation16] sm:$0x1]
    %v219 = vld [vmem:[#allocation17] sm:$0x1]
    %v220 = vpack.c.bf16 %v164, %v163
    %v221 = vpack.c.bf16 %v166, %v165
    %v223 = vlaneseq
    %v224 = vshrl.u32 %v223, 7
    %v225 = vsub.s32 0, %v224
    %v226 = vrot.slane %v183, %v225
    %v244 = vunpack.c.l.b16 %v167
    %v245 = vunpack.c.l.b16 %v168
    %v246 = vunpack.c.l.b16 %v169
    %v247 = vunpack.c.l.b16 %v170
    %v248 = vunpack.c.l.b16 %v171
    %v249 = vunpack.c.l.b16 %v172
    %v250 = vunpack.c.l.b16 %v173
    %v251 = vunpack.c.l.b16 %v174
    %v252 = vunpack.c.l.b16 %v175
    %v253 = vunpack.c.l.b16 %v176
    %v254 = vunpack.c.l.b16 %v177
    %v255 = vunpack.c.l.b16 %v178
    %v256 = vunpack.c.l.b16 %v179
    %v257 = vunpack.c.l.b16 %v180
    %v258 = vunpack.c.l.b16 %v181
    %v259 = vunpack.c.l.b16 %v182
    %v260 = vpack.c.b16 %v245, %v244
    %v261 = vpack.c.b16 %v247, %v246
    %v262 = vpack.c.b16 %v249, %v248
    %v263 = vpack.c.b16 %v251, %v250
    %v264 = vpack.c.b16 %v253, %v252
    %v265 = vpack.c.b16 %v255, %v254
    %v266 = vpack.c.b16 %v257, %v256
    %v267 = vpack.c.b16 %v259, %v258
    %276 = vmatprep.subr.bf16.mxu0 0
    %277 = vmatpush1.bf16.msra.mxu0 %v260
    %278 = vmatprep.subr.bf16.mxu0 0
    %279 = vmatpush1.bf16.msra.mxu0 %v261
    %280 = vmatprep.subr.bf16.mxu0 0
    %281 = vmatpush1.bf16.msra.mxu0 %v262
    %282 = vmatprep.subr.bf16.mxu0 0
    %283 = vmatpush1.bf16.msra.mxu0 %v263
    %284 = vmatprep.subr.bf16.mxu0 0
    %285 = vmatpush1.bf16.msra.mxu0 %v264
    %286 = vmatprep.subr.bf16.mxu0 0
    %287 = vmatpush1.bf16.msra.mxu0 %v265
    %288 = vmatprep.subr.bf16.mxu0 0
    %289 = vmatpush1.bf16.msra.mxu0 %v266
    %290 = vmatprep.subr.bf16.mxu0 0
    %291 = vmatpush1.bf16.msra.mxu0 %v267
    %292 = vmatprep.subr.bf16.mxu0 0
    %293 = vmatpush1.bf16.msra.mxu0 0
    %294 = vmatprep.subr.bf16.mxu0 0
    %295 = vmatpush1.bf16.msra.mxu0 0
    %296 = vmatprep.subr.bf16.mxu0 0
    %297 = vmatpush1.bf16.msra.mxu0 0
    %298 = vmatprep.subr.bf16.mxu0 0
    %299 = vmatpush1.bf16.msra.mxu0 0
    %300 = vmatprep.subr.bf16.mxu0 0
    %301 = vmatpush1.bf16.msra.mxu0 0
    %302 = vmatprep.subr.bf16.mxu0 0
    %303 = vmatpush1.bf16.msra.mxu0 0
    %304 = vmatprep.subr.bf16.mxu0 0
    %305 = vmatpush1.bf16.msra.mxu0 0
    %306 = vmatprep.subr.bf16.mxu0 0
    %307 = vmatpush1.bf16.msra.mxu0 0
    %308 = vmatprep.mubr.bf16.mxu0 0
    %309 = vmatmul.mubr.bf16.gmra.mrb[0].mxu0 %v220
    %v310 = vpop.f32.mrb[0].mxu0
    %v311 = vadd.f32 %v226, %v310
    %v312 = vpop.f32.mrb[0].mxu0
    %v313 = vpop.f32.mrb[0].mxu0
    %v314 = vadd.f32 %v226, %v313
    %v315 = vpop.f32.mrb[0].mxu0
    %316 = vmatprep.mubr.bf16.mxu0 0
    %317 = vmatmul.mubr.bf16.gmra.mrb[0].mxu0 %v221
    %v318 = vpop.f32.mrb[0].mxu0
    %v319 = vadd.f32 %v226, %v318
    %v320 = vpop.f32.mrb[0].mxu0
    %v321 = vpop.f32.mrb[0].mxu0
    %v322 = vadd.f32 %v226, %v321
    %v323 = vpop.f32.mrb[0].mxu0
    %324 = vdwg.mxu0
    %v325 = vmax.f32 %v311, 0.0
    %v326 = vmax.f32 %v314, 0.0
    %v327 = vmax.f32 %v319, 0.0
    %v328 = vmax.f32 %v322, 0.0
    %v329 = vpack.c.bf16 %v326, %v325
    %v330 = vpack.c.bf16 %v328, %v327
    %v332 = vlaneseq
    %v333 = vshrl.u32 %v332, 7
    %v334 = vsub.s32 0, %v333
    %v335 = vrot.slane %v200, %v334
    %v353 = vunpack.c.l.b16 %v184
    %v354 = vunpack.c.l.b16 %v185
    %v355 = vunpack.c.l.b16 %v186
    %v356 = vunpack.c.l.b16 %v187
    %v357 = vunpack.c.l.b16 %v188
    %v358 = vunpack.c.l.b16 %v189
    %v359 = vunpack.c.l.b16 %v190
    %v360 = vunpack.c.l.b16 %v191
    %v361 = vunpack.c.l.b16 %v192
    %v362 = vunpack.c.l.b16 %v193
    %v363 = vunpack.c.l.b16 %v194
    %v364 = vunpack.c.l.b16 %v195
    %v365 = vunpack.c.l.b16 %v196
    %v366 = vunpack.c.l.b16 %v197
    %v367 = vunpack.c.l.b16 %v198
    %v368 = vunpack.c.l.b16 %v199
    %v369 = vpack.c.b16 %v354, %v353
    %v370 = vpack.c.b16 %v356, %v355
    %v371 = vpack.c.b16 %v358, %v357
    %v372 = vpack.c.b16 %v360, %v359
    %v373 = vpack.c.b16 %v362, %v361
    %v374 = vpack.c.b16 %v364, %v363
    %v375 = vpack.c.b16 %v366, %v365
    %v376 = vpack.c.b16 %v368, %v367
    %385 = vmatprep.subr.bf16.mxu0 0
    %386 = vmatpush1.bf16.msra.mxu0 %v369
    %387 = vmatprep.subr.bf16.mxu0 0
    %388 = vmatpush1.bf16.msra.mxu0 %v370
    %389 = vmatprep.subr.bf16.mxu0 0
    %390 = vmatpush1.bf16.msra.mxu0 %v371
    %391 = vmatprep.subr.bf16.mxu0 0
    %392 = vmatpush1.bf16.msra.mxu0 %v372
    %393 = vmatprep.subr.bf16.mxu0 0
    %394 = vmatpush1.bf16.msra.mxu0 %v373
    %395 = vmatprep.subr.bf16.mxu0 0
    %396 = vmatpush1.bf16.msra.mxu0 %v374
    %397 = vmatprep.subr.bf16.mxu0 0
    %398 = vmatpush1.bf16.msra.mxu0 %v375
    %399 = vmatprep.subr.bf16.mxu0 0
    %400 = vmatpush1.bf16.msra.mxu0 %v376
    %401 = vmatprep.subr.bf16.mxu0 0
    %402 = vmatpush1.bf16.msra.mxu0 0
    %403 = vmatprep.subr.bf16.mxu0 0
    %404 = vmatpush1.bf16.msra.mxu0 0
    %405 = vmatprep.subr.bf16.mxu0 0
    %406 = vmatpush1.bf16.msra.mxu0 0
    %407 = vmatprep.subr.bf16.mxu0 0
    %408 = vmatpush1.bf16.msra.mxu0 0
    %409 = vmatprep.subr.bf16.mxu0 0
    %410 = vmatpush1.bf16.msra.mxu0 0
    %411 = vmatprep.subr.bf16.mxu0 0
    %412 = vmatpush1.bf16.msra.mxu0 0
    %413 = vmatprep.subr.bf16.mxu0 0
    %414 = vmatpush1.bf16.msra.mxu0 0
    %415 = vmatprep.subr.bf16.mxu0 0
    %416 = vmatpush1.bf16.msra.mxu0 0
    %417 = vmatprep.mubr.bf16.mxu0 0
    %418 = vmatmul.mubr.bf16.gmra.mrb[0].mxu0 %v329
    %v419 = vpop.f32.mrb[0].mxu0
    %v420 = vadd.f32 %v335, %v419
    %v421 = vpop.f32.mrb[0].mxu0
    %v422 = vpop.f32.mrb[0].mxu0
    %v423 = vadd.f32 %v335, %v422
    %v424 = vpop.f32.mrb[0].mxu0
    %425 = vmatprep.mubr.bf16.mxu0 0
    %426 = vmatmul.mubr.bf16.gmra.mrb[0].mxu0 %v330
    %v427 = vpop.f32.mrb[0].mxu0
    %v428 = vadd.f32 %v335, %v427
    %v429 = vpop.f32.mrb[0].mxu0
    %v430 = vpop.f32.mrb[0].mxu0
    %v431 = vadd.f32 %v335, %v430
    %v432 = vpop.f32.mrb[0].mxu0
    %433 = vdwg.mxu0
    %v434 = vmax.f32 %v420, 0.0
    %v435 = vmax.f32 %v423, 0.0
    %v436 = vmax.f32 %v428, 0.0
    %v437 = vmax.f32 %v431, 0.0
    %v438 = vpack.c.bf16 %v435, %v434
    %v439 = vpack.c.bf16 %v437, %v436
    %v441 = vlaneseq
    %v442 = vshrl.u32 %v441, 7
    %v443 = vsub.s32 0, %v442
    %v444 = vrot.slane %v217, %v443
    %v462 = vunpack.c.l.b16 %v201
    %v463 = vunpack.c.l.b16 %v202
    %v464 = vunpack.c.l.b16 %v203
    %v465 = vunpack.c.l.b16 %v204
    %v466 = vunpack.c.l.b16 %v205
    %v467 = vunpack.c.l.b16 %v206
    %v468 = vunpack.c.l.b16 %v207
    %v469 = vunpack.c.l.b16 %v208
    %v470 = vunpack.c.l.b16 %v209
    %v471 = vunpack.c.l.b16 %v210
    %v472 = vunpack.c.l.b16 %v211
    %v473 = vunpack.c.l.b16 %v212
    %v474 = vunpack.c.l.b16 %v213
    %v475 = vunpack.c.l.b16 %v214
    %v476 = vunpack.c.l.b16 %v215
    %v477 = vunpack.c.l.b16 %v216
    %v478 = vpack.c.b16 %v463, %v462
    %v479 = vpack.c.b16 %v465, %v464
    %v480 = vpack.c.b16 %v467, %v466
    %v481 = vpack.c.b16 %v469, %v468
    %v482 = vpack.c.b16 %v471, %v470
    %v483 = vpack.c.b16 %v473, %v472
    %v484 = vpack.c.b16 %v475, %v474
    %v485 = vpack.c.b16 %v477, %v476
    %494 = vmatprep.subr.bf16.mxu0 0
    %495 = vmatpush1.bf16.msra.mxu0 %v478
    %496 = vmatprep.subr.bf16.mxu0 0
    %497 = vmatpush1.bf16.msra.mxu0 %v479
    %498 = vmatprep.subr.bf16.mxu0 0
    %499 = vmatpush1.bf16.msra.mxu0 %v480
    %500 = vmatprep.subr.bf16.mxu0 0
    %501 = vmatpush1.bf16.msra.mxu0 %v481
    %502 = vmatprep.subr.bf16.mxu0 0
    %503 = vmatpush1.bf16.msra.mxu0 %v482
    %504 = vmatprep.subr.bf16.mxu0 0
    %505 = vmatpush1.bf16.msra.mxu0 %v483
    %506 = vmatprep.subr.bf16.mxu0 0
    %507 = vmatpush1.bf16.msra.mxu0 %v484
    %508 = vmatprep.subr.bf16.mxu0 0
    %509 = vmatpush1.bf16.msra.mxu0 %v485
    %510 = vmatprep.subr.bf16.mxu0 0
    %511 = vmatpush1.bf16.msra.mxu0 0
    %512 = vmatprep.subr.bf16.mxu0 0
    %513 = vmatpush1.bf16.msra.mxu0 0
    %514 = vmatprep.subr.bf16.mxu0 0
    %515 = vmatpush1.bf16.msra.mxu0 0
    %516 = vmatprep.subr.bf16.mxu0 0
    %517 = vmatpush1.bf16.msra.mxu0 0
    %518 = vmatprep.subr.bf16.mxu0 0
    %519 = vmatpush1.bf16.msra.mxu0 0
    %520 = vmatprep.subr.bf16.mxu0 0
    %521 = vmatpush1.bf16.msra.mxu0 0
    %522 = vmatprep.subr.bf16.mxu0 0
    %523 = vmatpush1.bf16.msra.mxu0 0
    %524 = vmatprep.subr.bf16.mxu0 0
    %525 = vmatpush1.bf16.msra.mxu0 0
    %526 = vmatprep.mubr.bf16.mxu0 0
    %527 = vmatmul.mubr.bf16.gmra.mrb[0].mxu0 %v438
    %v528 = vpop.f32.mrb[0].mxu0
    %v529 = vadd.f32 %v444, %v528
    %v530 = vpop.f32.mrb[0].mxu0
    %v531 = vpop.f32.mrb[0].mxu0
    %v532 = vadd.f32 %v444, %v531
    %v533 = vpop.f32.mrb[0].mxu0
    %534 = vmatprep.mubr.bf16.mxu0 0
    %535 = vmatmul.mubr.bf16.gmra.mrb[0].mxu0 %v439
    %v536 = vpop.f32.mrb[0].mxu0
    %v537 = vadd.f32 %v444, %v536
    %v538 = vpop.f32.mrb[0].mxu0
    %v539 = vpop.f32.mrb[0].mxu0
    %v540 = vadd.f32 %v444, %v539
    %v541 = vpop.f32.mrb[0].mxu0
    %542 = vdwg.mxu0
    %543 = vadd.xlane.f32.xlu0 %v529
    %v544 = vpop.xlane.xlu0 %543
    %545 = vadd.xlane.f32.xlu0 %v532
    %v546 = vpop.xlane.xlu0 %545
    %547 = vadd.xlane.f32.xlu0 %v537
    %v548 = vpop.xlane.xlu0 %547
    %549 = vadd.xlane.f32.xlu0 %v540
    %v550 = vpop.xlane.xlu0 %549
    %v551 = vrcp.pop 128.0
    %v552 = vmul.f32 %v544, %v551
    %v553 = vmul.f32 %v546, %v551
    %v554 = vmul.f32 %v548, %v551
    %v555 = vmul.f32 %v550, %v551
    %v556 = vsub.f32 %v529, %v552
    %v557 = vsub.f32 %v532, %v553
    %v558 = vsub.f32 %v537, %v554
    %v559 = vsub.f32 %v540, %v555
    %v560 = vmul.f32 %v556, %v556
    %v561 = vmul.f32 %v557, %v557
    %v562 = vmul.f32 %v558, %v558
    %v563 = vmul.f32 %v559, %v559
    %564 = vadd.xlane.f32.xlu0 %v560
    %v565 = vpop.xlane.xlu0 %564
    %566 = vadd.xlane.f32.xlu0 %v561
    %v567 = vpop.xlane.xlu0 %566
    %568 = vadd.xlane.f32.xlu0 %v562
    %v569 = vpop.xlane.xlu0 %568
    %570 = vadd.xlane.f32.xlu0 %v563
    %v571 = vpop.xlane.xlu0 %570
    %v572 = vmul.f32 %v565, %v551
    %v573 = vmul.f32 %v567, %v551
    %v574 = vmul.f32 %v569, %v551
    %v575 = vmul.f32 %v571, %v551
    %v576 = vadd.f32 %v572, 1e-05
    %v577 = vadd.f32 %v573, 1e-05
    %v578 = vadd.f32 %v574, 1e-05
    %v579 = vadd.f32 %v575, 1e-05
    %v580 = vrsqrt.pop %v576
    %v581 = vrsqrt.pop %v577
    %v582 = vrsqrt.pop %v578
    %v583 = vrsqrt.pop %v579
    %v584 = vmul.f32 %v556, %v580
    %v585 = vmul.f32 %v557, %v581
    %v586 = vmul.f32 %v558, %v582
    %v587 = vmul.f32 %v559, %v583
    %v589 = vlaneseq
    %v590 = vshrl.u32 %v589, 7
    %v591 = vsub.s32 0, %v590
    %v592 = vrot.slane %v218, %v591
    %v594 = vmul.f32 %v584, %v592
    %v595 = vmul.f32 %v585, %v592
    %v596 = vmul.f32 %v586, %v592
    %v597 = vmul.f32 %v587, %v592
    %v599 = vlaneseq
    %v600 = vshrl.u32 %v599, 7
    %v601 = vsub.s32 0, %v600
    %v602 = vrot.slane %v219, %v601
    %v604 = vadd.f32 %v594, %v602
    %v605 = vadd.f32 %v595, %v602
    %v606 = vadd.f32 %v596, %v602
    %v607 = vadd.f32 %v597, %v602
    %v608 = vld [vmem:[#allocation5] sm:$0xff]
    %v609 = vld [vmem:[#allocation5 + $0x8] sm:$0xff]
    %v610 = vld [vmem:[#allocation5 + $0x10] sm:$0xff]
    %v611 = vld [vmem:[#allocation5 + $0x18] sm:$0xff]
    %v612 = vadd.f32 %v604, %v608
    %v613 = vadd.f32 %v605, %v609
    %v614 = vadd.f32 %v606, %v610
    %v615 = vadd.f32 %v607, %v611
    %616 = vst [vmem:[#allocation19] sm:$0xff] %v612
    %617 = vst [vmem:[#allocation19 + $0x8] sm:$0xff] %v613
    %618 = vst [vmem:[#allocation19 + $0x10] sm:$0xff] %v614
    %619 = vst [vmem:[#allocation19 + $0x18] sm:$0xff] %v615
    // Predicated region
    $region82: #{encoder_processor_decoder.12} parent=1 // pred_check
      _
    $region83: #{encoder_processor_decoder.12} parent=1 // pred_check_branch
      %621 = sbr.rel (0) target = $region85
    $region84: #{encoder_processor_decoder.12} parent=1 // pred_region
      %s623 = ssub.s32 512, 512
      %624 = vsyncadd [#allocation4], %s623
      %s625 = sshll.u32 [#allocation19], 4
      %s626 = int_to_ptr.vmem [resolvable:$true] %s625
      %631 = dma.vmem_to_hbm [thread:$0]  %s626, 512, %s10, [#allocation4], 128, 128, 8
    $region85: #{encoder_processor_decoder.12} parent=1 // pred_fallthru
      _
    // Predicated region
    $region86: #{encoder_processor_decoder.12} parent=1 // pred_check
      _
    $region87: #{encoder_processor_decoder.12} parent=1 // pred_check_branch
      %633 = sbr.rel (0) target = $region89
    $region88: #{encoder_processor_decoder.12} parent=1 // pred_region
      %634 = dma.done [#allocation4], 512
    $region89: #{encoder_processor_decoder.12} parent=1 // pred_fallthru
      _
    %635 = vsyncpa [#allocation3], 1
    %636 = vsyncpa [#allocation6], 1
    %637 = vsyncpa [#allocation9], 1
    %638 = vsyncpa [#allocation12], 1
    %639 = vsyncpa [#allocation15], 1
    %640 = vsyncpa [#allocation18], 1
    %641 = vsyncpa [#allocation4], 1

</llo_original>
